<compile_context>
chip_gen: v6e
topology: v6e:2x2x1
jax: 0.10.0
libtpu: 0.0.40
codegen_flags: <defaults>
</compile_context>

<pallas_src>
import math
import functools

import jax
import jax.numpy as jnp
from jax.experimental import pallas as pl
from jax.experimental.pallas import tpu as pltpu


# ----------------------------------------------------------------------------
# Generation-aware VMEM limit (~80% of physical, headroom for Mosaic scratch).
# v5e/v6e (128 MiB) -> ~102 MiB, v7x (64 MiB) -> ~51 MiB.  Falls back to the
# compiler default if the query is unavailable.
# ----------------------------------------------------------------------------

_VMEM_LIMIT_CACHE = []


def _vmem_limit_bytes():
    if not _VMEM_LIMIT_CACHE:
        try:
            cap = pltpu.get_tpu_info().vmem_capacity_bytes
            _VMEM_LIMIT_CACHE.append(int(cap * 4 // 5))
        except Exception:
            _VMEM_LIMIT_CACHE.append(None)
    return _VMEM_LIMIT_CACHE[0]


def _compiler_params(dims):
    lim = _vmem_limit_bytes()
    if lim is None:
        return pltpu.CompilerParams(dimension_semantics=dims)
    return pltpu.CompilerParams(dimension_semantics=dims, vmem_limit_bytes=lim)


# ----------------------------------------------------------------------------
# Pallas kernels
# ----------------------------------------------------------------------------

def akt_attn_kernel(qk_ref, v_ref, gamma_ref, o_ref, *, d_k, n_heads, mask_k,
                    zero_pad):
    # qk_ref / v_ref: (1, H, S, d_k) bf16.  gamma_ref: (H, S, 1) f32 = -softplus(gamma)
    # kq_same=True and query == key at every Architecture call site, so the shared
    # K projection serves as both Q and K (one projection, one DMA).
    qk = qk_ref[0]                                  # (H, S, d_k) bf16
    v = v_ref[0]                                    # (H, S, d_k) bf16
    g = gamma_ref[...]                              # (H, S, 1)  f32

    H = n_heads
    S = qk.shape[1]
    scale = jnp.float32(1.0 / math.sqrt(d_k))
    neg_inf = jnp.float32(-1e32)

    # (S,S) constants built in-VMEM from iota (cheap VPU filler, no HBM traffic).
    row = jax.lax.broadcasted_iota(jnp.int32, (S, S), 0)      # query index i
    col = jax.lax.broadcasted_iota(jnp.int32, (S, S), 1)      # key   index j
    can_attend = col < row + mask_k                           # src_mask != 0
    pos = jnp.abs(col - row).astype(jnp.float32)              # |j - i|
    rest_bf = jnp.where(row > col, 1.0, 0.0).astype(jnp.bfloat16)  # 1 iff j' > j

    # scores = Q K^T / sqrt(d_k), head-batched on the MXU (Q == K).
    scores = jnp.einsum('hqd,hkd->hqk', qk, qk,
                        preferred_element_type=jnp.float32) * scale

    # --- first (no-grad in torch) masked softmax ------------------------------
    masked = jnp.where(can_attend, scores, neg_inf)
    m1 = jnp.max(masked, axis=-1, keepdims=True)
    e1 = jnp.exp(masked - m1)
    s1 = e1 * pl.reciprocal(jnp.sum(e1, axis=-1, keepdims=True), approx=True)
    s1 = jnp.where(can_attend, s1, 0.0)

    # (disttotal - distcum)[h,i,j] = sum_{j' > j} s1[h,i,j']  -> single bf16 MXU
    # matmul of the flattened (H*S, S) block against the 0/1 triangular matrix.
    diff = jnp.dot(s1.reshape(H * S, S).astype(jnp.bfloat16), rest_bf,
                   preferred_element_type=jnp.float32).reshape(H, S, S)
    dist = jnp.sqrt(jnp.maximum(diff * pos, 0.0))
    total_effect = jnp.clip(jnp.exp(dist * g), 1e-5, 1e5)

    # --- second (real) masked softmax -----------------------------------------
    scores2 = jnp.where(can_attend, scores * total_effect, neg_inf)
    m2 = jnp.max(scores2, axis=-1, keepdims=True)
    e2 = jnp.exp(scores2 - m2)
    p = e2 * pl.reciprocal(jnp.sum(e2, axis=-1, keepdims=True), approx=True)

    # TODO(synk): attention-prob dropout is identity (eval mode).
    out = jnp.einsum('hqk,hkd->hqd', p.astype(jnp.bfloat16), v,
                     preferred_element_type=jnp.float32)      # (H, S, d_k) f32
    if zero_pad:
        # torch.cat([zeros(...,1,S), scores[:,:,1:,:]]) @ v == zero query-row 0.
        qrow = jax.lax.broadcasted_iota(jnp.int32, (S, d_k), 0)
        out = jnp.where(qrow == 0, 0.0, out)
    o_ref[0] = out.astype(o_ref.dtype)


def linear_kernel(x_ref, w_ref, b_ref, o_ref):
    # x: (tm, K) f32/bf16, w: (K, N) bf16 (pre-cast in wrapper), b: (1, N) f32
    y = jnp.dot(x_ref[...].astype(jnp.bfloat16), w_ref[...],
                preferred_element_type=jnp.float32) + b_ref[...]
    o_ref[...] = y.astype(o_ref.dtype)


def proj_add_ln_kernel(x_ref, w_ref, b_ref, res_ref, g_ref, beta_ref, o_ref, *, eps):
    # out_proj(attn) + residual -> LayerNorm, one HBM pass.  x is bf16, w bf16.
    y = jnp.dot(x_ref[...].astype(jnp.bfloat16), w_ref[...],
                preferred_element_type=jnp.float32)
    y = y + b_ref[...] + res_ref[...]
    mean = jnp.mean(y, axis=-1, keepdims=True)
    var = jnp.mean((y - mean) ** 2, axis=-1, keepdims=True)
    o_ref[...] = ((y - mean) * jax.lax.rsqrt(var + eps) * g_ref[...]
                  + beta_ref[...]).astype(o_ref.dtype)


def ffn_add_ln_kernel(x_ref, w1_ref, b1_ref, w2_ref, b2_ref, g_ref, beta_ref, o_ref,
                      *, eps):
    # x -> Linear -> ReLU -> Linear -> +x -> LayerNorm, intermediate stays in VMEM.
    x = x_ref[...]
    h = jnp.dot(x.astype(jnp.bfloat16), w1_ref[...],
                preferred_element_type=jnp.float32) + b1_ref[...]
    h = jnp.maximum(h, 0.0)
    y = jnp.dot(h.astype(jnp.bfloat16), w2_ref[...],
                preferred_element_type=jnp.float32) + b2_ref[...]
    y = y + x
    mean = jnp.mean(y, axis=-1, keepdims=True)
    var = jnp.mean((y - mean) ** 2, axis=-1, keepdims=True)
    o_ref[...] = ((y - mean) * jax.lax.rsqrt(var + eps) * g_ref[...]
                  + beta_ref[...]).astype(o_ref.dtype)


# ----------------------------------------------------------------------------
# Pallas wrappers
# ----------------------------------------------------------------------------

def _pick_tile_m(M, target=512):
    """Row tile: multiple of 16 (bf16-safe sublane packing) dividing M, <= target."""
    if M <= target or M % 16 != 0:
        return M
    tm = (target // 16) * 16
    while tm >= 16:
        if M % tm == 0:
            return tm
        tm -= 16
    return M


def akt_attention(qk_h, v_h, neg_gamma, *, mask_k, zero_pad, n_heads):
    # qk_h, v_h: (B, H, S, d_k) bf16; neg_gamma: (H, S, 1) f32
    B, H, S, d_k = qk_h.shape
    kernel = functools.partial(akt_attn_kernel, d_k=d_k, n_heads=n_heads,
                               mask_k=mask_k, zero_pad=zero_pad)
    blk = pl.BlockSpec((1, H, S, d_k), lambda b: (b, 0, 0, 0))
    # TODO(synk): flash-style key/query tiling for S >~ 1k and a second parallel
    #             grid axis over query tiles (v7x has 2 TensorCores, 64 MiB VMEM).
    return pl.pallas_call(
        kernel,
        out_shape=jax.ShapeDtypeStruct((B, H, S, d_k), jnp.bfloat16),
        grid=(B,),
        in_specs=[blk, blk, pl.BlockSpec((H, S, 1), lambda b: (0, 0, 0))],
        out_specs=blk,
        compiler_params=_compiler_params(("parallel",)),
    )(qk_h, v_h, neg_gamma)


def linear_pallas(x2d, w_bf, b, out_dtype=jnp.float32):
    M, K = x2d.shape
    N = w_bf.shape[1]
    tm = _pick_tile_m(M)
    # TODO(synk): pipeline_mode=pl.Buffered(1) on the grid-invariant weight/bias
    #             blocks would halve their VMEM footprint (kept default for safety).
    return pl.pallas_call(
        linear_kernel,
        out_shape=jax.ShapeDtypeStruct((M, N), out_dtype),
        grid=(M // tm,),
        in_specs=[pl.BlockSpec((tm, K), lambda i: (i, 0)),
                  pl.BlockSpec((K, N), lambda i: (0, 0)),
                  pl.BlockSpec((1, N), lambda i: (0, 0))],
        out_specs=pl.BlockSpec((tm, N), lambda i: (i, 0)),
        compiler_params=_compiler_params(("parallel",)),
    )(x2d, w_bf, b.reshape(1, N))


def proj_add_ln_pallas(x2d, w_bf, b, res2d, g, beta, eps=1e-5):
    M, K = x2d.shape
    N = w_bf.shape[1]
    tm = _pick_tile_m(M)
    kernel = functools.partial(proj_add_ln_kernel, eps=eps)
    return pl.pallas_call(
        kernel,
        out_shape=jax.ShapeDtypeStruct((M, N), jnp.float32),
        grid=(M // tm,),
        in_specs=[pl.BlockSpec((tm, K), lambda i: (i, 0)),
                  pl.BlockSpec((K, N), lambda i: (0, 0)),
                  pl.BlockSpec((1, N), lambda i: (0, 0)),
                  pl.BlockSpec((tm, N), lambda i: (i, 0)),
                  pl.BlockSpec((1, N), lambda i: (0, 0)),
                  pl.BlockSpec((1, N), lambda i: (0, 0))],
        out_specs=pl.BlockSpec((tm, N), lambda i: (i, 0)),
        compiler_params=_compiler_params(("parallel",)),
    )(x2d, w_bf, b.reshape(1, N), res2d, g.reshape(1, N), beta.reshape(1, N))


def ffn_add_ln_pallas(x2d, w1_bf, b1, w2_bf, b2, g, beta, eps=1e-5):
    M, D = x2d.shape
    F = w1_bf.shape[1]
    tm = _pick_tile_m(M)
    kernel = functools.partial(ffn_add_ln_kernel, eps=eps)
    return pl.pallas_call(
        kernel,
        out_shape=jax.ShapeDtypeStruct((M, D), jnp.float32),
        grid=(M // tm,),
        in_specs=[pl.BlockSpec((tm, D), lambda i: (i, 0)),
                  pl.BlockSpec((D, F), lambda i: (0, 0)),
                  pl.BlockSpec((1, F), lambda i: (0, 0)),
                  pl.BlockSpec((F, D), lambda i: (0, 0)),
                  pl.BlockSpec((1, D), lambda i: (0, 0)),
                  pl.BlockSpec((1, D), lambda i: (0, 0)),
                  pl.BlockSpec((1, D), lambda i: (0, 0))],
        out_specs=pl.BlockSpec((tm, D), lambda i: (i, 0)),
        compiler_params=_compiler_params(("parallel",)),
    )(x2d, w1_bf, b1.reshape(1, F), w2_bf, b2.reshape(1, D), g.reshape(1, D),
      beta.reshape(1, D))


# ----------------------------------------------------------------------------
# Model glue (plain JAX): TransformerLayer / Architecture
# ----------------------------------------------------------------------------

def transformer_layer(p, mask_k, query, key, values, n_heads, apply_pos=True):
    B, S, D = query.shape
    d_k = D // n_heads
    attn_p = p["attn"]
    zero_pad = (mask_k == 0)

    # Pre-cast weights to bf16 once per forward (outside the kernels).
    k_w = attn_p["k_w"].astype(jnp.bfloat16)
    v_w = attn_p["v_w"].astype(jnp.bfloat16)
    out_w = attn_p["out_w"].astype(jnp.bfloat16)
    w1 = p["ffn1_w"].astype(jnp.bfloat16)
    w2 = p["ffn2_w"].astype(jnp.bfloat16)

    def to_heads(x2d):
        return jnp.transpose(x2d.reshape(B, S, n_heads, d_k), (0, 2, 1, 3))

    # kq_same=True and query is key at every Architecture call site -> the shared
    # K projection serves as both Q and K.
    if key is values:
        # Fused K/V projection: read the activations from HBM once.
        kv_w = jnp.concatenate([k_w, v_w], axis=1)                 # (D, 2D) bf16
        kv_b = jnp.concatenate([attn_p["k_b"], attn_p["v_b"]])
        kv2d = linear_pallas(key.reshape(B * S, D), kv_w, kv_b,
                             out_dtype=jnp.bfloat16)               # (B*S, 2D)
        kv = jnp.transpose(kv2d.reshape(B, S, 2, n_heads, d_k), (2, 0, 3, 1, 4))
        qk_h, v_h = kv[0], kv[1]                                   # (B,H,S,dk) bf16
    else:
        qk_h = to_heads(linear_pallas(key.reshape(B * S, D), k_w, attn_p["k_b"],
                                      out_dtype=jnp.bfloat16))
        v_h = to_heads(linear_pallas(values.reshape(B * S, D), v_w, attn_p["v_b"],
                                     out_dtype=jnp.bfloat16))

    neg_gamma = jnp.broadcast_to(
        (-jax.nn.softplus(attn_p["gammas"])).reshape(n_heads, 1, 1),
        (n_heads, S, 1))

    attn = akt_attention(qk_h, v_h, neg_gamma, mask_k=mask_k, zero_pad=zero_pad,
                         n_heads=n_heads)                          # (B,H,S,dk) bf16
    attn2d = jnp.transpose(attn, (0, 2, 1, 3)).reshape(B * S, D)

    # out_proj + residual + LayerNorm1 fused (dropout1 identity in eval mode).
    query = proj_add_ln_pallas(attn2d, out_w, attn_p["out_b"],
                               query.reshape(B * S, D),
                               p["ln1_w"], p["ln1_b"]).reshape(B, S, D)

    if apply_pos:
        # FFN + residual + LayerNorm2 fused (dropout / dropout2 identity).
        query = ffn_add_ln_pallas(query.reshape(B * S, D), w1, p["ffn1_b"],
                                  w2, p["ffn2_b"], p["ln2_w"], p["ln2_b"]
                                  ).reshape(B, S, D)
    return query


def architecture_forward(params, q_embed_data, qa_embed_data, n_heads):
    y = qa_embed_data
    x = q_embed_data
    for blk in params["blocks_1"]:
        y = transformer_layer(blk, 1, y, y, y, n_heads, apply_pos=True)
    flag_first = True
    for blk in params["blocks_2"]:
        if flag_first:
            x = transformer_layer(blk, 1, x, x, x, n_heads, apply_pos=False)
            flag_first = False
        else:
            x = transformer_layer(blk, 0, x, x, y, n_heads, apply_pos=True)
            flag_first = True
    return x


# ----------------------------------------------------------------------------
# Deterministic parameter init (xavier-uniform weights, zero biases)
# ----------------------------------------------------------------------------

def _xavier(key, shape, fan_in, fan_out):
    limit = math.sqrt(6.0 / (fan_in + fan_out))
    return jax.random.uniform(key, shape, jnp.float32, -limit, limit)


def init_mha(key, d_model, n_heads):
    ks = jax.random.split(key, 4)
    return {
        "k_w": _xavier(ks[0], (d_model, d_model), d_model, d_model),
        "k_b": jnp.zeros((d_model,), jnp.float32),
        "v_w": _xavier(ks[1], (d_model, d_model), d_model, d_model),
        "v_b": jnp.zeros((d_model,), jnp.float32),
        "out_w": _xavier(ks[2], (d_model, d_model), d_model, d_model),
        "out_b": jnp.zeros((d_model,), jnp.float32),
        # torch xavier_uniform_ on (h,1,1): fan_in=1, fan_out=h
        "gammas": _xavier(ks[3], (n_heads, 1, 1), 1, n_heads),
    }


def init_layer(key, d_model, d_ff, n_heads):
    ks = jax.random.split(key, 3)
    return {
        "attn": init_mha(ks[0], d_model, n_heads),
        "ln1_w": jnp.ones((d_model,), jnp.float32),
        "ln1_b": jnp.zeros((d_model,), jnp.float32),
        "ffn1_w": _xavier(ks[1], (d_model, d_ff), d_model, d_ff),
        "ffn1_b": jnp.zeros((d_ff,), jnp.float32),
        "ffn2_w": _xavier(ks[2], (d_ff, d_model), d_ff, d_model),
        "ffn2_b": jnp.zeros((d_model,), jnp.float32),
        "ln2_w": jnp.ones((d_model,), jnp.float32),
        "ln2_b": jnp.zeros((d_model,), jnp.float32),
    }


def init_architecture(key, n_blocks, d_model, d_ff, n_heads):
    k1, k2 = jax.random.split(key)
    keys1 = jax.random.split(k1, n_blocks)
    keys2 = jax.random.split(k2, 2 * n_blocks)
    return {
        "blocks_1": [init_layer(k, d_model, d_ff, n_heads) for k in keys1],
        "blocks_2": [init_layer(k, d_model, d_ff, n_heads) for k in keys2],
    }


# ----------------------------------------------------------------------------
# Main
# ----------------------------------------------------------------------------

if __name__ == "__main__":
    # Small config consistent with the module: n_heads * d_feature = d_model
    batch, seqlen = 2, 8
    d_model, n_heads, d_ff, n_blocks = 32, 4, 64, 1

    key = jax.random.PRNGKey(0)
    kp, kq, kqa = jax.random.split(key, 3)

    params = init_architecture(kp, n_blocks, d_model, d_ff, n_heads)
    q_embed_data = jax.random.normal(kq, (batch, seqlen, d_model), jnp.float32)
    qa_embed_data = jax.random.normal(kqa, (batch, seqlen, d_model), jnp.float32)

    fwd = jax.jit(functools.partial(architecture_forward, n_heads=n_heads))
    out = fwd(params, q_embed_data, qa_embed_data)
    out = jax.block_until_ready(out)

    assert out.shape == (batch, seqlen, d_model)
    assert bool(jnp.all(jnp.isfinite(out)))
    print("KERNEL_OK")
</pallas_src>

<mosaic_0001>
module attributes {stable_mosaic.version = 11 : i64} {
  func.func @linear_kernel(%arg0: i32, %arg1: memref<16x32xf32, #tpu.memory_space<vmem>>, %arg2: memref<32x64xbf16, #tpu.memory_space<vmem>>, %arg3: memref<1x64xf32, #tpu.memory_space<vmem>>, %arg4: memref<16x64xbf16, #tpu.memory_space<vmem>>) attributes {dimension_semantics = [#tpu.dimension_semantics<parallel>], iteration_bounds = array<i64: 1>, scalar_prefetch = 0 : i64, scratch_operands = 0 : i64, tpu.core_type = #tpu.core_type<tc>, window_params = [{transform_indices = @transform_0, window_bounds = array<i64: 16, 32>}, {pipeline_mode = #tpu.pipeline_mode<synchronous>, transform_indices = @transform_1, window_bounds = array<i64: 32, 64>}, {pipeline_mode = #tpu.pipeline_mode<synchronous>, transform_indices = @transform_2, window_bounds = array<i64: 1, 64>}, {transform_indices = @transform_3, window_bounds = array<i64: 16, 64>}]} {
    %c0 = arith.constant 0 : index
    %c0_0 = arith.constant 0 : index
    %0 = vector.load %arg1[%c0, %c0_0] : memref<16x32xf32, #tpu.memory_space<vmem>>, vector<16x32xf32>
    %1 = arith.truncf %0 : vector<16x32xf32> to vector<16x32xbf16>
    %c0_1 = arith.constant 0 : index
    %c0_2 = arith.constant 0 : index
    %2 = vector.load %arg2[%c0_1, %c0_2] : memref<32x64xbf16, #tpu.memory_space<vmem>>, vector<32x64xbf16>
    %cst = arith.constant dense<0.000000e+00> : vector<16x64xf32>
    %3 = tpu.matmul %1, %2, %cst {dimension_numbers = #tpu.dot_dimension_numbers<[1], [0], [0], [1], [0, 0, 1, 1], [], []>} : vector<16x32xbf16>, vector<32x64xbf16>, vector<16x64xf32> -> vector<16x64xf32>
    %c0_3 = arith.constant 0 : index
    %c0_4 = arith.constant 0 : index
    %4 = vector.load %arg3[%c0_3, %c0_4] : memref<1x64xf32, #tpu.memory_space<vmem>>, vector<1x64xf32>
    %5 = vector.broadcast %4 : vector<1x64xf32> to vector<16x64xf32>
    %6 = arith.addf %3, %5 : vector<16x64xf32>
    %7 = arith.truncf %6 : vector<16x64xf32> to vector<16x64xbf16>
    %c0_5 = arith.constant 0 : index
    %c0_6 = arith.constant 0 : index
    %8 = vector.load %arg4[%c0_5, %c0_6] : memref<16x64xbf16, #tpu.memory_space<vmem>>, vector<16x64xbf16>
    tpu.vector_store %arg4[%c0_5, %c0_6], %7 {strides = array<i32>} : memref<16x64xbf16, #tpu.memory_space<vmem>>, vector<16x64xbf16>,
    return
  }
  func.func @transform_0(%arg0: i32) -> (i32, i32) {
    %c0_i32 = arith.constant 0 : i32
    %c0_i32_0 = arith.constant 0 : i32
    return %arg0, %c0_i32 : i32, i32
  }
  func.func @transform_1(%arg0: i32) -> (i32, i32) {
    %c0_i32 = arith.constant 0 : i32
    %c0_i32_0 = arith.constant 0 : i32
    %c0_i32_1 = arith.constant 0 : i32
    return %c0_i32, %c0_i32_0 : i32, i32
  }
  func.func @transform_2(%arg0: i32) -> (i32, i32) {
    %c0_i32 = arith.constant 0 : i32
    %c0_i32_0 = arith.constant 0 : i32
    %c0_i32_1 = arith.constant 0 : i32
    return %c0_i32, %c0_i32_0 : i32, i32
  }
  func.func @transform_3(%arg0: i32) -> (i32, i32) {
    %c0_i32 = arith.constant 0 : i32
    %c0_i32_0 = arith.constant 0 : i32
    return %arg0, %c0_i32 : i32, i32
  }
}

module attributes {stable_mosaic.version = 11 : i64} {
  func.func @akt_attn_kernel(%arg0: i32, %arg1: memref<1x4x8x8xbf16, #tpu.memory_space<vmem>>, %arg2: memref<1x4x8x8xbf16, #tpu.memory_space<vmem>>, %arg3: memref<4x8x1xf32, #tpu.memory_space<vmem>>, %arg4: memref<1x4x8x8xbf16, #tpu.memory_space<vmem>>) attributes {dimension_semantics = [#tpu.dimension_semantics<parallel>], iteration_bounds = array<i64: 2>, scalar_prefetch = 0 : i64, scratch_operands = 0 : i64, tpu.core_type = #tpu.core_type<tc>, window_params = [{transform_indices = @transform_0, window_bounds = array<i64: 1, 4, 8, 8>}, {transform_indices = @transform_1, window_bounds = array<i64: 1, 4, 8, 8>}, {pipeline_mode = #tpu.pipeline_mode<synchronous>, transform_indices = @transform_2, window_bounds = array<i64: 4, 8, 1>}, {transform_indices = @transform_3, window_bounds = array<i64: 1, 4, 8, 8>}]} {
    %c0 = arith.constant 0 : index
    %c0_0 = arith.constant 0 : index
    %c0_1 = arith.constant 0 : index
    %c0_2 = arith.constant 0 : index
    %0 = vector.load %arg1[%c0, %c0_0, %c0_1, %c0_2] : memref<1x4x8x8xbf16, #tpu.memory_space<vmem>>, vector<1x4x8x8xbf16>
    %1 = vector.shape_cast %0 : vector<1x4x8x8xbf16> to vector<4x8x8xbf16>
    %c0_3 = arith.constant 0 : index
    %c0_4 = arith.constant 0 : index
    %c0_5 = arith.constant 0 : index
    %c0_6 = arith.constant 0 : index
    %2 = vector.load %arg2[%c0_3, %c0_4, %c0_5, %c0_6] : memref<1x4x8x8xbf16, #tpu.memory_space<vmem>>, vector<1x4x8x8xbf16>
    %3 = vector.shape_cast %2 : vector<1x4x8x8xbf16> to vector<4x8x8xbf16>
    %c0_7 = arith.constant 0 : index
    %c0_8 = arith.constant 0 : index
    %c0_9 = arith.constant 0 : index
    %4 = vector.load %arg3[%c0_7, %c0_8, %c0_9] : memref<4x8x1xf32, #tpu.memory_space<vmem>>, vector<4x8x1xf32>
    %5 = tpu.iota {dimensions = array<i32: 0>} : vector<8x8xi32>
    %6 = tpu.iota {dimensions = array<i32: 1>} : vector<8x8xi32>
    %c1_i32 = arith.constant 1 : i32
    %7 = vector.broadcast %c1_i32 : i32 to vector<8x8xi32>
    %8 = arith.addi %5, %7 : vector<8x8xi32>
    %9 = arith.cmpi slt, %6, %8 : vector<8x8xi32>
    %10 = arith.subi %6, %5 : vector<8x8xi32>
    %11 = math.absi %10 : vector<8x8xi32>
    %12 = arith.sitofp %11 : vector<8x8xi32> to vector<8x8xf32>
    %13 = arith.cmpi sgt, %5, %6 : vector<8x8xi32>
    %cst = arith.constant 1.000000e+00 : f32
    %cst_10 = arith.constant 0.000000e+00 : f32
    %14 = vector.broadcast %cst : f32 to vector<8x8xf32>
    %15 = vector.broadcast %cst_10 : f32 to vector<8x8xf32>
    %16 = arith.select %13, %14, %15 : vector<8x8xi1>, vector<8x8xf32>
    %17 = arith.truncf %16 : vector<8x8xf32> to vector<8x8xbf16>
    "tpu.trace_start"() <{level = 10 : i32, message = "hqd,hkd->hqk"}> : () -> ()
    %cst_11 = arith.constant dense<0.000000e+00> : vector<4x8x8xf32>
    %18 = tpu.matmul %1, %1, %cst_11 {dimension_numbers = #tpu.dot_dimension_numbers<[2], [2], [1], [1], [0, 0, 0, 1, 1, 1], [0], [0]>} : vector<4x8x8xbf16>, vector<4x8x8xbf16>, vector<4x8x8xf32> -> vector<4x8x8xf32>
    "tpu.trace_stop"() : () -> ()
    %cst_12 = arith.constant 0.353553385 : f32
    %19 = vector.broadcast %cst_12 : f32 to vector<4x8x8xf32>
    %20 = arith.mulf %18, %19 : vector<4x8x8xf32>
    %cst_13 = arith.constant -1.000000e+32 : f32
    %21 = vector.shape_cast %9 : vector<8x8xi1> to vector<1x8x8xi1>
    %22 = vector.broadcast %21 : vector<1x8x8xi1> to vector<4x8x8xi1>
    %23 = vector.broadcast %cst_13 : f32 to vector<4x8x8xf32>
    %24 = arith.select %22, %20, %23 : vector<4x8x8xi1>, vector<4x8x8xf32>
    %cst_14 = arith.constant dense<0xFF800000> : vector<4x8xf32>
    %25 = vector.multi_reduction <maximumf>, %24, %cst_14 [2] : vector<4x8x8xf32> to vector<4x8xf32>
    %26 = vector.shape_cast %25 : vector<4x8xf32> to vector<4x8x1xf32>
    %27 = vector.broadcast %26 : vector<4x8x1xf32> to vector<4x8x8xf32>
    %28 = arith.subf %24, %27 : vector<4x8x8xf32>
    %29 = math.exp %28 : vector<4x8x8xf32>
    %cst_15 = arith.constant dense<0.000000e+00> : vector<4x8xf32>
    %30 = vector.multi_reduction <add>, %29, %cst_15 [2] : vector<4x8x8xf32> to vector<4x8xf32>
    %31 = vector.shape_cast %30 : vector<4x8xf32> to vector<4x8x1xf32>
    %32 = tpu.reciprocal %31 {approx = true} : vector<4x8x1xf32> -> vector<4x8x1xf32>
    %33 = vector.broadcast %32 : vector<4x8x1xf32> to vector<4x8x8xf32>
    %34 = arith.mulf %29, %33 : vector<4x8x8xf32>
    %cst_16 = arith.constant 0.000000e+00 : f32
    %35 = vector.shape_cast %9 : vector<8x8xi1> to vector<1x8x8xi1>
    %36 = vector.broadcast %35 : vector<1x8x8xi1> to vector<4x8x8xi1>
    %37 = vector.broadcast %cst_16 : f32 to vector<4x8x8xf32>
    %38 = arith.select %36, %34, %37 : vector<4x8x8xi1>, vector<4x8x8xf32>
    %39 = vector.shape_cast %38 : vector<4x8x8xf32> to vector<32x8xf32>
    %40 = arith.truncf %39 : vector<32x8xf32> to vector<32x8xbf16>
    %cst_17 = arith.constant dense<0.000000e+00> : vector<32x8xf32>
    %41 = tpu.matmul %40, %17, %cst_17 {dimension_numbers = #tpu.dot_dimension_numbers<[1], [0], [0], [1], [0, 0, 1, 1], [], []>} : vector<32x8xbf16>, vector<8x8xbf16>, vector<32x8xf32> -> vector<32x8xf32>
    %42 = vector.shape_cast %41 : vector<32x8xf32> to vector<4x8x8xf32>
    %43 = vector.shape_cast %12 : vector<8x8xf32> to vector<1x8x8xf32>
    %44 = vector.broadcast %43 : vector<1x8x8xf32> to vector<4x8x8xf32>
    %45 = arith.mulf %42, %44 : vector<4x8x8xf32>
    %cst_18 = arith.constant 0.000000e+00 : f32
    %46 = vector.broadcast %cst_18 : f32 to vector<4x8x8xf32>
    %47 = arith.maximumf %45, %46 : vector<4x8x8xf32>
    %48 = math.sqrt %47 : vector<4x8x8xf32>
    %49 = vector.broadcast %4 : vector<4x8x1xf32> to vector<4x8x8xf32>
    %50 = arith.mulf %48, %49 : vector<4x8x8xf32>
    %51 = math.exp %50 : vector<4x8x8xf32>
    %cst_19 = arith.constant 9.99999974E-6 : f32
    %cst_20 = arith.constant 1.000000e+05 : f32
    %52 = vector.broadcast %cst_19 : f32 to vector<4x8x8xf32>
    %53 = arith.maximumf %52, %51 : vector<4x8x8xf32>
    %54 = vector.broadcast %cst_20 : f32 to vector<4x8x8xf32>
    %55 = arith.minimumf %54, %53 : vector<4x8x8xf32>
    %56 = arith.mulf %20, %55 : vector<4x8x8xf32>
    %cst_21 = arith.constant -1.000000e+32 : f32
    %57 = vector.shape_cast %9 : vector<8x8xi1> to vector<1x8x8xi1>
    %58 = vector.broadcast %57 : vector<1x8x8xi1> to vector<4x8x8xi1>
    %59 = vector.broadcast %cst_21 : f32 to vector<4x8x8xf32>
    %60 = arith.select %58, %56, %59 : vector<4x8x8xi1>, vector<4x8x8xf32>
    %cst_22 = arith.constant dense<0xFF800000> : vector<4x8xf32>
    %61 = vector.multi_reduction <maximumf>, %60, %cst_22 [2] : vector<4x8x8xf32> to vector<4x8xf32>
    %62 = vector.shape_cast %61 : vector<4x8xf32> to vector<4x8x1xf32>
    %63 = vector.broadcast %62 : vector<4x8x1xf32> to vector<4x8x8xf32>
    %64 = arith.subf %60, %63 : vector<4x8x8xf32>
    %65 = math.exp %64 : vector<4x8x8xf32>
    %cst_23 = arith.constant dense<0.000000e+00> : vector<4x8xf32>
    %66 = vector.multi_reduction <add>, %65, %cst_23 [2] : vector<4x8x8xf32> to vector<4x8xf32>
    %67 = vector.shape_cast %66 : vector<4x8xf32> to vector<4x8x1xf32>
    %68 = tpu.reciprocal %67 {approx = true} : vector<4x8x1xf32> -> vector<4x8x1xf32>
    %69 = vector.broadcast %68 : vector<4x8x1xf32> to vector<4x8x8xf32>
    %70 = arith.mulf %65, %69 : vector<4x8x8xf32>
    %71 = arith.truncf %70 : vector<4x8x8xf32> to vector<4x8x8xbf16>
    "tpu.trace_start"() <{level = 10 : i32, message = "hqk,hkd->hqd"}> : () -> ()
    %cst_24 = arith.constant dense<0.000000e+00> : vector<4x8x8xf32>
    %72 = tpu.matmul %71, %3, %cst_24 {dimension_numbers = #tpu.dot_dimension_numbers<[2], [1], [1], [2], [0, 0, 0, 1, 1, 2], [0], [0]>} : vector<4x8x8xbf16>, vector<4x8x8xbf16>, vector<4x8x8xf32> -> vector<4x8x8xf32>
    "tpu.trace_stop"() : () -> ()
    %73 = arith.truncf %72 : vector<4x8x8xf32> to vector<4x8x8xbf16>
    %c0_25 = arith.constant 0 : index
    %c0_26 = arith.constant 0 : index
    %c0_27 = arith.constant 0 : index
    %c0_28 = arith.constant 0 : index
    %74 = vector.load %arg4[%c0_25, %c0_26, %c0_27, %c0_28] : memref<1x4x8x8xbf16, #tpu.memory_space<vmem>>, vector<1x4x8x8xbf16>
    %75 = vector.shape_cast %74 : vector<1x4x8x8xbf16> to vector<4x8x8xbf16>
    %76 = vector.shape_cast %73 : vector<4x8x8xbf16> to vector<1x4x8x8xbf16>
    tpu.vector_store %arg4[%c0_25, %c0_26, %c0_27, %c0_28], %76 {strides = array<i32>} : memref<1x4x8x8xbf16, #tpu.memory_space<vmem>>, vector<1x4x8x8xbf16>,
    return
  }
  func.func @transform_0(%arg0: i32) -> (i32, i32, i32, i32) {
    %c0_i32 = arith.constant 0 : i32
    %c0_i32_0 = arith.constant 0 : i32
    %c0_i32_1 = arith.constant 0 : i32
    %c0_i32_2 = arith.constant 0 : i32
    return %arg0, %c0_i32, %c0_i32_0, %c0_i32_1 : i32, i32, i32, i32
  }
  func.func @transform_1(%arg0: i32) -> (i32, i32, i32, i32) {
    %c0_i32 = arith.constant 0 : i32
    %c0_i32_0 = arith.constant 0 : i32
    %c0_i32_1 = arith.constant 0 : i32
    %c0_i32_2 = arith.constant 0 : i32
    return %arg0, %c0_i32, %c0_i32_0, %c0_i32_1 : i32, i32, i32, i32
  }
  func.func @transform_2(%arg0: i32) -> (i32, i32, i32) {
    %c0_i32 = arith.constant 0 : i32
    %c0_i32_0 = arith.constant 0 : i32
    %c0_i32_1 = arith.constant 0 : i32
    %c0_i32_2 = arith.constant 0 : i32
    return %c0_i32, %c0_i32_0, %c0_i32_1 : i32, i32, i32
  }
  func.func @transform_3(%arg0: i32) -> (i32, i32, i32, i32) {
    %c0_i32 = arith.constant 0 : i32
    %c0_i32_0 = arith.constant 0 : i32
    %c0_i32_1 = arith.constant 0 : i32
    %c0_i32_2 = arith.constant 0 : i32
    return %arg0, %c0_i32, %c0_i32_0, %c0_i32_1 : i32, i32, i32, i32
  }
}

module attributes {stable_mosaic.version = 11 : i64} {
  func.func @proj_add_ln_kernel(%arg0: i32, %arg1: memref<16x32xbf16, #tpu.memory_space<vmem>>, %arg2: memref<32x32xbf16, #tpu.memory_space<vmem>>, %arg3: memref<1x32xf32, #tpu.memory_space<vmem>>, %arg4: memref<16x32xf32, #tpu.memory_space<vmem>>, %arg5: memref<1x32xf32, #tpu.memory_space<vmem>>, %arg6: memref<1x32xf32, #tpu.memory_space<vmem>>, %arg7: memref<16x32xf32, #tpu.memory_space<vmem>>) attributes {dimension_semantics = [#tpu.dimension_semantics<parallel>], iteration_bounds = array<i64: 1>, scalar_prefetch = 0 : i64, scratch_operands = 0 : i64, tpu.core_type = #tpu.core_type<tc>, window_params = [{transform_indices = @transform_0, window_bounds = array<i64: 16, 32>}, {pipeline_mode = #tpu.pipeline_mode<synchronous>, transform_indices = @transform_1, window_bounds = array<i64: 32, 32>}, {pipeline_mode = #tpu.pipeline_mode<synchronous>, transform_indices = @transform_2, window_bounds = array<i64: 1, 32>}, {transform_indices = @transform_3, window_bounds = array<i64: 16, 32>}, {pipeline_mode = #tpu.pipeline_mode<synchronous>, transform_indices = @transform_4, window_bounds = array<i64: 1, 32>}, {pipeline_mode = #tpu.pipeline_mode<synchronous>, transform_indices = @transform_5, window_bounds = array<i64: 1, 32>}, {transform_indices = @transform_6, window_bounds = array<i64: 16, 32>}]} {
    %c0 = arith.constant 0 : index
    %c0_0 = arith.constant 0 : index
    %0 = vector.load %arg1[%c0, %c0_0] : memref<16x32xbf16, #tpu.memory_space<vmem>>, vector<16x32xbf16>
    %c0_1 = arith.constant 0 : index
    %c0_2 = arith.constant 0 : index
    %1 = vector.load %arg2[%c0_1, %c0_2] : memref<32x32xbf16, #tpu.memory_space<vmem>>, vector<32x32xbf16>
    %cst = arith.constant dense<0.000000e+00> : vector<16x32xf32>
    %2 = tpu.matmul %0, %1, %cst {dimension_numbers = #tpu.dot_dimension_numbers<[1], [0], [0], [1], [0, 0, 1, 1], [], []>} : vector<16x32xbf16>, vector<32x32xbf16>, vector<16x32xf32> -> vector<16x32xf32>
    %c0_3 = arith.constant 0 : index
    %c0_4 = arith.constant 0 : index
    %3 = vector.load %arg3[%c0_3, %c0_4] : memref<1x32xf32, #tpu.memory_space<vmem>>, vector<1x32xf32>
    %4 = vector.broadcast %3 : vector<1x32xf32> to vector<16x32xf32>
    %5 = arith.addf %2, %4 : vector<16x32xf32>
    %c0_5 = arith.constant 0 : index
    %c0_6 = arith.constant 0 : index
    %6 = vector.load %arg4[%c0_5, %c0_6] : memref<16x32xf32, #tpu.memory_space<vmem>>, vector<16x32xf32>
    %7 = arith.addf %5, %6 : vector<16x32xf32>
    %cst_7 = arith.constant dense<0.000000e+00> : vector<16xf32>
    %8 = vector.multi_reduction <add>, %7, %cst_7 [1] : vector<16x32xf32> to vector<16xf32>
    %9 = vector.shape_cast %8 : vector<16xf32> to vector<16x1xf32>
    %cst_8 = arith.constant 3.200000e+01 : f32
    %10 = vector.broadcast %cst_8 : f32 to vector<16x1xf32>
    %11 = arith.divf %9, %10 : vector<16x1xf32>
    %12 = vector.broadcast %11 : vector<16x1xf32> to vector<16x32xf32>
    %13 = arith.subf %7, %12 : vector<16x32xf32>
    %14 = arith.mulf %13, %13 : vector<16x32xf32>
    %cst_9 = arith.constant dense<0.000000e+00> : vector<16xf32>
    %15 = vector.multi_reduction <add>, %14, %cst_9 [1] : vector<16x32xf32> to vector<16xf32>
    %16 = vector.shape_cast %15 : vector<16xf32> to vector<16x1xf32>
    %cst_10 = arith.constant 3.200000e+01 : f32
    %17 = vector.broadcast %cst_10 : f32 to vector<16x1xf32>
    %18 = arith.divf %16, %17 : vector<16x1xf32>
    %19 = vector.broadcast %11 : vector<16x1xf32> to vector<16x32xf32>
    %20 = arith.subf %7, %19 : vector<16x32xf32>
    %cst_11 = arith.constant 9.99999974E-6 : f32
    %21 = vector.broadcast %cst_11 : f32 to vector<16x1xf32>
    %22 = arith.addf %18, %21 : vector<16x1xf32>
    %23 = math.rsqrt %22 : vector<16x1xf32>
    %24 = vector.broadcast %23 : vector<16x1xf32> to vector<16x32xf32>
    %25 = arith.mulf %20, %24 : vector<16x32xf32>
    %c0_12 = arith.constant 0 : index
    %c0_13 = arith.constant 0 : index
    %26 = vector.load %arg5[%c0_12, %c0_13] : memref<1x32xf32, #tpu.memory_space<vmem>>, vector<1x32xf32>
    %27 = vector.broadcast %26 : vector<1x32xf32> to vector<16x32xf32>
    %28 = arith.mulf %25, %27 : vector<16x32xf32>
    %c0_14 = arith.constant 0 : index
    %c0_15 = arith.constant 0 : index
    %29 = vector.load %arg6[%c0_14, %c0_15] : memref<1x32xf32, #tpu.memory_space<vmem>>, vector<1x32xf32>
    %30 = vector.broadcast %29 : vector<1x32xf32> to vector<16x32xf32>
    %31 = arith.addf %28, %30 : vector<16x32xf32>
    %c0_16 = arith.constant 0 : index
    %c0_17 = arith.constant 0 : index
    %32 = vector.load %arg7[%c0_16, %c0_17] : memref<16x32xf32, #tpu.memory_space<vmem>>, vector<16x32xf32>
    tpu.vector_store %arg7[%c0_16, %c0_17], %31 {strides = array<i32>} : memref<16x32xf32, #tpu.memory_space<vmem>>, vector<16x32xf32>,
    return
  }
  func.func @transform_0(%arg0: i32) -> (i32, i32) {
    %c0_i32 = arith.constant 0 : i32
    %c0_i32_0 = arith.constant 0 : i32
    return %arg0, %c0_i32 : i32, i32
  }
  func.func @transform_1(%arg0: i32) -> (i32, i32) {
    %c0_i32 = arith.constant 0 : i32
    %c0_i32_0 = arith.constant 0 : i32
    %c0_i32_1 = arith.constant 0 : i32
    return %c0_i32, %c0_i32_0 : i32, i32
  }
  func.func @transform_2(%arg0: i32) -> (i32, i32) {
    %c0_i32 = arith.constant 0 : i32
    %c0_i32_0 = arith.constant 0 : i32
    %c0_i32_1 = arith.constant 0 : i32
    return %c0_i32, %c0_i32_0 : i32, i32
  }
  func.func @transform_3(%arg0: i32) -> (i32, i32) {
    %c0_i32 = arith.constant 0 : i32
    %c0_i32_0 = arith.constant 0 : i32
    return %arg0, %c0_i32 : i32, i32
  }
  func.func @transform_4(%arg0: i32) -> (i32, i32) {
    %c0_i32 = arith.constant 0 : i32
    %c0_i32_0 = arith.constant 0 : i32
    %c0_i32_1 = arith.constant 0 : i32
    return %c0_i32, %c0_i32_0 : i32, i32
  }
  func.func @transform_5(%arg0: i32) -> (i32, i32) {
    %c0_i32 = arith.constant 0 : i32
    %c0_i32_0 = arith.constant 0 : i32
    %c0_i32_1 = arith.constant 0 : i32
    return %c0_i32, %c0_i32_0 : i32, i32
  }
  func.func @transform_6(%arg0: i32) -> (i32, i32) {
    %c0_i32 = arith.constant 0 : i32
    %c0_i32_0 = arith.constant 0 : i32
    return %arg0, %c0_i32 : i32, i32
  }
}

module attributes {stable_mosaic.version = 11 : i64} {
  func.func @linear_kernel(%arg0: i32, %arg1: memref<16x32xf32, #tpu.memory_space<vmem>>, %arg2: memref<32x32xbf16, #tpu.memory_space<vmem>>, %arg3: memref<1x32xf32, #tpu.memory_space<vmem>>, %arg4: memref<16x32xbf16, #tpu.memory_space<vmem>>) attributes {dimension_semantics = [#tpu.dimension_semantics<parallel>], iteration_bounds = array<i64: 1>, scalar_prefetch = 0 : i64, scratch_operands = 0 : i64, tpu.core_type = #tpu.core_type<tc>, window_params = [{transform_indices = @transform_0, window_bounds = array<i64: 16, 32>}, {pipeline_mode = #tpu.pipeline_mode<synchronous>, transform_indices = @transform_1, window_bounds = array<i64: 32, 32>}, {pipeline_mode = #tpu.pipeline_mode<synchronous>, transform_indices = @transform_2, window_bounds = array<i64: 1, 32>}, {transform_indices = @transform_3, window_bounds = array<i64: 16, 32>}]} {
    %c0 = arith.constant 0 : index
    %c0_0 = arith.constant 0 : index
    %0 = vector.load %arg1[%c0, %c0_0] : memref<16x32xf32, #tpu.memory_space<vmem>>, vector<16x32xf32>
    %1 = arith.truncf %0 : vector<16x32xf32> to vector<16x32xbf16>
    %c0_1 = arith.constant 0 : index
    %c0_2 = arith.constant 0 : index
    %2 = vector.load %arg2[%c0_1, %c0_2] : memref<32x32xbf16, #tpu.memory_space<vmem>>, vector<32x32xbf16>
    %cst = arith.constant dense<0.000000e+00> : vector<16x32xf32>
    %3 = tpu.matmul %1, %2, %cst {dimension_numbers = #tpu.dot_dimension_numbers<[1], [0], [0], [1], [0, 0, 1, 1], [], []>} : vector<16x32xbf16>, vector<32x32xbf16>, vector<16x32xf32> -> vector<16x32xf32>
    %c0_3 = arith.constant 0 : index
    %c0_4 = arith.constant 0 : index
    %4 = vector.load %arg3[%c0_3, %c0_4] : memref<1x32xf32, #tpu.memory_space<vmem>>, vector<1x32xf32>
    %5 = vector.broadcast %4 : vector<1x32xf32> to vector<16x32xf32>
    %6 = arith.addf %3, %5 : vector<16x32xf32>
    %7 = arith.truncf %6 : vector<16x32xf32> to vector<16x32xbf16>
    %c0_5 = arith.constant 0 : index
    %c0_6 = arith.constant 0 : index
    %8 = vector.load %arg4[%c0_5, %c0_6] : memref<16x32xbf16, #tpu.memory_space<vmem>>, vector<16x32xbf16>
    tpu.vector_store %arg4[%c0_5, %c0_6], %7 {strides = array<i32>} : memref<16x32xbf16, #tpu.memory_space<vmem>>, vector<16x32xbf16>,
    return
  }
  func.func @transform_0(%arg0: i32) -> (i32, i32) {
    %c0_i32 = arith.constant 0 : i32
    %c0_i32_0 = arith.constant 0 : i32
    return %arg0, %c0_i32 : i32, i32
  }
  func.func @transform_1(%arg0: i32) -> (i32, i32) {
    %c0_i32 = arith.constant 0 : i32
    %c0_i32_0 = arith.constant 0 : i32
    %c0_i32_1 = arith.constant 0 : i32
    return %c0_i32, %c0_i32_0 : i32, i32
  }
  func.func @transform_2(%arg0: i32) -> (i32, i32) {
    %c0_i32 = arith.constant 0 : i32
    %c0_i32_0 = arith.constant 0 : i32
    %c0_i32_1 = arith.constant 0 : i32
    return %c0_i32, %c0_i32_0 : i32, i32
  }
  func.func @transform_3(%arg0: i32) -> (i32, i32) {
    %c0_i32 = arith.constant 0 : i32
    %c0_i32_0 = arith.constant 0 : i32
    return %arg0, %c0_i32 : i32, i32
  }
}

module attributes {stable_mosaic.version = 11 : i64} {
  func.func @ffn_add_ln_kernel(%arg0: i32, %arg1: memref<16x32xf32, #tpu.memory_space<vmem>>, %arg2: memref<32x64xbf16, #tpu.memory_space<vmem>>, %arg3: memref<1x64xf32, #tpu.memory_space<vmem>>, %arg4: memref<64x32xbf16, #tpu.memory_space<vmem>>, %arg5: memref<1x32xf32, #tpu.memory_space<vmem>>, %arg6: memref<1x32xf32, #tpu.memory_space<vmem>>, %arg7: memref<1x32xf32, #tpu.memory_space<vmem>>, %arg8: memref<16x32xf32, #tpu.memory_space<vmem>>) attributes {dimension_semantics = [#tpu.dimension_semantics<parallel>], iteration_bounds = array<i64: 1>, scalar_prefetch = 0 : i64, scratch_operands = 0 : i64, tpu.core_type = #tpu.core_type<tc>, window_params = [{transform_indices = @transform_0, window_bounds = array<i64: 16, 32>}, {pipeline_mode = #tpu.pipeline_mode<synchronous>, transform_indices = @transform_1, window_bounds = array<i64: 32, 64>}, {pipeline_mode = #tpu.pipeline_mode<synchronous>, transform_indices = @transform_2, window_bounds = array<i64: 1, 64>}, {pipeline_mode = #tpu.pipeline_mode<synchronous>, transform_indices = @transform_3, window_bounds = array<i64: 64, 32>}, {pipeline_mode = #tpu.pipeline_mode<synchronous>, transform_indices = @transform_4, window_bounds = array<i64: 1, 32>}, {pipeline_mode = #tpu.pipeline_mode<synchronous>, transform_indices = @transform_5, window_bounds = array<i64: 1, 32>}, {pipeline_mode = #tpu.pipeline_mode<synchronous>, transform_indices = @transform_6, window_bounds = array<i64: 1, 32>}, {transform_indices = @transform_7, window_bounds = array<i64: 16, 32>}]} {
    %c0 = arith.constant 0 : index
    %c0_0 = arith.constant 0 : index
    %0 = vector.load %arg1[%c0, %c0_0] : memref<16x32xf32, #tpu.memory_space<vmem>>, vector<16x32xf32>
    %1 = arith.truncf %0 : vector<16x32xf32> to vector<16x32xbf16>
    %c0_1 = arith.constant 0 : index
    %c0_2 = arith.constant 0 : index
    %2 = vector.load %arg2[%c0_1, %c0_2] : memref<32x64xbf16, #tpu.memory_space<vmem>>, vector<32x64xbf16>
    %cst = arith.constant dense<0.000000e+00> : vector<16x64xf32>
    %3 = tpu.matmul %1, %2, %cst {dimension_numbers = #tpu.dot_dimension_numbers<[1], [0], [0], [1], [0, 0, 1, 1], [], []>} : vector<16x32xbf16>, vector<32x64xbf16>, vector<16x64xf32> -> vector<16x64xf32>
    %c0_3 = arith.constant 0 : index
    %c0_4 = arith.constant 0 : index
    %4 = vector.load %arg3[%c0_3, %c0_4] : memref<1x64xf32, #tpu.memory_space<vmem>>, vector<1x64xf32>
    %5 = vector.broadcast %4 : vector<1x64xf32> to vector<16x64xf32>
    %6 = arith.addf %3, %5 : vector<16x64xf32>
    %cst_5 = arith.constant 0.000000e+00 : f32
    %7 = vector.broadcast %cst_5 : f32 to vector<16x64xf32>
    %8 = arith.maximumf %6, %7 : vector<16x64xf32>
    %9 = arith.truncf %8 : vector<16x64xf32> to vector<16x64xbf16>
    %c0_6 = arith.constant 0 : index
    %c0_7 = arith.constant 0 : index
    %10 = vector.load %arg4[%c0_6, %c0_7] : memref<64x32xbf16, #tpu.memory_space<vmem>>, vector<64x32xbf16>
    %cst_8 = arith.constant dense<0.000000e+00> : vector<16x32xf32>
    %11 = tpu.matmul %9, %10, %cst_8 {dimension_numbers = #tpu.dot_dimension_numbers<[1], [0], [0], [1], [0, 0, 1, 1], [], []>} : vector<16x64xbf16>, vector<64x32xbf16>, vector<16x32xf32> -> vector<16x32xf32>
    %c0_9 = arith.constant 0 : index
    %c0_10 = arith.constant 0 : index
    %12 = vector.load %arg5[%c0_9, %c0_10] : memref<1x32xf32, #tpu.memory_space<vmem>>, vector<1x32xf32>
    %13 = vector.broadcast %12 : vector<1x32xf32> to vector<16x32xf32>
    %14 = arith.addf %11, %13 : vector<16x32xf32>
    %15 = arith.addf %14, %0 : vector<16x32xf32>
    %cst_11 = arith.constant dense<0.000000e+00> : vector<16xf32>
    %16 = vector.multi_reduction <add>, %15, %cst_11 [1] : vector<16x32xf32> to vector<16xf32>
    %17 = vector.shape_cast %16 : vector<16xf32> to vector<16x1xf32>
    %cst_12 = arith.constant 3.200000e+01 : f32
    %18 = vector.broadcast %cst_12 : f32 to vector<16x1xf32>
    %19 = arith.divf %17, %18 : vector<16x1xf32>
    %20 = vector.broadcast %19 : vector<16x1xf32> to vector<16x32xf32>
    %21 = arith.subf %15, %20 : vector<16x32xf32>
    %22 = arith.mulf %21, %21 : vector<16x32xf32>
    %cst_13 = arith.constant dense<0.000000e+00> : vector<16xf32>
    %23 = vector.multi_reduction <add>, %22, %cst_13 [1] : vector<16x32xf32> to vector<16xf32>
    %24 = vector.shape_cast %23 : vector<16xf32> to vector<16x1xf32>
    %cst_14 = arith.constant 3.200000e+01 : f32
    %25 = vector.broadcast %cst_14 : f32 to vector<16x1xf32>
    %26 = arith.divf %24, %25 : vector<16x1xf32>
    %27 = vector.broadcast %19 : vector<16x1xf32> to vector<16x32xf32>
    %28 = arith.subf %15, %27 : vector<16x32xf32>
    %cst_15 = arith.constant 9.99999974E-6 : f32
    %29 = vector.broadcast %cst_15 : f32 to vector<16x1xf32>
    %30 = arith.addf %26, %29 : vector<16x1xf32>
    %31 = math.rsqrt %30 : vector<16x1xf32>
    %32 = vector.broadcast %31 : vector<16x1xf32> to vector<16x32xf32>
    %33 = arith.mulf %28, %32 : vector<16x32xf32>
    %c0_16 = arith.constant 0 : index
    %c0_17 = arith.constant 0 : index
    %34 = vector.load %arg6[%c0_16, %c0_17] : memref<1x32xf32, #tpu.memory_space<vmem>>, vector<1x32xf32>
    %35 = vector.broadcast %34 : vector<1x32xf32> to vector<16x32xf32>
    %36 = arith.mulf %33, %35 : vector<16x32xf32>
    %c0_18 = arith.constant 0 : index
    %c0_19 = arith.constant 0 : index
    %37 = vector.load %arg7[%c0_18, %c0_19] : memref<1x32xf32, #tpu.memory_space<vmem>>, vector<1x32xf32>
    %38 = vector.broadcast %37 : vector<1x32xf32> to vector<16x32xf32>
    %39 = arith.addf %36, %38 : vector<16x32xf32>
    %c0_20 = arith.constant 0 : index
    %c0_21 = arith.constant 0 : index
    %40 = vector.load %arg8[%c0_20, %c0_21] : memref<16x32xf32, #tpu.memory_space<vmem>>, vector<16x32xf32>
    tpu.vector_store %arg8[%c0_20, %c0_21], %39 {strides = array<i32>} : memref<16x32xf32, #tpu.memory_space<vmem>>, vector<16x32xf32>,
    return
  }
  func.func @transform_0(%arg0: i32) -> (i32, i32) {
    %c0_i32 = arith.constant 0 : i32
    %c0_i32_0 = arith.constant 0 : i32
    return %arg0, %c0_i32 : i32, i32
  }
  func.func @transform_1(%arg0: i32) -> (i32, i32) {
    %c0_i32 = arith.constant 0 : i32
    %c0_i32_0 = arith.constant 0 : i32
    %c0_i32_1 = arith.constant 0 : i32
    return %c0_i32, %c0_i32_0 : i32, i32
  }
  func.func @transform_2(%arg0: i32) -> (i32, i32) {
    %c0_i32 = arith.constant 0 : i32
    %c0_i32_0 = arith.constant 0 : i32
    %c0_i32_1 = arith.constant 0 : i32
    return %c0_i32, %c0_i32_0 : i32, i32
  }
  func.func @transform_3(%arg0: i32) -> (i32, i32) {
    %c0_i32 = arith.constant 0 : i32
    %c0_i32_0 = arith.constant 0 : i32
    %c0_i32_1 = arith.constant 0 : i32
    return %c0_i32, %c0_i32_0 : i32, i32
  }
  func.func @transform_4(%arg0: i32) -> (i32, i32) {
    %c0_i32 = arith.constant 0 : i32
    %c0_i32_0 = arith.constant 0 : i32
    %c0_i32_1 = arith.constant 0 : i32
    return %c0_i32, %c0_i32_0 : i32, i32
  }
  func.func @transform_5(%arg0: i32) -> (i32, i32) {
    %c0_i32 = arith.constant 0 : i32
    %c0_i32_0 = arith.constant 0 : i32
    %c0_i32_1 = arith.constant 0 : i32
    return %c0_i32, %c0_i32_0 : i32, i32
  }
  func.func @transform_6(%arg0: i32) -> (i32, i32) {
    %c0_i32 = arith.constant 0 : i32
    %c0_i32_0 = arith.constant 0 : i32
    %c0_i32_1 = arith.constant 0 : i32
    return %c0_i32, %c0_i32_0 : i32, i32
  }
  func.func @transform_7(%arg0: i32) -> (i32, i32) {
    %c0_i32 = arith.constant 0 : i32
    %c0_i32_0 = arith.constant 0 : i32
    return %arg0, %c0_i32 : i32, i32
  }
}

module attributes {stable_mosaic.version = 11 : i64} {
  func.func @akt_attn_kernel(%arg0: i32, %arg1: memref<1x4x8x8xbf16, #tpu.memory_space<vmem>>, %arg2: memref<1x4x8x8xbf16, #tpu.memory_space<vmem>>, %arg3: memref<4x8x1xf32, #tpu.memory_space<vmem>>, %arg4: memref<1x4x8x8xbf16, #tpu.memory_space<vmem>>) attributes {dimension_semantics = [#tpu.dimension_semantics<parallel>], iteration_bounds = array<i64: 2>, scalar_prefetch = 0 : i64, scratch_operands = 0 : i64, tpu.core_type = #tpu.core_type<tc>, window_params = [{transform_indices = @transform_0, window_bounds = array<i64: 1, 4, 8, 8>}, {transform_indices = @transform_1, window_bounds = array<i64: 1, 4, 8, 8>}, {pipeline_mode = #tpu.pipeline_mode<synchronous>, transform_indices = @transform_2, window_bounds = array<i64: 4, 8, 1>}, {transform_indices = @transform_3, window_bounds = array<i64: 1, 4, 8, 8>}]} {
    %c0 = arith.constant 0 : index
    %c0_0 = arith.constant 0 : index
    %c0_1 = arith.constant 0 : index
    %c0_2 = arith.constant 0 : index
    %0 = vector.load %arg1[%c0, %c0_0, %c0_1, %c0_2] : memref<1x4x8x8xbf16, #tpu.memory_space<vmem>>, vector<1x4x8x8xbf16>
    %1 = vector.shape_cast %0 : vector<1x4x8x8xbf16> to vector<4x8x8xbf16>
    %c0_3 = arith.constant 0 : index
    %c0_4 = arith.constant 0 : index
    %c0_5 = arith.constant 0 : index
    %c0_6 = arith.constant 0 : index
    %2 = vector.load %arg2[%c0_3, %c0_4, %c0_5, %c0_6] : memref<1x4x8x8xbf16, #tpu.memory_space<vmem>>, vector<1x4x8x8xbf16>
    %3 = vector.shape_cast %2 : vector<1x4x8x8xbf16> to vector<4x8x8xbf16>
    %c0_7 = arith.constant 0 : index
    %c0_8 = arith.constant 0 : index
    %c0_9 = arith.constant 0 : index
    %4 = vector.load %arg3[%c0_7, %c0_8, %c0_9] : memref<4x8x1xf32, #tpu.memory_space<vmem>>, vector<4x8x1xf32>
    %5 = tpu.iota {dimensions = array<i32: 0>} : vector<8x8xi32>
    %6 = tpu.iota {dimensions = array<i32: 1>} : vector<8x8xi32>
    %c0_i32 = arith.constant 0 : i32
    %7 = vector.broadcast %c0_i32 : i32 to vector<8x8xi32>
    %8 = arith.addi %5, %7 : vector<8x8xi32>
    %9 = arith.cmpi slt, %6, %8 : vector<8x8xi32>
    %10 = arith.subi %6, %5 : vector<8x8xi32>
    %11 = math.absi %10 : vector<8x8xi32>
    %12 = arith.sitofp %11 : vector<8x8xi32> to vector<8x8xf32>
    %13 = arith.cmpi sgt, %5, %6 : vector<8x8xi32>
    %cst = arith.constant 1.000000e+00 : f32
    %cst_10 = arith.constant 0.000000e+00 : f32
    %14 = vector.broadcast %cst : f32 to vector<8x8xf32>
    %15 = vector.broadcast %cst_10 : f32 to vector<8x8xf32>
    %16 = arith.select %13, %14, %15 : vector<8x8xi1>, vector<8x8xf32>
    %17 = arith.truncf %16 : vector<8x8xf32> to vector<8x8xbf16>
    "tpu.trace_start"() <{level = 10 : i32, message = "hqd,hkd->hqk"}> : () -> ()
    %cst_11 = arith.constant dense<0.000000e+00> : vector<4x8x8xf32>
    %18 = tpu.matmul %1, %1, %cst_11 {dimension_numbers = #tpu.dot_dimension_numbers<[2], [2], [1], [1], [0, 0, 0, 1, 1, 1], [0], [0]>} : vector<4x8x8xbf16>, vector<4x8x8xbf16>, vector<4x8x8xf32> -> vector<4x8x8xf32>
    "tpu.trace_stop"() : () -> ()
    %cst_12 = arith.constant 0.353553385 : f32
    %19 = vector.broadcast %cst_12 : f32 to vector<4x8x8xf32>
    %20 = arith.mulf %18, %19 : vector<4x8x8xf32>
    %cst_13 = arith.constant -1.000000e+32 : f32
    %21 = vector.shape_cast %9 : vector<8x8xi1> to vector<1x8x8xi1>
    %22 = vector.broadcast %21 : vector<1x8x8xi1> to vector<4x8x8xi1>
    %23 = vector.broadcast %cst_13 : f32 to vector<4x8x8xf32>
    %24 = arith.select %22, %20, %23 : vector<4x8x8xi1>, vector<4x8x8xf32>
    %cst_14 = arith.constant dense<0xFF800000> : vector<4x8xf32>
    %25 = vector.multi_reduction <maximumf>, %24, %cst_14 [2] : vector<4x8x8xf32> to vector<4x8xf32>
    %26 = vector.shape_cast %25 : vector<4x8xf32> to vector<4x8x1xf32>
    %27 = vector.broadcast %26 : vector<4x8x1xf32> to vector<4x8x8xf32>
    %28 = arith.subf %24, %27 : vector<4x8x8xf32>
    %29 = math.exp %28 : vector<4x8x8xf32>
    %cst_15 = arith.constant dense<0.000000e+00> : vector<4x8xf32>
    %30 = vector.multi_reduction <add>, %29, %cst_15 [2] : vector<4x8x8xf32> to vector<4x8xf32>
    %31 = vector.shape_cast %30 : vector<4x8xf32> to vector<4x8x1xf32>
    %32 = tpu.reciprocal %31 {approx = true} : vector<4x8x1xf32> -> vector<4x8x1xf32>
    %33 = vector.broadcast %32 : vector<4x8x1xf32> to vector<4x8x8xf32>
    %34 = arith.mulf %29, %33 : vector<4x8x8xf32>
    %cst_16 = arith.constant 0.000000e+00 : f32
    %35 = vector.shape_cast %9 : vector<8x8xi1> to vector<1x8x8xi1>
    %36 = vector.broadcast %35 : vector<1x8x8xi1> to vector<4x8x8xi1>
    %37 = vector.broadcast %cst_16 : f32 to vector<4x8x8xf32>
    %38 = arith.select %36, %34, %37 : vector<4x8x8xi1>, vector<4x8x8xf32>
    %39 = vector.shape_cast %38 : vector<4x8x8xf32> to vector<32x8xf32>
    %40 = arith.truncf %39 : vector<32x8xf32> to vector<32x8xbf16>
    %cst_17 = arith.constant dense<0.000000e+00> : vector<32x8xf32>
    %41 = tpu.matmul %40, %17, %cst_17 {dimension_numbers = #tpu.dot_dimension_numbers<[1], [0], [0], [1], [0, 0, 1, 1], [], []>} : vector<32x8xbf16>, vector<8x8xbf16>, vector<32x8xf32> -> vector<32x8xf32>
    %42 = vector.shape_cast %41 : vector<32x8xf32> to vector<4x8x8xf32>
    %43 = vector.shape_cast %12 : vector<8x8xf32> to vector<1x8x8xf32>
    %44 = vector.broadcast %43 : vector<1x8x8xf32> to vector<4x8x8xf32>
    %45 = arith.mulf %42, %44 : vector<4x8x8xf32>
    %cst_18 = arith.constant 0.000000e+00 : f32
    %46 = vector.broadcast %cst_18 : f32 to vector<4x8x8xf32>
    %47 = arith.maximumf %45, %46 : vector<4x8x8xf32>
    %48 = math.sqrt %47 : vector<4x8x8xf32>
    %49 = vector.broadcast %4 : vector<4x8x1xf32> to vector<4x8x8xf32>
    %50 = arith.mulf %48, %49 : vector<4x8x8xf32>
    %51 = math.exp %50 : vector<4x8x8xf32>
    %cst_19 = arith.constant 9.99999974E-6 : f32
    %cst_20 = arith.constant 1.000000e+05 : f32
    %52 = vector.broadcast %cst_19 : f32 to vector<4x8x8xf32>
    %53 = arith.maximumf %52, %51 : vector<4x8x8xf32>
    %54 = vector.broadcast %cst_20 : f32 to vector<4x8x8xf32>
    %55 = arith.minimumf %54, %53 : vector<4x8x8xf32>
    %56 = arith.mulf %20, %55 : vector<4x8x8xf32>
    %cst_21 = arith.constant -1.000000e+32 : f32
    %57 = vector.shape_cast %9 : vector<8x8xi1> to vector<1x8x8xi1>
    %58 = vector.broadcast %57 : vector<1x8x8xi1> to vector<4x8x8xi1>
    %59 = vector.broadcast %cst_21 : f32 to vector<4x8x8xf32>
    %60 = arith.select %58, %56, %59 : vector<4x8x8xi1>, vector<4x8x8xf32>
    %cst_22 = arith.constant dense<0xFF800000> : vector<4x8xf32>
    %61 = vector.multi_reduction <maximumf>, %60, %cst_22 [2] : vector<4x8x8xf32> to vector<4x8xf32>
    %62 = vector.shape_cast %61 : vector<4x8xf32> to vector<4x8x1xf32>
    %63 = vector.broadcast %62 : vector<4x8x1xf32> to vector<4x8x8xf32>
    %64 = arith.subf %60, %63 : vector<4x8x8xf32>
    %65 = math.exp %64 : vector<4x8x8xf32>
    %cst_23 = arith.constant dense<0.000000e+00> : vector<4x8xf32>
    %66 = vector.multi_reduction <add>, %65, %cst_23 [2] : vector<4x8x8xf32> to vector<4x8xf32>
    %67 = vector.shape_cast %66 : vector<4x8xf32> to vector<4x8x1xf32>
    %68 = tpu.reciprocal %67 {approx = true} : vector<4x8x1xf32> -> vector<4x8x1xf32>
    %69 = vector.broadcast %68 : vector<4x8x1xf32> to vector<4x8x8xf32>
    %70 = arith.mulf %65, %69 : vector<4x8x8xf32>
    %71 = arith.truncf %70 : vector<4x8x8xf32> to vector<4x8x8xbf16>
    "tpu.trace_start"() <{level = 10 : i32, message = "hqk,hkd->hqd"}> : () -> ()
    %cst_24 = arith.constant dense<0.000000e+00> : vector<4x8x8xf32>
    %72 = tpu.matmul %71, %3, %cst_24 {dimension_numbers = #tpu.dot_dimension_numbers<[2], [1], [1], [2], [0, 0, 0, 1, 1, 2], [0], [0]>} : vector<4x8x8xbf16>, vector<4x8x8xbf16>, vector<4x8x8xf32> -> vector<4x8x8xf32>
    "tpu.trace_stop"() : () -> ()
    %73 = tpu.iota {dimensions = array<i32: 0>} : vector<8x8xi32>
    %c0_i32_25 = arith.constant 0 : i32
    %74 = vector.broadcast %c0_i32_25 : i32 to vector<8x8xi32>
    %75 = arith.cmpi eq, %73, %74 : vector<8x8xi32>
    %cst_26 = arith.constant 0.000000e+00 : f32
    %76 = vector.shape_cast %75 : vector<8x8xi1> to vector<1x8x8xi1>
    %77 = vector.broadcast %76 : vector<1x8x8xi1> to vector<4x8x8xi1>
    %78 = vector.broadcast %cst_26 : f32 to vector<4x8x8xf32>
    %79 = arith.select %77, %78, %72 : vector<4x8x8xi1>, vector<4x8x8xf32>
    %80 = arith.truncf %79 : vector<4x8x8xf32> to vector<4x8x8xbf16>
    %c0_27 = arith.constant 0 : index
    %c0_28 = arith.constant 0 : index
    %c0_29 = arith.constant 0 : index
    %c0_30 = arith.constant 0 : index
    %81 = vector.load %arg4[%c0_27, %c0_28, %c0_29, %c0_30] : memref<1x4x8x8xbf16, #tpu.memory_space<vmem>>, vector<1x4x8x8xbf16>
    %82 = vector.shape_cast %81 : vector<1x4x8x8xbf16> to vector<4x8x8xbf16>
    %83 = vector.shape_cast %80 : vector<4x8x8xbf16> to vector<1x4x8x8xbf16>
    tpu.vector_store %arg4[%c0_27, %c0_28, %c0_29, %c0_30], %83 {strides = array<i32>} : memref<1x4x8x8xbf16, #tpu.memory_space<vmem>>, vector<1x4x8x8xbf16>,
    return
  }
  func.func @transform_0(%arg0: i32) -> (i32, i32, i32, i32) {
    %c0_i32 = arith.constant 0 : i32
    %c0_i32_0 = arith.constant 0 : i32
    %c0_i32_1 = arith.constant 0 : i32
    %c0_i32_2 = arith.constant 0 : i32
    return %arg0, %c0_i32, %c0_i32_0, %c0_i32_1 : i32, i32, i32, i32
  }
  func.func @transform_1(%arg0: i32) -> (i32, i32, i32, i32) {
    %c0_i32 = arith.constant 0 : i32
    %c0_i32_0 = arith.constant 0 : i32
    %c0_i32_1 = arith.constant 0 : i32
    %c0_i32_2 = arith.constant 0 : i32
    return %arg0, %c0_i32, %c0_i32_0, %c0_i32_1 : i32, i32, i32, i32
  }
  func.func @transform_2(%arg0: i32) -> (i32, i32, i32) {
    %c0_i32 = arith.constant 0 : i32
    %c0_i32_0 = arith.constant 0 : i32
    %c0_i32_1 = arith.constant 0 : i32
    %c0_i32_2 = arith.constant 0 : i32
    return %c0_i32, %c0_i32_0, %c0_i32_1 : i32, i32, i32
  }
  func.func @transform_3(%arg0: i32) -> (i32, i32, i32, i32) {
    %c0_i32 = arith.constant 0 : i32
    %c0_i32_0 = arith.constant 0 : i32
    %c0_i32_1 = arith.constant 0 : i32
    %c0_i32_2 = arith.constant 0 : i32
    return %arg0, %c0_i32, %c0_i32_0, %c0_i32_1 : i32, i32, i32, i32
  }
}

module attributes {stable_mosaic.version = 11 : i64} {
  func.func @ffn_add_ln_kernel(%arg0: i32, %arg1: memref<16x32xf32, #tpu.memory_space<vmem>>, %arg2: memref<32x64xbf16, #tpu.memory_space<vmem>>, %arg3: memref<1x64xf32, #tpu.memory_space<vmem>>, %arg4: memref<64x32xbf16, #tpu.memory_space<vmem>>, %arg5: memref<1x32xf32, #tpu.memory_space<vmem>>, %arg6: memref<1x32xf32, #tpu.memory_space<vmem>>, %arg7: memref<1x32xf32, #tpu.memory_space<vmem>>, %arg8: memref<16x32xf32, #tpu.memory_space<vmem>>) attributes {dimension_semantics = [#tpu.dimension_semantics<parallel>], iteration_bounds = array<i64: 1>, scalar_prefetch = 0 : i64, scratch_operands = 0 : i64, tpu.core_type = #tpu.core_type<tc>, window_params = [{transform_indices = @transform_0, window_bounds = array<i64: 16, 32>}, {pipeline_mode = #tpu.pipeline_mode<synchronous>, transform_indices = @transform_1, window_bounds = array<i64: 32, 64>}, {pipeline_mode = #tpu.pipeline_mode<synchronous>, transform_indices = @transform_2, window_bounds = array<i64: 1, 64>}, {pipeline_mode = #tpu.pipeline_mode<synchronous>, transform_indices = @transform_3, window_bounds = array<i64: 64, 32>}, {pipeline_mode = #tpu.pipeline_mode<synchronous>, transform_indices = @transform_4, window_bounds = array<i64: 1, 32>}, {pipeline_mode = #tpu.pipeline_mode<synchronous>, transform_indices = @transform_5, window_bounds = array<i64: 1, 32>}, {pipeline_mode = #tpu.pipeline_mode<synchronous>, transform_indices = @transform_6, window_bounds = array<i64: 1, 32>}, {transform_indices = @transform_7, window_bounds = array<i64: 16, 32>}]} {
    %c0 = arith.constant 0 : index
    %c0_0 = arith.constant 0 : index
    %0 = vector.load %arg1[%c0, %c0_0] : memref<16x32xf32, #tpu.memory_space<vmem>>, vector<16x32xf32>
    %1 = arith.truncf %0 : vector<16x32xf32> to vector<16x32xbf16>
    %c0_1 = arith.constant 0 : index
    %c0_2 = arith.constant 0 : index
    %2 = vector.load %arg2[%c0_1, %c0_2] : memref<32x64xbf16, #tpu.memory_space<vmem>>, vector<32x64xbf16>
    %cst = arith.constant dense<0.000000e+00> : vector<16x64xf32>
    %3 = tpu.matmul %1, %2, %cst {dimension_numbers = #tpu.dot_dimension_numbers<[1], [0], [0], [1], [0, 0, 1, 1], [], []>} : vector<16x32xbf16>, vector<32x64xbf16>, vector<16x64xf32> -> vector<16x64xf32>
    %c0_3 = arith.constant 0 : index
    %c0_4 = arith.constant 0 : index
    %4 = vector.load %arg3[%c0_3, %c0_4] : memref<1x64xf32, #tpu.memory_space<vmem>>, vector<1x64xf32>
    %5 = vector.broadcast %4 : vector<1x64xf32> to vector<16x64xf32>
    %6 = arith.addf %3, %5 : vector<16x64xf32>
    %cst_5 = arith.constant 0.000000e+00 : f32
    %7 = vector.broadcast %cst_5 : f32 to vector<16x64xf32>
    %8 = arith.maximumf %6, %7 : vector<16x64xf32>
    %9 = arith.truncf %8 : vector<16x64xf32> to vector<16x64xbf16>
    %c0_6 = arith.constant 0 : index
    %c0_7 = arith.constant 0 : index
    %10 = vector.load %arg4[%c0_6, %c0_7] : memref<64x32xbf16, #tpu.memory_space<vmem>>, vector<64x32xbf16>
    %cst_8 = arith.constant dense<0.000000e+00> : vector<16x32xf32>
    %11 = tpu.matmul %9, %10, %cst_8 {dimension_numbers = #tpu.dot_dimension_numbers<[1], [0], [0], [1], [0, 0, 1, 1], [], []>} : vector<16x64xbf16>, vector<64x32xbf16>, vector<16x32xf32> -> vector<16x32xf32>
    %c0_9 = arith.constant 0 : index
    %c0_10 = arith.constant 0 : index
    %12 = vector.load %arg5[%c0_9, %c0_10] : memref<1x32xf32, #tpu.memory_space<vmem>>, vector<1x32xf32>
    %13 = vector.broadcast %12 : vector<1x32xf32> to vector<16x32xf32>
    %14 = arith.addf %11, %13 : vector<16x32xf32>
    %15 = arith.addf %14, %0 : vector<16x32xf32>
    %cst_11 = arith.constant dense<0.000000e+00> : vector<16xf32>
    %16 = vector.multi_reduction <add>, %15, %cst_11 [1] : vector<16x32xf32> to vector<16xf32>
    %17 = vector.shape_cast %16 : vector<16xf32> to vector<16x1xf32>
    %cst_12 = arith.constant 3.200000e+01 : f32
    %18 = vector.broadcast %cst_12 : f32 to vector<16x1xf32>
    %19 = arith.divf %17, %18 : vector<16x1xf32>
    %20 = vector.broadcast %19 : vector<16x1xf32> to vector<16x32xf32>
    %21 = arith.subf %15, %20 : vector<16x32xf32>
    %22 = arith.mulf %21, %21 : vector<16x32xf32>
    %cst_13 = arith.constant dense<0.000000e+00> : vector<16xf32>
    %23 = vector.multi_reduction <add>, %22, %cst_13 [1] : vector<16x32xf32> to vector<16xf32>
    %24 = vector.shape_cast %23 : vector<16xf32> to vector<16x1xf32>
    %cst_14 = arith.constant 3.200000e+01 : f32
    %25 = vector.broadcast %cst_14 : f32 to vector<16x1xf32>
    %26 = arith.divf %24, %25 : vector<16x1xf32>
    %27 = vector.broadcast %19 : vector<16x1xf32> to vector<16x32xf32>
    %28 = arith.subf %15, %27 : vector<16x32xf32>
    %cst_15 = arith.constant 9.99999974E-6 : f32
    %29 = vector.broadcast %cst_15 : f32 to vector<16x1xf32>
    %30 = arith.addf %26, %29 : vector<16x1xf32>
    %31 = math.rsqrt %30 : vector<16x1xf32>
    %32 = vector.broadcast %31 : vector<16x1xf32> to vector<16x32xf32>
    %33 = arith.mulf %28, %32 : vector<16x32xf32>
    %c0_16 = arith.constant 0 : index
    %c0_17 = arith.constant 0 : index
    %34 = vector.load %arg6[%c0_16, %c0_17] : memref<1x32xf32, #tpu.memory_space<vmem>>, vector<1x32xf32>
    %35 = vector.broadcast %34 : vector<1x32xf32> to vector<16x32xf32>
    %36 = arith.mulf %33, %35 : vector<16x32xf32>
    %c0_18 = arith.constant 0 : index
    %c0_19 = arith.constant 0 : index
    %37 = vector.load %arg7[%c0_18, %c0_19] : memref<1x32xf32, #tpu.memory_space<vmem>>, vector<1x32xf32>
    %38 = vector.broadcast %37 : vector<1x32xf32> to vector<16x32xf32>
    %39 = arith.addf %36, %38 : vector<16x32xf32>
    %c0_20 = arith.constant 0 : index
    %c0_21 = arith.constant 0 : index
    %40 = vector.load %arg8[%c0_20, %c0_21] : memref<16x32xf32, #tpu.memory_space<vmem>>, vector<16x32xf32>
    tpu.vector_store %arg8[%c0_20, %c0_21], %39 {strides = array<i32>} : memref<16x32xf32, #tpu.memory_space<vmem>>, vector<16x32xf32>,
    return
  }
  func.func @transform_0(%arg0: i32) -> (i32, i32) {
    %c0_i32 = arith.constant 0 : i32
    %c0_i32_0 = arith.constant 0 : i32
    return %arg0, %c0_i32 : i32, i32
  }
  func.func @transform_1(%arg0: i32) -> (i32, i32) {
    %c0_i32 = arith.constant 0 : i32
    %c0_i32_0 = arith.constant 0 : i32
    %c0_i32_1 = arith.constant 0 : i32
    return %c0_i32, %c0_i32_0 : i32, i32
  }
  func.func @transform_2(%arg0: i32) -> (i32, i32) {
    %c0_i32 = arith.constant 0 : i32
    %c0_i32_0 = arith.constant 0 : i32
    %c0_i32_1 = arith.constant 0 : i32
    return %c0_i32, %c0_i32_0 : i32, i32
  }
  func.func @transform_3(%arg0: i32) -> (i32, i32) {
    %c0_i32 = arith.constant 0 : i32
    %c0_i32_0 = arith.constant 0 : i32
    %c0_i32_1 = arith.constant 0 : i32
    return %c0_i32, %c0_i32_0 : i32, i32
  }
  func.func @transform_4(%arg0: i32) -> (i32, i32) {
    %c0_i32 = arith.constant 0 : i32
    %c0_i32_0 = arith.constant 0 : i32
    %c0_i32_1 = arith.constant 0 : i32
    return %c0_i32, %c0_i32_0 : i32, i32
  }
  func.func @transform_5(%arg0: i32) -> (i32, i32) {
    %c0_i32 = arith.constant 0 : i32
    %c0_i32_0 = arith.constant 0 : i32
    %c0_i32_1 = arith.constant 0 : i32
    return %c0_i32, %c0_i32_0 : i32, i32
  }
  func.func @transform_6(%arg0: i32) -> (i32, i32) {
    %c0_i32 = arith.constant 0 : i32
    %c0_i32_0 = arith.constant 0 : i32
    %c0_i32_1 = arith.constant 0 : i32
    return %c0_i32, %c0_i32_0 : i32, i32
  }
  func.func @transform_7(%arg0: i32) -> (i32, i32) {
    %c0_i32 = arith.constant 0 : i32
    %c0_i32_0 = arith.constant 0 : i32
    return %arg0, %c0_i32 : i32, i32
  }
}

</mosaic_0001>

<llo_original>
// kernel: architecture_forward.12
$region0: #{architecture_forward.12}
  #allocation0 [shape = 'u32[]', space=smem, size = 0x4, offset = 0x4, fixed_abs, tag = 'smem constant byte address 0x4 - core index']
  #allocation1 [shape = 'u32[144,128]{1,0:T(1,128)}', space=vmem, size = 0x12000, scoped, tag = 'internal scratch']
  %s0 = inlined_call_operand.vmem [shape: f32[16,32], index: 0, kind: input, shape index: {}]
  %s1 = inlined_call_operand.vmem [shape: bf16[32,64], index: 1, kind: input, shape index: {}]
  %s2 = inlined_call_operand.vmem [shape: f32[1,64], index: 2, kind: input, shape index: {}]
  %s3 = inlined_call_operand.vmem [shape: bf16[16,64], index: 3, kind: output, shape index: {}]
  %s4 = sld [smem:[#allocation0]]
  $region22: #{architecture_forward.12} parent=0
    _
  %s6 = ssub.s32 1, %s4
  %s7 = scalar_select 0, %s6, %s4
  // Predicated region
  $region2: #{architecture_forward.12} parent=0 // pred_check
    _
  $region3: #{architecture_forward.12} parent=0 // pred_check_branch
    %9 = sbr.rel (0) target = $region5
  $region4: #{architecture_forward.12} parent=0 // pred_region
    _
  $region5: #{architecture_forward.12} parent=0 // pred_fallthru
    _
  // Predicated region
  $region6: #{architecture_forward.12} parent=0 // pred_check
    _
  $region7: #{architecture_forward.12} parent=0 // pred_check_branch
    %11 = sbr.rel (0) target = $region9
  $region8: #{architecture_forward.12} parent=0 // pred_region
    _
  $region9: #{architecture_forward.12} parent=0 // pred_fallthru
    _
  // Predicated region
  $region10: #{architecture_forward.12} parent=0 // pred_check
    _
  $region11: #{architecture_forward.12} parent=0 // pred_check_branch
    %13 = sbr.rel (0) target = $region13
  $region12: #{architecture_forward.12} parent=0 // pred_region
    _
  $region13: #{architecture_forward.12} parent=0 // pred_fallthru
    _
  %v15 = vld [vmem:[%s0] sm:$0xff]
  %v16 = vld [vmem:[%s0 + $0x8] sm:$0xff]
  %v17 = vpack.c.bf16 %v16, %v15
  %v18 = vld [vmem:[%s1] sm:$0xf]
  %v19 = vld [vmem:[%s1 + $0x4] sm:$0xf]
  %v20 = vld [vmem:[%s1 + $0x8] sm:$0xf]
  %v21 = vld [vmem:[%s1 + $0xc] sm:$0xf]
  %v22 = vld [vmem:[%s2] sm:$0x1]
  %v24 = vlaneseq
  %v25 = vshrl.u32 %v24, 7
  %v26 = vsub.s32 0, %v25
  %v27 = vrot.slane %v22, %v26
  %v33 = vunpack.c.l.b16 %v18
  %v34 = vunpack.c.l.b16 %v19
  %v35 = vunpack.c.l.b16 %v20
  %v36 = vunpack.c.l.b16 %v21
  %v37 = vpack.c.b16 %v34, %v33
  %v38 = vpack.c.b16 %v36, %v35
  %vm41 = vcmask 261120
  %v43 = vsel %vm41, %v17, 0
  %45 = vmatprep.subr.bf16.mxu0 0
  %46 = vmatpush1.bf16.msra.mxu0 0
  %47 = vmatprep.subr.bf16.mxu0 0
  %48 = vmatpush1.bf16.msra.mxu0 0
  %49 = vmatprep.subr.bf16.mxu0 0
  %50 = vmatpush1.bf16.msra.mxu0 0
  %51 = vmatprep.subr.bf16.mxu0 0
  %52 = vmatpush1.bf16.msra.mxu0 0
  %53 = vmatprep.subr.bf16.mxu0 0
  %54 = vmatpush1.bf16.msra.mxu0 0
  %55 = vmatprep.subr.bf16.mxu0 0
  %56 = vmatpush1.bf16.msra.mxu0 0
  %57 = vmatprep.subr.bf16.mxu0 0
  %58 = vmatpush1.bf16.msra.mxu0 %v38
  %59 = vmatprep.subr.bf16.mxu0 0
  %60 = vmatpush1.bf16.msra.mxu0 %v37
  %61 = vmatprep.subr.bf16.mxu0 0
  %62 = vmatpush2.bf16.msra.mxu0 0
  %63 = vmatprep.subr.bf16.mxu0 0
  %64 = vmatpush2.bf16.msra.mxu0 0
  %65 = vmatprep.subr.bf16.mxu0 0
  %66 = vmatpush2.bf16.msra.mxu0 0
  %67 = vmatprep.subr.bf16.mxu0 0
  %68 = vmatpush2.bf16.msra.mxu0 0
  %69 = vmatprep.subr.bf16.mxu0 0
  %70 = vmatpush2.bf16.msra.mxu0 0
  %71 = vmatprep.subr.bf16.mxu0 0
  %72 = vmatpush2.bf16.msra.mxu0 0
  %73 = vmatprep.subr.bf16.mxu0 0
  %74 = vmatpush2.bf16.msra.mxu0 0
  %75 = vmatprep.subr.bf16.mxu0 0
  %76 = vmatpush2.bf16.msra.mxu0 0
  %77 = vmatprep.mubr.bf16.mxu0 0
  %78 = vmatmul.mubr.bf16.gmra.mxu0 %v43
  %v79 = vpop.f32.mrf.mxu0
  %v80 = vadd.f32 %v27, %v79
  %v81 = vpop.f32.mrf.mxu0
  %v82 = vpop.f32.mrf.mxu0
  %v83 = vadd.f32 %v27, %v82
  %v84 = vpop.f32.mrf.mxu0
  %85 = vdwg.mxu0
  %v86 = vpack.c.bf16 %v83, %v80
  %v88 = vunpack.c.l.b16 %v86
  %v89 = vunpack.c.h.b16 %v86
  %v90 = vpack.c.b16 %v88, %v88
  %v91 = vpack.c.b16 %v89, %v89
  %vm94 = vcmask 519168
  %95 = vst.msk [vmem:[%s3] sm:$0xf] %vm94, %v90
  %96 = vst.msk [vmem:[%s3 + $0x4] sm:$0xf] %vm94, %v91
  // Predicated region
  $region14: #{architecture_forward.12} parent=0 // pred_check
    _
  $region15: #{architecture_forward.12} parent=0 // pred_check_branch
    %98 = sbr.rel (0) target = $region17
  $region16: #{architecture_forward.12} parent=0 // pred_region
    _
  $region17: #{architecture_forward.12} parent=0 // pred_fallthru
    _
  // Predicated region
  $region18: #{architecture_forward.12} parent=0 // pred_check
    _
  $region19: #{architecture_forward.12} parent=0 // pred_check_branch
    %100 = sbr.rel (0) target = $region21
  $region20: #{architecture_forward.12} parent=0 // pred_region
    _
  $region21: #{architecture_forward.12} parent=0 // pred_fallthru
    _

// kernel: architecture_forward.20
$region0: #{architecture_forward.20}
  #allocation0 [shape = 'u32[]', space=smem, size = 0x4, offset = 0x4, fixed_abs, tag = 'smem constant byte address 0x4 - core index']
  #allocation1 [shape = 'u32[144,128]{1,0:T(1,128)}', space=vmem, size = 0x12000, scoped, tag = 'internal scratch']
  %s0 = inlined_call_operand.vmem [shape: f32[16,32], index: 0, kind: input, shape index: {}]
  %s1 = inlined_call_operand.vmem [shape: bf16[32,32], index: 1, kind: input, shape index: {}]
  %s2 = inlined_call_operand.vmem [shape: f32[1,32], index: 2, kind: input, shape index: {}]
  %s3 = inlined_call_operand.vmem [shape: bf16[16,32], index: 3, kind: output, shape index: {}]
  %s4 = sld [smem:[#allocation0]]
  $region22: #{architecture_forward.20} parent=0
    _
  %s6 = ssub.s32 1, %s4
  %s7 = scalar_select 0, %s6, %s4
  // Predicated region
  $region2: #{architecture_forward.20} parent=0 // pred_check
    _
  $region3: #{architecture_forward.20} parent=0 // pred_check_branch
    %9 = sbr.rel (0) target = $region5
  $region4: #{architecture_forward.20} parent=0 // pred_region
    _
  $region5: #{architecture_forward.20} parent=0 // pred_fallthru
    _
  // Predicated region
  $region6: #{architecture_forward.20} parent=0 // pred_check
    _
  $region7: #{architecture_forward.20} parent=0 // pred_check_branch
    %11 = sbr.rel (0) target = $region9
  $region8: #{architecture_forward.20} parent=0 // pred_region
    _
  $region9: #{architecture_forward.20} parent=0 // pred_fallthru
    _
  // Predicated region
  $region10: #{architecture_forward.20} parent=0 // pred_check
    _
  $region11: #{architecture_forward.20} parent=0 // pred_check_branch
    %13 = sbr.rel (0) target = $region13
  $region12: #{architecture_forward.20} parent=0 // pred_region
    _
  $region13: #{architecture_forward.20} parent=0 // pred_fallthru
    _
  %v15 = vld [vmem:[%s0] sm:$0xff]
  %v16 = vld [vmem:[%s0 + $0x8] sm:$0xff]
  %v17 = vpack.c.bf16 %v16, %v15
  %v18 = vld [vmem:[%s1] sm:$0xf]
  %v19 = vld [vmem:[%s1 + $0x4] sm:$0xf]
  %v20 = vld [vmem:[%s1 + $0x8] sm:$0xf]
  %v21 = vld [vmem:[%s1 + $0xc] sm:$0xf]
  %v22 = vld [vmem:[%s2] sm:$0x1]
  %v24 = vlaneseq
  %v25 = vshrl.u32 %v24, 7
  %v26 = vsub.s32 0, %v25
  %v27 = vrot.slane %v22, %v26
  %v33 = vunpack.c.l.b16 %v18
  %v34 = vunpack.c.l.b16 %v19
  %v35 = vunpack.c.l.b16 %v20
  %v36 = vunpack.c.l.b16 %v21
  %v37 = vpack.c.b16 %v34, %v33
  %v38 = vpack.c.b16 %v36, %v35
  %vm41 = vcmask 261120
  %v43 = vsel %vm41, %v17, 0
  %45 = vmatprep.subr.bf16.mxu0 0
  %46 = vmatpush1.bf16.msra.mxu0 0
  %47 = vmatprep.subr.bf16.mxu0 0
  %48 = vmatpush1.bf16.msra.mxu0 0
  %49 = vmatprep.subr.bf16.mxu0 0
  %50 = vmatpush1.bf16.msra.mxu0 0
  %51 = vmatprep.subr.bf16.mxu0 0
  %52 = vmatpush1.bf16.msra.mxu0 0
  %53 = vmatprep.subr.bf16.mxu0 0
  %54 = vmatpush1.bf16.msra.mxu0 0
  %55 = vmatprep.subr.bf16.mxu0 0
  %56 = vmatpush1.bf16.msra.mxu0 0
  %57 = vmatprep.subr.bf16.mxu0 0
  %58 = vmatpush1.bf16.msra.mxu0 %v38
  %59 = vmatprep.subr.bf16.mxu0 0
  %60 = vmatpush1.bf16.msra.mxu0 %v37
  %61 = vmatprep.subr.bf16.mxu0 0
  %62 = vmatpush2.bf16.msra.mxu0 0
  %63 = vmatprep.subr.bf16.mxu0 0
  %64 = vmatpush2.bf16.msra.mxu0 0
  %65 = vmatprep.subr.bf16.mxu0 0
  %66 = vmatpush2.bf16.msra.mxu0 0
  %67 = vmatprep.subr.bf16.mxu0 0
  %68 = vmatpush2.bf16.msra.mxu0 0
  %69 = vmatprep.subr.bf16.mxu0 0
  %70 = vmatpush2.bf16.msra.mxu0 0
  %71 = vmatprep.subr.bf16.mxu0 0
  %72 = vmatpush2.bf16.msra.mxu0 0
  %73 = vmatprep.subr.bf16.mxu0 0
  %74 = vmatpush2.bf16.msra.mxu0 0
  %75 = vmatprep.subr.bf16.mxu0 0
  %76 = vmatpush2.bf16.msra.mxu0 0
  %77 = vmatprep.mubr.bf16.mxu0 0
  %78 = vmatmul.mubr.bf16.gmra.mxu0 %v43
  %v79 = vpop.f32.mrf.mxu0
  %v80 = vadd.f32 %v27, %v79
  %v81 = vpop.f32.mrf.mxu0
  %v82 = vpop.f32.mrf.mxu0
  %v83 = vadd.f32 %v27, %v82
  %v84 = vpop.f32.mrf.mxu0
  %85 = vdwg.mxu0
  %v86 = vpack.c.bf16 %v83, %v80
  %v88 = vunpack.c.l.b16 %v86
  %v89 = vunpack.c.h.b16 %v86
  %v90 = vpack.c.b16 %v88, %v88
  %v91 = vpack.c.b16 %v89, %v89
  %vm94 = vcmask 257024
  %95 = vst.msk [vmem:[%s3] sm:$0xf] %vm94, %v90
  %96 = vst.msk [vmem:[%s3 + $0x4] sm:$0xf] %vm94, %v91
  // Predicated region
  $region14: #{architecture_forward.20} parent=0 // pred_check
    _
  $region15: #{architecture_forward.20} parent=0 // pred_check_branch
    %98 = sbr.rel (0) target = $region17
  $region16: #{architecture_forward.20} parent=0 // pred_region
    _
  $region17: #{architecture_forward.20} parent=0 // pred_fallthru
    _
  // Predicated region
  $region18: #{architecture_forward.20} parent=0 // pred_check
    _
  $region19: #{architecture_forward.20} parent=0 // pred_check_branch
    %100 = sbr.rel (0) target = $region21
  $region20: #{architecture_forward.20} parent=0 // pred_region
    _
  $region21: #{architecture_forward.20} parent=0 // pred_fallthru
    _

// kernel: architecture_forward.14
$region0: #{architecture_forward.14}
  #allocation0 [shape = 'u32[]', space=smem, size = 0x4, offset = 0x4, fixed_abs, tag = 'smem constant byte address 0x4 - core index']
  #allocation1 [shape = 'u32[144,128]{1,0:T(1,128)}', space=vmem, size = 0x12000, scoped, tag = 'internal scratch']
  %s0 = inlined_call_operand.vmem [shape: bf16[16,32], index: 0, kind: input, shape index: {}]
  %s1 = inlined_call_operand.vmem [shape: bf16[32,32], index: 1, kind: input, shape index: {}]
  %s2 = inlined_call_operand.vmem [shape: f32[1,32], index: 2, kind: input, shape index: {}]
  %s3 = inlined_call_operand.vmem [shape: f32[16,32], index: 3, kind: input, shape index: {}]
  %s4 = inlined_call_operand.vmem [shape: f32[1,32], index: 4, kind: input, shape index: {}]
  %s5 = inlined_call_operand.vmem [shape: f32[1,32], index: 5, kind: input, shape index: {}]
  %s6 = inlined_call_operand.vmem [shape: f32[16,32], index: 6, kind: output, shape index: {}]
  %s7 = sld [smem:[#allocation0]]
  $region34: #{architecture_forward.14} parent=0
    _
  %s9 = ssub.s32 1, %s7
  %s10 = scalar_select 0, %s9, %s7
  // Predicated region
  $region2: #{architecture_forward.14} parent=0 // pred_check
    _
  $region3: #{architecture_forward.14} parent=0 // pred_check_branch
    %12 = sbr.rel (0) target = $region5
  $region4: #{architecture_forward.14} parent=0 // pred_region
    _
  $region5: #{architecture_forward.14} parent=0 // pred_fallthru
    _
  // Predicated region
  $region6: #{architecture_forward.14} parent=0 // pred_check
    _
  $region7: #{architecture_forward.14} parent=0 // pred_check_branch
    %14 = sbr.rel (0) target = $region9
  $region8: #{architecture_forward.14} parent=0 // pred_region
    _
  $region9: #{architecture_forward.14} parent=0 // pred_fallthru
    _
  // Predicated region
  $region10: #{architecture_forward.14} parent=0 // pred_check
    _
  $region11: #{architecture_forward.14} parent=0 // pred_check_branch
    %16 = sbr.rel (0) target = $region13
  $region12: #{architecture_forward.14} parent=0 // pred_region
    _
  $region13: #{architecture_forward.14} parent=0 // pred_fallthru
    _
  // Predicated region
  $region14: #{architecture_forward.14} parent=0 // pred_check
    _
  $region15: #{architecture_forward.14} parent=0 // pred_check_branch
    %18 = sbr.rel (0) target = $region17
  $region16: #{architecture_forward.14} parent=0 // pred_region
    _
  $region17: #{architecture_forward.14} parent=0 // pred_fallthru
    _
  // Predicated region
  $region18: #{architecture_forward.14} parent=0 // pred_check
    _
  $region19: #{architecture_forward.14} parent=0 // pred_check_branch
    %20 = sbr.rel (0) target = $region21
  $region20: #{architecture_forward.14} parent=0 // pred_region
    _
  $region21: #{architecture_forward.14} parent=0 // pred_fallthru
    _
  // Predicated region
  $region22: #{architecture_forward.14} parent=0 // pred_check
    _
  $region23: #{architecture_forward.14} parent=0 // pred_check_branch
    %22 = sbr.rel (0) target = $region25
  $region24: #{architecture_forward.14} parent=0 // pred_region
    _
  $region25: #{architecture_forward.14} parent=0 // pred_fallthru
    _
  %v24 = vld [vmem:[%s0] sm:$0xf]
  %v25 = vld [vmem:[%s0 + $0x4] sm:$0xf]
  %v26 = vld [vmem:[%s1] sm:$0xf]
  %v27 = vld [vmem:[%s1 + $0x4] sm:$0xf]
  %v28 = vld [vmem:[%s1 + $0x8] sm:$0xf]
  %v29 = vld [vmem:[%s1 + $0xc] sm:$0xf]
  %v30 = vld [vmem:[%s2] sm:$0x1]
  %v32 = vlaneseq
  %v33 = vshrl.u32 %v32, 7
  %v34 = vsub.s32 0, %v33
  %v35 = vrot.slane %v30, %v34
  %v39 = vunpack.c.l.b16 %v24
  %v40 = vunpack.c.l.b16 %v25
  %v41 = vpack.c.b16 %v40, %v39
  %v46 = vunpack.c.l.b16 %v26
  %v47 = vunpack.c.l.b16 %v27
  %v48 = vunpack.c.l.b16 %v28
  %v49 = vunpack.c.l.b16 %v29
  %v50 = vpack.c.b16 %v47, %v46
  %v51 = vpack.c.b16 %v49, %v48
  %vm54 = vcmask 261120
  %v56 = vsel %vm54, %v41, 0
  %58 = vmatprep.subr.bf16.mxu0 0
  %59 = vmatpush1.bf16.msra.mxu0 0
  %60 = vmatprep.subr.bf16.mxu0 0
  %61 = vmatpush1.bf16.msra.mxu0 0
  %62 = vmatprep.subr.bf16.mxu0 0
  %63 = vmatpush1.bf16.msra.mxu0 0
  %64 = vmatprep.subr.bf16.mxu0 0
  %65 = vmatpush1.bf16.msra.mxu0 0
  %66 = vmatprep.subr.bf16.mxu0 0
  %67 = vmatpush1.bf16.msra.mxu0 0
  %68 = vmatprep.subr.bf16.mxu0 0
  %69 = vmatpush1.bf16.msra.mxu0 0
  %70 = vmatprep.subr.bf16.mxu0 0
  %71 = vmatpush1.bf16.msra.mxu0 %v51
  %72 = vmatprep.subr.bf16.mxu0 0
  %73 = vmatpush1.bf16.msra.mxu0 %v50
  %74 = vmatprep.subr.bf16.mxu0 0
  %75 = vmatpush2.bf16.msra.mxu0 0
  %76 = vmatprep.subr.bf16.mxu0 0
  %77 = vmatpush2.bf16.msra.mxu0 0
  %78 = vmatprep.subr.bf16.mxu0 0
  %79 = vmatpush2.bf16.msra.mxu0 0
  %80 = vmatprep.subr.bf16.mxu0 0
  %81 = vmatpush2.bf16.msra.mxu0 0
  %82 = vmatprep.subr.bf16.mxu0 0
  %83 = vmatpush2.bf16.msra.mxu0 0
  %84 = vmatprep.subr.bf16.mxu0 0
  %85 = vmatpush2.bf16.msra.mxu0 0
  %86 = vmatprep.subr.bf16.mxu0 0
  %87 = vmatpush2.bf16.msra.mxu0 0
  %88 = vmatprep.subr.bf16.mxu0 0
  %89 = vmatpush2.bf16.msra.mxu0 0
  %90 = vmatprep.mubr.bf16.mxu0 0
  %91 = vmatmul.mubr.bf16.gmra.mxu0 %v56
  %v92 = vpop.f32.mrf.mxu0
  %v93 = vadd.f32 %v35, %v92
  %v94 = vpop.f32.mrf.mxu0
  %v95 = vpop.f32.mrf.mxu0
  %v96 = vadd.f32 %v35, %v95
  %v97 = vpop.f32.mrf.mxu0
  %98 = vdwg.mxu0
  %v99 = vld [vmem:[%s3] sm:$0xff]
  %v100 = vld [vmem:[%s3 + $0x8] sm:$0xff]
  %v101 = vadd.f32 %v93, %v99
  %v102 = vadd.f32 %v96, %v100
  %v103 = vsel %vm54, %v101, 0.0
  %104 = vadd.xlane.f32.xlu0 %v103
  %v105 = vpop.xlane.xlu0 %104
  %v106 = vsel %vm54, %v102, 0.0
  %107 = vadd.xlane.f32.xlu0 %v106
  %v108 = vpop.xlane.xlu0 %107
  %v109 = vrcp.pop 32.0
  %v110 = vmul.f32 %v105, %v109
  %v111 = vmul.f32 %v108, %v109
  %v112 = vsub.f32 %v101, %v110
  %v113 = vsub.f32 %v102, %v111
  %v114 = vmul.f32 %v112, %v112
  %v115 = vmul.f32 %v113, %v113
  %v116 = vsel %vm54, %v114, 0.0
  %117 = vadd.xlane.f32.xlu0 %v116
  %v118 = vpop.xlane.xlu0 %117
  %v119 = vsel %vm54, %v115, 0.0
  %120 = vadd.xlane.f32.xlu0 %v119
  %v121 = vpop.xlane.xlu0 %120
  %v122 = vmul.f32 %v118, %v109
  %v123 = vmul.f32 %v121, %v109
  %v124 = vadd.f32 %v122, 1e-05
  %v125 = vadd.f32 %v123, 1e-05
  %v126 = vrsqrt.pop %v124
  %v127 = vrsqrt.pop %v125
  %v128 = vmul.f32 %v112, %v126
  %v129 = vmul.f32 %v113, %v127
  %v130 = vld [vmem:[%s4] sm:$0x1]
  %v132 = vlaneseq
  %v133 = vshrl.u32 %v132, 7
  %v134 = vsub.s32 0, %v133
  %v135 = vrot.slane %v130, %v134
  %v137 = vmul.f32 %v128, %v135
  %v138 = vmul.f32 %v129, %v135
  %v139 = vld [vmem:[%s5] sm:$0x1]
  %v141 = vlaneseq
  %v142 = vshrl.u32 %v141, 7
  %v143 = vsub.s32 0, %v142
  %v144 = vrot.slane %v139, %v143
  %v146 = vadd.f32 %v137, %v144
  %v147 = vadd.f32 %v138, %v144
  %148 = vst.msk [vmem:[%s6] sm:$0xff] %vm54, %v146
  %149 = vst.msk [vmem:[%s6 + $0x8] sm:$0xff] %vm54, %v147
  // Predicated region
  $region26: #{architecture_forward.14} parent=0 // pred_check
    _
  $region27: #{architecture_forward.14} parent=0 // pred_check_branch
    %151 = sbr.rel (0) target = $region29
  $region28: #{architecture_forward.14} parent=0 // pred_region
    _
  $region29: #{architecture_forward.14} parent=0 // pred_fallthru
    _
  // Predicated region
  $region30: #{architecture_forward.14} parent=0 // pred_check
    _
  $region31: #{architecture_forward.14} parent=0 // pred_check_branch
    %153 = sbr.rel (0) target = $region33
  $region32: #{architecture_forward.14} parent=0 // pred_region
    _
  $region33: #{architecture_forward.14} parent=0 // pred_fallthru
    _

// kernel: architecture_forward.15
$region0: #{architecture_forward.15}
  #allocation0 [shape = 'u32[]', space=smem, size = 0x4, offset = 0x4, fixed_abs, tag = 'smem constant byte address 0x4 - core index']
  #allocation1 [shape = 'u32[144,128]{1,0:T(1,128)}', space=vmem, size = 0x12000, scoped, tag = 'internal scratch']
  %s0 = inlined_call_operand.vmem [shape: f32[16,32], index: 0, kind: input, shape index: {}]
  %s1 = inlined_call_operand.vmem [shape: bf16[32,64], index: 1, kind: input, shape index: {}]
  %s2 = inlined_call_operand.vmem [shape: f32[1,64], index: 2, kind: input, shape index: {}]
  %s3 = inlined_call_operand.vmem [shape: bf16[64,32], index: 3, kind: input, shape index: {}]
  %s4 = inlined_call_operand.vmem [shape: f32[1,32], index: 4, kind: input, shape index: {}]
  %s5 = inlined_call_operand.vmem [shape: f32[1,32], index: 5, kind: input, shape index: {}]
  %s6 = inlined_call_operand.vmem [shape: f32[1,32], index: 6, kind: input, shape index: {}]
  %s7 = inlined_call_operand.vmem [shape: f32[16,32], index: 7, kind: output, shape index: {}]
  %s8 = sld [smem:[#allocation0]]
  $region38: #{architecture_forward.15} parent=0
    _
  %s10 = ssub.s32 1, %s8
  %s11 = scalar_select 0, %s10, %s8
  // Predicated region
  $region2: #{architecture_forward.15} parent=0 // pred_check
    _
  $region3: #{architecture_forward.15} parent=0 // pred_check_branch
    %13 = sbr.rel (0) target = $region5
  $region4: #{architecture_forward.15} parent=0 // pred_region
    _
  $region5: #{architecture_forward.15} parent=0 // pred_fallthru
    _
  // Predicated region
  $region6: #{architecture_forward.15} parent=0 // pred_check
    _
  $region7: #{architecture_forward.15} parent=0 // pred_check_branch
    %15 = sbr.rel (0) target = $region9
  $region8: #{architecture_forward.15} parent=0 // pred_region
    _
  $region9: #{architecture_forward.15} parent=0 // pred_fallthru
    _
  // Predicated region
  $region10: #{architecture_forward.15} parent=0 // pred_check
    _
  $region11: #{architecture_forward.15} parent=0 // pred_check_branch
    %17 = sbr.rel (0) target = $region13
  $region12: #{architecture_forward.15} parent=0 // pred_region
    _
  $region13: #{architecture_forward.15} parent=0 // pred_fallthru
    _
  // Predicated region
  $region14: #{architecture_forward.15} parent=0 // pred_check
    _
  $region15: #{architecture_forward.15} parent=0 // pred_check_branch
    %19 = sbr.rel (0) target = $region17
  $region16: #{architecture_forward.15} parent=0 // pred_region
    _
  $region17: #{architecture_forward.15} parent=0 // pred_fallthru
    _
  // Predicated region
  $region18: #{architecture_forward.15} parent=0 // pred_check
    _
  $region19: #{architecture_forward.15} parent=0 // pred_check_branch
    %21 = sbr.rel (0) target = $region21
  $region20: #{architecture_forward.15} parent=0 // pred_region
    _
  $region21: #{architecture_forward.15} parent=0 // pred_fallthru
    _
  // Predicated region
  $region22: #{architecture_forward.15} parent=0 // pred_check
    _
  $region23: #{architecture_forward.15} parent=0 // pred_check_branch
    %23 = sbr.rel (0) target = $region25
  $region24: #{architecture_forward.15} parent=0 // pred_region
    _
  $region25: #{architecture_forward.15} parent=0 // pred_fallthru
    _
  // Predicated region
  $region26: #{architecture_forward.15} parent=0 // pred_check
    _
  $region27: #{architecture_forward.15} parent=0 // pred_check_branch
    %25 = sbr.rel (0) target = $region29
  $region28: #{architecture_forward.15} parent=0 // pred_region
    _
  $region29: #{architecture_forward.15} parent=0 // pred_fallthru
    _
  %v27 = vld [vmem:[%s0] sm:$0xff]
  %v28 = vld [vmem:[%s0 + $0x8] sm:$0xff]
  %v29 = vpack.c.bf16 %v28, %v27
  %v30 = vld [vmem:[%s1] sm:$0xf]
  %v31 = vld [vmem:[%s1 + $0x4] sm:$0xf]
  %v32 = vld [vmem:[%s1 + $0x8] sm:$0xf]
  %v33 = vld [vmem:[%s1 + $0xc] sm:$0xf]
  %v34 = vld [vmem:[%s2] sm:$0x1]
  %v36 = vlaneseq
  %v37 = vshrl.u32 %v36, 7
  %v38 = vsub.s32 0, %v37
  %v39 = vrot.slane %v34, %v38
  %v45 = vunpack.c.l.b16 %v30
  %v46 = vunpack.c.l.b16 %v31
  %v47 = vunpack.c.l.b16 %v32
  %v48 = vunpack.c.l.b16 %v33
  %v49 = vpack.c.b16 %v46, %v45
  %v50 = vpack.c.b16 %v48, %v47
  %vm53 = vcmask 261120
  %v55 = vsel %vm53, %v29, 0
  %57 = vmatprep.subr.bf16.mxu0 0
  %58 = vmatpush1.bf16.msra.mxu0 0
  %59 = vmatprep.subr.bf16.mxu0 0
  %60 = vmatpush1.bf16.msra.mxu0 0
  %61 = vmatprep.subr.bf16.mxu0 0
  %62 = vmatpush1.bf16.msra.mxu0 0
  %63 = vmatprep.subr.bf16.mxu0 0
  %64 = vmatpush1.bf16.msra.mxu0 0
  %65 = vmatprep.subr.bf16.mxu0 0
  %66 = vmatpush1.bf16.msra.mxu0 0
  %67 = vmatprep.subr.bf16.mxu0 0
  %68 = vmatpush1.bf16.msra.mxu0 0
  %69 = vmatprep.subr.bf16.mxu0 0
  %70 = vmatpush1.bf16.msra.mxu0 %v50
  %71 = vmatprep.subr.bf16.mxu0 0
  %72 = vmatpush1.bf16.msra.mxu0 %v49
  %73 = vmatprep.subr.bf16.mxu0 0
  %74 = vmatpush2.bf16.msra.mxu0 0
  %75 = vmatprep.subr.bf16.mxu0 0
  %76 = vmatpush2.bf16.msra.mxu0 0
  %77 = vmatprep.subr.bf16.mxu0 0
  %78 = vmatpush2.bf16.msra.mxu0 0
  %79 = vmatprep.subr.bf16.mxu0 0
  %80 = vmatpush2.bf16.msra.mxu0 0
  %81 = vmatprep.subr.bf16.mxu0 0
  %82 = vmatpush2.bf16.msra.mxu0 0
  %83 = vmatprep.subr.bf16.mxu0 0
  %84 = vmatpush2.bf16.msra.mxu0 0
  %85 = vmatprep.subr.bf16.mxu0 0
  %86 = vmatpush2.bf16.msra.mxu0 0
  %87 = vmatprep.subr.bf16.mxu0 0
  %88 = vmatpush2.bf16.msra.mxu0 0
  %89 = vmatprep.mubr.bf16.mxu0 0
  %90 = vmatmul.mubr.bf16.gmra.mxu0 %v55
  %v91 = vpop.f32.mrf.mxu0
  %v92 = vadd.f32 %v39, %v91
  %v93 = vpop.f32.mrf.mxu0
  %v94 = vpop.f32.mrf.mxu0
  %v95 = vadd.f32 %v39, %v94
  %v96 = vpop.f32.mrf.mxu0
  %97 = vdwg.mxu0
  %v98 = vmax.f32 %v92, 0.0
  %v99 = vmax.f32 %v95, 0.0
  %v100 = vpack.c.bf16 %v99, %v98
  %v101 = vld [vmem:[%s3] sm:$0xf]
  %v102 = vld [vmem:[%s3 + $0x4] sm:$0xf]
  %v103 = vld [vmem:[%s3 + $0x8] sm:$0xf]
  %v104 = vld [vmem:[%s3 + $0xc] sm:$0xf]
  %v105 = vld [vmem:[%s3 + $0x10] sm:$0xf]
  %v106 = vld [vmem:[%s3 + $0x14] sm:$0xf]
  %v107 = vld [vmem:[%s3 + $0x18] sm:$0xf]
  %v108 = vld [vmem:[%s3 + $0x1c] sm:$0xf]
  %v109 = vld [vmem:[%s4] sm:$0x1]
  %v111 = vlaneseq
  %v112 = vshrl.u32 %v111, 7
  %v113 = vsub.s32 0, %v112
  %v114 = vrot.slane %v109, %v113
  %v124 = vunpack.c.l.b16 %v101
  %v125 = vunpack.c.l.b16 %v102
  %v126 = vunpack.c.l.b16 %v103
  %v127 = vunpack.c.l.b16 %v104
  %v128 = vunpack.c.l.b16 %v105
  %v129 = vunpack.c.l.b16 %v106
  %v130 = vunpack.c.l.b16 %v107
  %v131 = vunpack.c.l.b16 %v108
  %v132 = vpack.c.b16 %v125, %v124
  %v133 = vpack.c.b16 %v127, %v126
  %v134 = vpack.c.b16 %v129, %v128
  %v135 = vpack.c.b16 %v131, %v130
  %vm140 = vcmask 523264
  %v142 = vsel %vm140, %v100, 0
  %144 = vmatprep.subr.bf16.mxu0 0
  %145 = vmatpush1.bf16.msra.mxu0 0
  %146 = vmatprep.subr.bf16.mxu0 0
  %147 = vmatpush1.bf16.msra.mxu0 0
  %148 = vmatprep.subr.bf16.mxu0 0
  %149 = vmatpush1.bf16.msra.mxu0 0
  %150 = vmatprep.subr.bf16.mxu0 0
  %151 = vmatpush1.bf16.msra.mxu0 0
  %152 = vmatprep.subr.bf16.mxu0 0
  %153 = vmatpush1.bf16.msra.mxu0 %v135
  %154 = vmatprep.subr.bf16.mxu0 0
  %155 = vmatpush1.bf16.msra.mxu0 %v134
  %156 = vmatprep.subr.bf16.mxu0 0
  %157 = vmatpush1.bf16.msra.mxu0 %v133
  %158 = vmatprep.subr.bf16.mxu0 0
  %159 = vmatpush1.bf16.msra.mxu0 %v132
  %160 = vmatprep.subr.bf16.mxu0 0
  %161 = vmatpush2.bf16.msra.mxu0 0
  %162 = vmatprep.subr.bf16.mxu0 0
  %163 = vmatpush2.bf16.msra.mxu0 0
  %164 = vmatprep.subr.bf16.mxu0 0
  %165 = vmatpush2.bf16.msra.mxu0 0
  %166 = vmatprep.subr.bf16.mxu0 0
  %167 = vmatpush2.bf16.msra.mxu0 0
  %168 = vmatprep.subr.bf16.mxu0 0
  %169 = vmatpush2.bf16.msra.mxu0 0
  %170 = vmatprep.subr.bf16.mxu0 0
  %171 = vmatpush2.bf16.msra.mxu0 0
  %172 = vmatprep.subr.bf16.mxu0 0
  %173 = vmatpush2.bf16.msra.mxu0 0
  %174 = vmatprep.subr.bf16.mxu0 0
  %175 = vmatpush2.bf16.msra.mxu0 0
  %176 = vmatprep.mubr.bf16.mxu0 0
  %177 = vmatmul.mubr.bf16.gmra.mxu0 %v142
  %v178 = vpop.f32.mrf.mxu0
  %v179 = vadd.f32 %v114, %v178
  %v180 = vpop.f32.mrf.mxu0
  %v181 = vpop.f32.mrf.mxu0
  %v182 = vadd.f32 %v114, %v181
  %v183 = vpop.f32.mrf.mxu0
  %184 = vdwg.mxu0
  %v185 = vadd.f32 %v179, %v27
  %v186 = vadd.f32 %v182, %v28
  %v187 = vsel %vm53, %v185, 0.0
  %188 = vadd.xlane.f32.xlu0 %v187
  %v189 = vpop.xlane.xlu0 %188
  %v190 = vsel %vm53, %v186, 0.0
  %191 = vadd.xlane.f32.xlu0 %v190
  %v192 = vpop.xlane.xlu0 %191
  %v193 = vrcp.pop 32.0
  %v194 = vmul.f32 %v189, %v193
  %v195 = vmul.f32 %v192, %v193
  %v196 = vsub.f32 %v185, %v194
  %v197 = vsub.f32 %v186, %v195
  %v198 = vmul.f32 %v196, %v196
  %v199 = vmul.f32 %v197, %v197
  %v200 = vsel %vm53, %v198, 0.0
  %201 = vadd.xlane.f32.xlu0 %v200
  %v202 = vpop.xlane.xlu0 %201
  %v203 = vsel %vm53, %v199, 0.0
  %204 = vadd.xlane.f32.xlu0 %v203
  %v205 = vpop.xlane.xlu0 %204
  %v206 = vmul.f32 %v202, %v193
  %v207 = vmul.f32 %v205, %v193
  %v208 = vadd.f32 %v206, 1e-05
  %v209 = vadd.f32 %v207, 1e-05
  %v210 = vrsqrt.pop %v208
  %v211 = vrsqrt.pop %v209
  %v212 = vmul.f32 %v196, %v210
  %v213 = vmul.f32 %v197, %v211
  %v214 = vld [vmem:[%s5] sm:$0x1]
  %v216 = vlaneseq
  %v217 = vshrl.u32 %v216, 7
  %v218 = vsub.s32 0, %v217
  %v219 = vrot.slane %v214, %v218
  %v221 = vmul.f32 %v212, %v219
  %v222 = vmul.f32 %v213, %v219
  %v223 = vld [vmem:[%s6] sm:$0x1]
  %v225 = vlaneseq
  %v226 = vshrl.u32 %v225, 7
  %v227 = vsub.s32 0, %v226
  %v228 = vrot.slane %v223, %v227
  %v230 = vadd.f32 %v221, %v228
  %v231 = vadd.f32 %v222, %v228
  %232 = vst.msk [vmem:[%s7] sm:$0xff] %vm53, %v230
  %233 = vst.msk [vmem:[%s7 + $0x8] sm:$0xff] %vm53, %v231
  // Predicated region
  $region30: #{architecture_forward.15} parent=0 // pred_check
    _
  $region31: #{architecture_forward.15} parent=0 // pred_check_branch
    %235 = sbr.rel (0) target = $region33
  $region32: #{architecture_forward.15} parent=0 // pred_region
    _
  $region33: #{architecture_forward.15} parent=0 // pred_fallthru
    _
  // Predicated region
  $region34: #{architecture_forward.15} parent=0 // pred_check
    _
  $region35: #{architecture_forward.15} parent=0 // pred_check_branch
    %237 = sbr.rel (0) target = $region37
  $region36: #{architecture_forward.15} parent=0 // pred_region
    _
  $region37: #{architecture_forward.15} parent=0 // pred_fallthru
    _

// kernel: architecture_forward.13
$region0: #{architecture_forward.13}
  #allocation0 [shape = 'u32[]', space=smem, size = 0x4, offset = 0x4, fixed_abs, tag = 'smem constant byte address 0x4 - core index']
  #allocation1 [shape = 'u32[144,128]{1,0:T(1,128)}', space=vmem, size = 0x12000, scoped, tag = 'internal scratch']
  %s0 = inlined_call_operand.vmem [shape: bf16[2,4,8,8], index: 0, kind: input, shape index: {}]
  %s1 = inlined_call_operand.vmem [shape: bf16[2,4,8,8], index: 1, kind: input, shape index: {}]
  %s2 = inlined_call_operand.vmem [shape: f32[4,8,1], index: 2, kind: input, shape index: {}]
  %s3 = inlined_call_operand.vmem [shape: bf16[2,4,8,8], index: 3, kind: output, shape index: {}]
  %s4 = sld [smem:[#allocation0]]
  $region45: #{architecture_forward.13} parent=0
    _
  %s6 = ssub.s32 1, %s4
  %s7 = scalar_select 0, %s6, %s4
  loop: start=0, step=1, limit=4
  $region2: #{architecture_forward.13} parent=0 // loop_pre_header
    _
  $region3: #{architecture_forward.13} parent=0 // loop_header
    %s9 = sphi 0, %s13
    %p10 = scmp.ge.s32.totalorder %s9, 4
    %s19 = sphi 0, %s21
    %s22 = sphi 0, %s19
    %s23 = sphi 0, %s22
    %s39 = sphi 0, %s23
    %s45 = sphi 0, %s47
    %s48 = sphi 0, %s45
    %s49 = sphi 0, %s48
    %s65 = sphi 0, %s49
    %s69 = sphi 0, %s69
    %s71 = sphi 0, %s69
    %s72 = sphi 0, %s71
    %s86 = sphi 0, %s72
    %s92 = sphi 0, %s94
    %s95 = sphi 0, %s92
    %s96 = sphi 0, %s95
    %s112 = sphi 0, %s96
  $region4: #{architecture_forward.13} parent=0 // loop_header_branch
    %12 = sbr.rel (%p10) target = $region8
  $region5: #{architecture_forward.13} parent=0 // loop_body
    %s14 = ssub.s32 %s9, 1
    %s15 = ssub.s32 %s9, 2
    %s16 = sadd.s32 %s9, 1
    %s17 = ssub.s32 %s9, %s16
    %p18 = scmp.eq.s32.totalorder %s17, 0
    %s20 = sadd.s32 %s19, 1
    %s21 = scalar_select %p18, %s19, %s20
    %p24 = pneg %p18
    %p25 = scmp.eq.s32.totalorder %s9, 1
    %p26 = por %p24, %p25
    %p27 = scmp.ne.s32.totalorder %s19, %s22
    %p28 = scmp.eq.s32.totalorder %s9, 0
    %p29 = por %p27, %p28
    %p30 = scmp.ne.s32.totalorder %s19, %s22
    %p31 = scmp.eq.s32.totalorder %s14, 1
    %p32 = por %p30, %p31
    %p33 = scmp.ne.s32.totalorder %s22, %s23
    %p34 = scmp.eq.s32.totalorder %s14, 0
    %p35 = por %p33, %p34
    %p36 = scmp.ne.s32.totalorder %s22, %s23
    %p37 = scmp.eq.s32.totalorder %s15, 1
    %p38 = por %p36, %p37
    %p40 = scmp.ne.s32.totalorder %s23, %s39
    %p41 = scmp.eq.s32.totalorder %s15, 0
    %p42 = por %p40, %p41
    %s43 = ssub.s32 %s9, %s16
    %p44 = scmp.eq.s32.totalorder %s43, 0
    %s46 = sadd.s32 %s45, 1
    %s47 = scalar_select %p44, %s45, %s46
    %p50 = pneg %p44
    %p51 = scmp.eq.s32.totalorder %s9, 1
    %p52 = por %p50, %p51
    %p53 = scmp.ne.s32.totalorder %s45, %s48
    %p54 = scmp.eq.s32.totalorder %s9, 0
    %p55 = por %p53, %p54
    %p56 = scmp.ne.s32.totalorder %s45, %s48
    %p57 = scmp.eq.s32.totalorder %s14, 1
    %p58 = por %p56, %p57
    %p59 = scmp.ne.s32.totalorder %s48, %s49
    %p60 = scmp.eq.s32.totalorder %s14, 0
    %p61 = por %p59, %p60
    %p62 = scmp.ne.s32.totalorder %s48, %s49
    %p63 = scmp.eq.s32.totalorder %s15, 1
    %p64 = por %p62, %p63
    %p66 = scmp.ne.s32.totalorder %s49, %s65
    %p67 = scmp.eq.s32.totalorder %s15, 0
    %p68 = por %p66, %p67
    %s70 = sadd.s32 %s69, 1
    %p73 = scmp.eq.s32.totalorder %s9, 1
    %p74 = scmp.ne.s32.totalorder %s69, %s71
    %p75 = scmp.eq.s32.totalorder %s9, 0
    %p76 = por %p74, %p75
    %p77 = scmp.ne.s32.totalorder %s69, %s71
    %p78 = scmp.eq.s32.totalorder %s14, 1
    %p79 = por %p77, %p78
    %p80 = scmp.ne.s32.totalorder %s71, %s72
    %p81 = scmp.eq.s32.totalorder %s14, 0
    %p82 = por %p80, %p81
    %p83 = scmp.ne.s32.totalorder %s71, %s72
    %p84 = scmp.eq.s32.totalorder %s15, 1
    %p85 = por %p83, %p84
    %p87 = scmp.ne.s32.totalorder %s72, %s86
    %p88 = scmp.eq.s32.totalorder %s15, 0
    %p89 = por %p87, %p88
    %s90 = ssub.s32 %s9, %s16
    %p91 = scmp.eq.s32.totalorder %s90, 0
    %s93 = sadd.s32 %s92, 1
    %s94 = scalar_select %p91, %s92, %s93
    %p97 = pneg %p91
    %p98 = scmp.eq.s32.totalorder %s9, 1
    %p99 = por %p97, %p98
    %p100 = scmp.ne.s32.totalorder %s92, %s95
    %p101 = scmp.eq.s32.totalorder %s9, 0
    %p102 = por %p100, %p101
    %p103 = scmp.ne.s32.totalorder %s92, %s95
    %p104 = scmp.eq.s32.totalorder %s14, 1
    %p105 = por %p103, %p104
    %p106 = scmp.ne.s32.totalorder %s95, %s96
    %p107 = scmp.eq.s32.totalorder %s14, 0
    %p108 = por %p106, %p107
    %p109 = scmp.ne.s32.totalorder %s95, %s96
    %p110 = scmp.eq.s32.totalorder %s15, 1
    %p111 = por %p109, %p110
    %p113 = scmp.ne.s32.totalorder %s96, %s112
    %p114 = scmp.eq.s32.totalorder %s15, 0
    %p115 = por %p113, %p114
    %p116 = scmp.le.s32.totalorder 1, %s9
    %p117 = scmp.lt.s32.totalorder %s9, 3
    %p118 = pnand %p116, %p117
    %p119 = pneg %p118
    // Predicated region
    $region9: #{architecture_forward.13} parent=5 // pred_check
      _
    $region10: #{architecture_forward.13} parent=5 // pred_check_branch
      %121 = sbr.rel (%p118) target = $region12
    $region11: #{architecture_forward.13} parent=5 // pred_region
      %s122 = ssub.s32 %s9, 1
      // Predicated region
      $region13: #{architecture_forward.13} parent=11 // pred_check
        %p123 = pneg %p82
      $region14: #{architecture_forward.13} parent=11 // pred_check_branch
        %125 = sbr.rel (%p123) target = $region16
      $region15: #{architecture_forward.13} parent=11 // pred_region
        _
      $region16: #{architecture_forward.13} parent=11 // pred_fallthru
        _
    $region12: #{architecture_forward.13} parent=5 // pred_fallthru
      _
    %p126 = scmp.lt.s32.totalorder %s9, 2
    // Predicated region
    $region17: #{architecture_forward.13} parent=5 // pred_check
      %p127 = pneg %p126
    $region18: #{architecture_forward.13} parent=5 // pred_check_branch
      %129 = sbr.rel (%p127) target = $region20
    $region19: #{architecture_forward.13} parent=5 // pred_region
      // Predicated region
      $region21: #{architecture_forward.13} parent=19 // pred_check
        %p130 = pneg %p29
      $region22: #{architecture_forward.13} parent=19 // pred_check_branch
        %132 = sbr.rel (%p130) target = $region24
      $region23: #{architecture_forward.13} parent=19 // pred_region
        %p133 = scmp.lt.s32.totalorder %s9, 1
        %s134 = scalar_select %p133, %s9, 1
        %s135 = smul.addr %s134, 4
        %s136 = smul.addr %s135, 4
        %s137 = scalar_lea.vmem %s0, %s136
      $region24: #{architecture_forward.13} parent=19 // pred_fallthru
        _
      // Predicated region
      $region25: #{architecture_forward.13} parent=19 // pred_check
        %p138 = pneg %p55
      $region26: #{architecture_forward.13} parent=19 // pred_check_branch
        %140 = sbr.rel (%p138) target = $region28
      $region27: #{architecture_forward.13} parent=19 // pred_region
        %p141 = scmp.lt.s32.totalorder %s9, 1
        %s142 = scalar_select %p141, %s9, 1
        %s143 = smul.addr %s142, 4
        %s144 = smul.addr %s143, 4
        %s145 = scalar_lea.vmem %s1, %s144
      $region28: #{architecture_forward.13} parent=19 // pred_fallthru
        _
    $region20: #{architecture_forward.13} parent=5 // pred_fallthru
      _
    %p146 = scmp.le.s32.totalorder 1, %s9
    %p147 = scmp.lt.s32.totalorder %s9, 3
    %p148 = pnand %p146, %p147
    %p149 = pneg %p148
    // Predicated region
    $region29: #{architecture_forward.13} parent=5 // pred_check
      _
    $region30: #{architecture_forward.13} parent=5 // pred_check_branch
      %151 = sbr.rel (%p148) target = $region32
    $region31: #{architecture_forward.13} parent=5 // pred_region
      %s152 = ssub.s32 %s9, 1
      %p153 = scmp.lt.s32.totalorder %s14, 1
      %s154 = scalar_select %p153, %s14, 1
      %s155 = smul.addr %s154, 4
      %s156 = smul.addr %s155, 4
      %s157 = scalar_lea.vmem %s0, %s156
      %p158 = pneg %p35
      %p159 = pneg %p32
      %p160 = scmp.lt.s32.totalorder %s14, 1
      %s161 = scalar_select %p160, %s14, 1
      %s162 = smul.addr %s161, 4
      %s163 = smul.addr %s162, 4
      %s164 = scalar_lea.vmem %s1, %s163
      %p165 = pneg %p61
      %p166 = pneg %p58
      %p167 = pneg %p82
      %p168 = pneg %p79
      %p169 = pneg %p108
      %p170 = pneg %p105
      %p171 = scmp.lt.s32.totalorder %s14, 1
      %s172 = scalar_select %p171, %s14, 1
      %s173 = smul.addr %s172, 4
      %s174 = smul.addr %s173, 4
      %s175 = scalar_lea.vmem %s3, %s174
      %p176 = scmp.lt.s32.totalorder %s14, 1
      %s177 = scalar_select %p176, %s14, 1
      %s178 = smul.addr %s177, 4
      %s179 = smul.addr %s178, 4
      %s180 = scalar_lea.vmem %s0, %s179
      %p181 = scmp.lt.s32.totalorder %s14, 1
      %s182 = scalar_select %p181, %s14, 1
      %s183 = smul.addr %s182, 4
      %s184 = smul.addr %s183, 4
      %s185 = scalar_lea.vmem %s1, %s184
      %p186 = scmp.lt.s32.totalorder %s14, 1
      %s187 = scalar_select %p186, %s14, 1
      %s188 = smul.addr %s187, 4
      %s189 = smul.addr %s188, 4
      %s190 = scalar_lea.vmem %s3, %s189
      %v192 = vld [vmem:[%s180] sm:$0xf]
      %v193 = vld [vmem:[%s180 + $0x4] sm:$0xf]
      %v194 = vld [vmem:[%s180 + $0x8] sm:$0xf]
      %v195 = vld [vmem:[%s180 + $0xc] sm:$0xf]
      %v196 = vld [vmem:[%s185] sm:$0xf]
      %v197 = vld [vmem:[%s185 + $0x4] sm:$0xf]
      %v198 = vld [vmem:[%s185 + $0x8] sm:$0xf]
      %v199 = vld [vmem:[%s185 + $0xc] sm:$0xf]
      %v200 = vld [vmem:[%s2] sm:$0xff]
      %v201 = vld [vmem:[%s2 + $0x8] sm:$0xff]
      %v202 = vld [vmem:[%s2 + $0x10] sm:$0xff]
      %v203 = vld [vmem:[%s2 + $0x18] sm:$0xff]
      %v204 = vlaneseq
      %v205 = vshrl.u32 %v204, 7
      %v206 = vlaneseq
      %v207 = vand.u32 %v206, 127
      %v208 = vadd.s32 %v205, 1
      %vm209 = vcmp.lt.s32.totalorder %v207, %v208
      %v210 = vsub.s32 %v207, %v205
      %vm211 = vcmp.lt.s32.totalorder %v210, 0
      %v212 = vsub.s32 0, %v210
      %v213 = vsel %vm211, %v212, %v210
      %v214 = vcvt.s32.f32 %v213
      %vm215 = vcmp.gt.s32.totalorder %v205, %v207
      %v216 = vsel %vm215, 1.0, 0.0
      %v217 = vpack.c.bf16 %v216, %v216
      %vm218 = vcmask 64512
      %v220 = vsel %vm218, %v192, 0
      %222 = vmatprep.subr.bf16.mxu0 0
      %223 = vmatpush1.bf16.xpose.msra.mxu0 0
      %224 = vmatprep.subr.bf16.mxu0 0
      %225 = vmatpush1.bf16.xpose.msra.mxu0 0
      %226 = vmatprep.subr.bf16.mxu0 0
      %227 = vmatpush1.bf16.xpose.msra.mxu0 0
      %228 = vmatprep.subr.bf16.mxu0 0
      %229 = vmatpush1.bf16.xpose.msra.mxu0 0
      %230 = vmatprep.subr.bf16.mxu0 0
      %231 = vmatpush1.bf16.xpose.msra.mxu0 0
      %232 = vmatprep.subr.bf16.mxu0 0
      %233 = vmatpush1.bf16.xpose.msra.mxu0 0
      %234 = vmatprep.subr.bf16.mxu0 0
      %235 = vmatpush1.bf16.xpose.msra.mxu0 0
      %236 = vmatprep.subr.bf16.mxu0 0
      %237 = vmatpush1.bf16.xpose.msra.mxu0 %v220
      %238 = vmatprep.subr.bf16.mxu0 0
      %239 = vmatpush2.bf16.xpose.msra.mxu0 0
      %240 = vmatprep.subr.bf16.mxu0 0
      %241 = vmatpush2.bf16.xpose.msra.mxu0 0
      %242 = vmatprep.subr.bf16.mxu0 0
      %243 = vmatpush2.bf16.xpose.msra.mxu0 0
      %244 = vmatprep.subr.bf16.mxu0 0
      %245 = vmatpush2.bf16.xpose.msra.mxu0 0
      %246 = vmatprep.subr.bf16.mxu0 0
      %247 = vmatpush2.bf16.xpose.msra.mxu0 0
      %248 = vmatprep.subr.bf16.mxu0 0
      %249 = vmatpush2.bf16.xpose.msra.mxu0 0
      %250 = vmatprep.subr.bf16.mxu0 0
      %251 = vmatpush2.bf16.xpose.msra.mxu0 0
      %252 = vmatprep.subr.bf16.mxu0 0
      %253 = vmatpush2.bf16.xpose.msra.mxu0 0
      %254 = vmatprep.mubr.bf16.mxu0 0
      %255 = vmatmul.mubr.bf16.gmra.mxu0 %v220
      %v256 = vpop.f32.mrf.mxu0
      %v257 = vadd.f32 0.0, %v256
      %v258 = vpop.f32.mrf.mxu0
      %v259 = vpop.f32.mrf.mxu0
      %v260 = vpop.f32.mrf.mxu0
      %261 = vdwg.mxu0
      %v263 = vsel %vm218, %v193, 0
      %265 = vmatprep.subr.bf16.mxu0 0
      %266 = vmatpush1.bf16.xpose.msra.mxu0 0
      %267 = vmatprep.subr.bf16.mxu0 0
      %268 = vmatpush1.bf16.xpose.msra.mxu0 0
      %269 = vmatprep.subr.bf16.mxu0 0
      %270 = vmatpush1.bf16.xpose.msra.mxu0 0
      %271 = vmatprep.subr.bf16.mxu0 0
      %272 = vmatpush1.bf16.xpose.msra.mxu0 0
      %273 = vmatprep.subr.bf16.mxu0 0
      %274 = vmatpush1.bf16.xpose.msra.mxu0 0
      %275 = vmatprep.subr.bf16.mxu0 0
      %276 = vmatpush1.bf16.xpose.msra.mxu0 0
      %277 = vmatprep.subr.bf16.mxu0 0
      %278 = vmatpush1.bf16.xpose.msra.mxu0 0
      %279 = vmatprep.subr.bf16.mxu0 0
      %280 = vmatpush1.bf16.xpose.msra.mxu0 %v263
      %281 = vmatprep.subr.bf16.mxu0 0
      %282 = vmatpush2.bf16.xpose.msra.mxu0 0
      %283 = vmatprep.subr.bf16.mxu0 0
      %284 = vmatpush2.bf16.xpose.msra.mxu0 0
      %285 = vmatprep.subr.bf16.mxu0 0
      %286 = vmatpush2.bf16.xpose.msra.mxu0 0
      %287 = vmatprep.subr.bf16.mxu0 0
      %288 = vmatpush2.bf16.xpose.msra.mxu0 0
      %289 = vmatprep.subr.bf16.mxu0 0
      %290 = vmatpush2.bf16.xpose.msra.mxu0 0
      %291 = vmatprep.subr.bf16.mxu0 0
      %292 = vmatpush2.bf16.xpose.msra.mxu0 0
      %293 = vmatprep.subr.bf16.mxu0 0
      %294 = vmatpush2.bf16.xpose.msra.mxu0 0
      %295 = vmatprep.subr.bf16.mxu0 0
      %296 = vmatpush2.bf16.xpose.msra.mxu0 0
      %297 = vmatprep.mubr.bf16.mxu0 0
      %298 = vmatmul.mubr.bf16.gmra.mxu0 %v263
      %v299 = vpop.f32.mrf.mxu0
      %v300 = vadd.f32 0.0, %v299
      %v301 = vpop.f32.mrf.mxu0
      %v302 = vpop.f32.mrf.mxu0
      %v303 = vpop.f32.mrf.mxu0
      %304 = vdwg.mxu0
      %v306 = vsel %vm218, %v194, 0
      %308 = vmatprep.subr.bf16.mxu0 0
      %309 = vmatpush1.bf16.xpose.msra.mxu0 0
      %310 = vmatprep.subr.bf16.mxu0 0
      %311 = vmatpush1.bf16.xpose.msra.mxu0 0
      %312 = vmatprep.subr.bf16.mxu0 0
      %313 = vmatpush1.bf16.xpose.msra.mxu0 0
      %314 = vmatprep.subr.bf16.mxu0 0
      %315 = vmatpush1.bf16.xpose.msra.mxu0 0
      %316 = vmatprep.subr.bf16.mxu0 0
      %317 = vmatpush1.bf16.xpose.msra.mxu0 0
      %318 = vmatprep.subr.bf16.mxu0 0
      %319 = vmatpush1.bf16.xpose.msra.mxu0 0
      %320 = vmatprep.subr.bf16.mxu0 0
      %321 = vmatpush1.bf16.xpose.msra.mxu0 0
      %322 = vmatprep.subr.bf16.mxu0 0
      %323 = vmatpush1.bf16.xpose.msra.mxu0 %v306
      %324 = vmatprep.subr.bf16.mxu0 0
      %325 = vmatpush2.bf16.xpose.msra.mxu0 0
      %326 = vmatprep.subr.bf16.mxu0 0
      %327 = vmatpush2.bf16.xpose.msra.mxu0 0
      %328 = vmatprep.subr.bf16.mxu0 0
      %329 = vmatpush2.bf16.xpose.msra.mxu0 0
      %330 = vmatprep.subr.bf16.mxu0 0
      %331 = vmatpush2.bf16.xpose.msra.mxu0 0
      %332 = vmatprep.subr.bf16.mxu0 0
      %333 = vmatpush2.bf16.xpose.msra.mxu0 0
      %334 = vmatprep.subr.bf16.mxu0 0
      %335 = vmatpush2.bf16.xpose.msra.mxu0 0
      %336 = vmatprep.subr.bf16.mxu0 0
      %337 = vmatpush2.bf16.xpose.msra.mxu0 0
      %338 = vmatprep.subr.bf16.mxu0 0
      %339 = vmatpush2.bf16.xpose.msra.mxu0 0
      %340 = vmatprep.mubr.bf16.mxu0 0
      %341 = vmatmul.mubr.bf16.gmra.mxu0 %v306
      %v342 = vpop.f32.mrf.mxu0
      %v343 = vadd.f32 0.0, %v342
      %v344 = vpop.f32.mrf.mxu0
      %v345 = vpop.f32.mrf.mxu0
      %v346 = vpop.f32.mrf.mxu0
      %347 = vdwg.mxu0
      %v349 = vsel %vm218, %v195, 0
      %351 = vmatprep.subr.bf16.mxu0 0
      %352 = vmatpush1.bf16.xpose.msra.mxu0 0
      %353 = vmatprep.subr.bf16.mxu0 0
      %354 = vmatpush1.bf16.xpose.msra.mxu0 0
      %355 = vmatprep.subr.bf16.mxu0 0
      %356 = vmatpush1.bf16.xpose.msra.mxu0 0
      %357 = vmatprep.subr.bf16.mxu0 0
      %358 = vmatpush1.bf16.xpose.msra.mxu0 0
      %359 = vmatprep.subr.bf16.mxu0 0
      %360 = vmatpush1.bf16.xpose.msra.mxu0 0
      %361 = vmatprep.subr.bf16.mxu0 0
      %362 = vmatpush1.bf16.xpose.msra.mxu0 0
      %363 = vmatprep.subr.bf16.mxu0 0
      %364 = vmatpush1.bf16.xpose.msra.mxu0 0
      %365 = vmatprep.subr.bf16.mxu0 0
      %366 = vmatpush1.bf16.xpose.msra.mxu0 %v349
      %367 = vmatprep.subr.bf16.mxu0 0
      %368 = vmatpush2.bf16.xpose.msra.mxu0 0
      %369 = vmatprep.subr.bf16.mxu0 0
      %370 = vmatpush2.bf16.xpose.msra.mxu0 0
      %371 = vmatprep.subr.bf16.mxu0 0
      %372 = vmatpush2.bf16.xpose.msra.mxu0 0
      %373 = vmatprep.subr.bf16.mxu0 0
      %374 = vmatpush2.bf16.xpose.msra.mxu0 0
      %375 = vmatprep.subr.bf16.mxu0 0
      %376 = vmatpush2.bf16.xpose.msra.mxu0 0
      %377 = vmatprep.subr.bf16.mxu0 0
      %378 = vmatpush2.bf16.xpose.msra.mxu0 0
      %379 = vmatprep.subr.bf16.mxu0 0
      %380 = vmatpush2.bf16.xpose.msra.mxu0 0
      %381 = vmatprep.subr.bf16.mxu0 0
      %382 = vmatpush2.bf16.xpose.msra.mxu0 0
      %383 = vmatprep.mubr.bf16.mxu0 0
      %384 = vmatmul.mubr.bf16.gmra.mxu0 %v349
      %v385 = vpop.f32.mrf.mxu0
      %v386 = vadd.f32 0.0, %v385
      %v387 = vpop.f32.mrf.mxu0
      %v388 = vpop.f32.mrf.mxu0
      %v389 = vpop.f32.mrf.mxu0
      %390 = vdwg.mxu0
      %v391 = vmul.f32 %v257, 0.35355338
      %v392 = vmul.f32 %v300, 0.35355338
      %v393 = vmul.f32 %v343, 0.35355338
      %v394 = vmul.f32 %v386, 0.35355338
      %v395 = vsel %vm209, 1, 0
      %vm396 = vcmp.eq.s32.totalorder %v395, 1
      %v397 = vsel %vm396, %v391, -1e+32
      %v398 = vsel %vm396, %v392, -1e+32
      %v399 = vsel %vm396, %v393, -1e+32
      %v400 = vsel %vm396, %v394, -1e+32
      %v401 = vsel %vm218, %v397, -inf
      %402 = vmax.xlane.f32.xlu0 %v401
      %v403 = vpop.xlane.xlu0 %402
      %v404 = vsel %vm218, %v398, -inf
      %405 = vmax.xlane.f32.xlu0 %v404
      %v406 = vpop.xlane.xlu0 %405
      %v407 = vsel %vm218, %v399, -inf
      %408 = vmax.xlane.f32.xlu0 %v407
      %v409 = vpop.xlane.xlu0 %408
      %v410 = vsel %vm218, %v400, -inf
      %411 = vmax.xlane.f32.xlu0 %v410
      %v412 = vpop.xlane.xlu0 %411
      %v413 = vsub.f32 %v397, %v403
      %v414 = vsub.f32 %v398, %v406
      %v415 = vsub.f32 %v399, %v409
      %v416 = vsub.f32 %v400, %v412
      %v417 = vmul.f32 %v413, 1.442695
      %v418 = vpow.pop %v417
      %v419 = vmul.f32 %v414, 1.442695
      %v420 = vpow.pop %v419
      %v421 = vmul.f32 %v415, 1.442695
      %v422 = vpow.pop %v421
      %v423 = vmul.f32 %v416, 1.442695
      %v424 = vpow.pop %v423
      %v425 = vsel %vm218, %v418, 0.0
      %426 = vadd.xlane.f32.xlu0 %v425
      %v427 = vpop.xlane.xlu0 %426
      %v428 = vsel %vm218, %v420, 0.0
      %429 = vadd.xlane.f32.xlu0 %v428
      %v430 = vpop.xlane.xlu0 %429
      %v431 = vsel %vm218, %v422, 0.0
      %432 = vadd.xlane.f32.xlu0 %v431
      %v433 = vpop.xlane.xlu0 %432
      %v434 = vsel %vm218, %v424, 0.0
      %435 = vadd.xlane.f32.xlu0 %v434
      %v436 = vpop.xlane.xlu0 %435
      %v437 = vrcp.pop %v427
      %v438 = vrcp.pop %v430
      %v439 = vrcp.pop %v433
      %v440 = vrcp.pop %v436
      %v441 = vmul.f32 %v418, %v437
      %v442 = vmul.f32 %v420, %v438
      %v443 = vmul.f32 %v422, %v439
      %v444 = vmul.f32 %v424, %v440
      %v445 = vsel %vm396, %v441, 0.0
      %v446 = vsel %vm396, %v442, 0.0
      %v447 = vsel %vm396, %v443, 0.0
      %v448 = vsel %vm396, %v444, 0.0
      %v449 = vpack.c.bf16 %v446, %v445
      %v450 = vpack.c.bf16 %v448, %v447
      %v452 = vsel %vm218, %v449, 0
      %v455 = vsel %vm218, %v450, 0
      %vm457 = vcmask 1043456
      %v459 = vsel %vm457, %v217, 0
      %461 = vmatprep.subr.bf16.mxu0 0
      %462 = vmatpush1.bf16.msra.mxu0 0
      %463 = vmatprep.subr.bf16.mxu0 0
      %464 = vmatpush1.bf16.msra.mxu0 0
      %465 = vmatprep.subr.bf16.mxu0 0
      %466 = vmatpush1.bf16.msra.mxu0 0
      %467 = vmatprep.subr.bf16.mxu0 0
      %468 = vmatpush1.bf16.msra.mxu0 0
      %469 = vmatprep.subr.bf16.mxu0 0
      %470 = vmatpush1.bf16.msra.mxu0 0
      %471 = vmatprep.subr.bf16.mxu0 0
      %472 = vmatpush1.bf16.msra.mxu0 0
      %473 = vmatprep.subr.bf16.mxu0 0
      %474 = vmatpush1.bf16.msra.mxu0 0
      %475 = vmatprep.subr.bf16.mxu0 0
      %476 = vmatpush1.bf16.msra.mxu0 %v459
      %477 = vmatprep.subr.bf16.mxu0 0
      %478 = vmatpush2.bf16.msra.mxu0 0
      %479 = vmatprep.subr.bf16.mxu0 0
      %480 = vmatpush2.bf16.msra.mxu0 0
      %481 = vmatprep.subr.bf16.mxu0 0
      %482 = vmatpush2.bf16.msra.mxu0 0
      %483 = vmatprep.subr.bf16.mxu0 0
      %484 = vmatpush2.bf16.msra.mxu0 0
      %485 = vmatprep.subr.bf16.mxu0 0
      %486 = vmatpush2.bf16.msra.mxu0 0
      %487 = vmatprep.subr.bf16.mxu0 0
      %488 = vmatpush2.bf16.msra.mxu0 0
      %489 = vmatprep.subr.bf16.mxu0 0
      %490 = vmatpush2.bf16.msra.mxu0 0
      %491 = vmatprep.subr.bf16.mxu0 0
      %492 = vmatpush2.bf16.msra.mxu0 0
      %493 = vmatprep.mubr.bf16.mxu0 0
      %494 = vmatmul.mubr.bf16.gmra.mxu0 %v452
      %v495 = vpop.f32.mrf.mxu0
      %v496 = vadd.f32 0.0, %v495
      %v497 = vpop.f32.mrf.mxu0
      %v498 = vpop.f32.mrf.mxu0
      %v499 = vadd.f32 0.0, %v498
      %v500 = vpop.f32.mrf.mxu0
      %501 = vmatprep.mubr.bf16.mxu0 0
      %502 = vmatmul.mubr.bf16.gmra.mxu0 %v455
      %v503 = vpop.f32.mrf.mxu0
      %v504 = vadd.f32 0.0, %v503
      %v505 = vpop.f32.mrf.mxu0
      %v506 = vpop.f32.mrf.mxu0
      %v507 = vadd.f32 0.0, %v506
      %v508 = vpop.f32.mrf.mxu0
      %509 = vdwg.mxu0
      %v510 = vmul.f32 %v496, %v214
      %v511 = vmul.f32 %v499, %v214
      %v512 = vmul.f32 %v504, %v214
      %v513 = vmul.f32 %v507, %v214
      %v514 = vmax.f32 %v510, 0.0
      %v515 = vmax.f32 %v511, 0.0
      %v516 = vmax.f32 %v512, 0.0
      %v517 = vmax.f32 %v513, 0.0
      %v518 = vrsqrt.pop %v514
      %v519 = vmul.f32 %v514, %v518
      %vm520 = vcmp.eq.f32.partialorder %v514, inf
      %v521 = vsel %vm520, %v514, %v519
      %vm522 = vcmp.eq.f32.partialorder %v514, 0.0
      %v523 = vand.u32 %v514, 2147483648
      %v524 = vsel %vm522, %v523, %v521
      %v525 = vrsqrt.pop %v515
      %v526 = vmul.f32 %v515, %v525
      %vm527 = vcmp.eq.f32.partialorder %v515, inf
      %v528 = vsel %vm527, %v515, %v526
      %vm529 = vcmp.eq.f32.partialorder %v515, 0.0
      %v530 = vand.u32 %v515, 2147483648
      %v531 = vsel %vm529, %v530, %v528
      %v532 = vrsqrt.pop %v516
      %v533 = vmul.f32 %v516, %v532
      %vm534 = vcmp.eq.f32.partialorder %v516, inf
      %v535 = vsel %vm534, %v516, %v533
      %vm536 = vcmp.eq.f32.partialorder %v516, 0.0
      %v537 = vand.u32 %v516, 2147483648
      %v538 = vsel %vm536, %v537, %v535
      %v539 = vrsqrt.pop %v517
      %v540 = vmul.f32 %v517, %v539
      %vm541 = vcmp.eq.f32.partialorder %v517, inf
      %v542 = vsel %vm541, %v517, %v540
      %vm543 = vcmp.eq.f32.partialorder %v517, 0.0
      %v544 = vand.u32 %v517, 2147483648
      %v545 = vsel %vm543, %v544, %v542
      %547 = vset.pattern.permute.xlu0 0
      %548 = vperm.xlu0 %547, %v200
      %v549 = vpop.permute.xlu0 %548
      %552 = vset.pattern.permute.xlu0 0
      %553 = vperm.xlu0 %552, %v201
      %v554 = vpop.permute.xlu0 %553
      %557 = vset.pattern.permute.xlu0 0
      %558 = vperm.xlu0 %557, %v202
      %v559 = vpop.permute.xlu0 %558
      %562 = vset.pattern.permute.xlu0 0
      %563 = vperm.xlu0 %562, %v203
      %v564 = vpop.permute.xlu0 %563
      %v566 = vmul.f32 %v524, %v549
      %v567 = vmul.f32 %v531, %v554
      %v568 = vmul.f32 %v538, %v559
      %v569 = vmul.f32 %v545, %v564
      %v570 = vmul.f32 %v566, 1.442695
      %v571 = vpow.pop %v570
      %v572 = vmul.f32 %v567, 1.442695
      %v573 = vpow.pop %v572
      %v574 = vmul.f32 %v568, 1.442695
      %v575 = vpow.pop %v574
      %v576 = vmul.f32 %v569, 1.442695
      %v577 = vpow.pop %v576
      %v578 = vmax.f32 %v571, 1e-05
      %v579 = vmax.f32 %v573, 1e-05
      %v580 = vmax.f32 %v575, 1e-05
      %v581 = vmax.f32 %v577, 1e-05
      %v582 = vmin.f32 %v578, 100000.0
      %v583 = vmin.f32 %v579, 100000.0
      %v584 = vmin.f32 %v580, 100000.0
      %v585 = vmin.f32 %v581, 100000.0
      %v586 = vmul.f32 %v391, %v582
      %v587 = vmul.f32 %v392, %v583
      %v588 = vmul.f32 %v393, %v584
      %v589 = vmul.f32 %v394, %v585
      %v590 = vsel %vm396, %v586, -1e+32
      %v591 = vsel %vm396, %v587, -1e+32
      %v592 = vsel %vm396, %v588, -1e+32
      %v593 = vsel %vm396, %v589, -1e+32
      %v594 = vsel %vm218, %v590, -inf
      %595 = vmax.xlane.f32.xlu0 %v594
      %v596 = vpop.xlane.xlu0 %595
      %v597 = vsel %vm218, %v591, -inf
      %598 = vmax.xlane.f32.xlu0 %v597
      %v599 = vpop.xlane.xlu0 %598
      %v600 = vsel %vm218, %v592, -inf
      %601 = vmax.xlane.f32.xlu0 %v600
      %v602 = vpop.xlane.xlu0 %601
      %v603 = vsel %vm218, %v593, -inf
      %604 = vmax.xlane.f32.xlu0 %v603
      %v605 = vpop.xlane.xlu0 %604
      %v606 = vsub.f32 %v590, %v596
      %v607 = vsub.f32 %v591, %v599
      %v608 = vsub.f32 %v592, %v602
      %v609 = vsub.f32 %v593, %v605
      %v610 = vmul.f32 %v606, 1.442695
      %v611 = vpow.pop %v610
      %v612 = vmul.f32 %v607, 1.442695
      %v613 = vpow.pop %v612
      %v614 = vmul.f32 %v608, 1.442695
      %v615 = vpow.pop %v614
      %v616 = vmul.f32 %v609, 1.442695
      %v617 = vpow.pop %v616
      %v618 = vsel %vm218, %v611, 0.0
      %619 = vadd.xlane.f32.xlu0 %v618
      %v620 = vpop.xlane.xlu0 %619
      %v621 = vsel %vm218, %v613, 0.0
      %622 = vadd.xlane.f32.xlu0 %v621
      %v623 = vpop.xlane.xlu0 %622
      %v624 = vsel %vm218, %v615, 0.0
      %625 = vadd.xlane.f32.xlu0 %v624
      %v626 = vpop.xlane.xlu0 %625
      %v627 = vsel %vm218, %v617, 0.0
      %628 = vadd.xlane.f32.xlu0 %v627
      %v629 = vpop.xlane.xlu0 %628
      %v630 = vrcp.pop %v620
      %v631 = vrcp.pop %v623
      %v632 = vrcp.pop %v626
      %v633 = vrcp.pop %v629
      %v634 = vmul.f32 %v611, %v630
      %v635 = vmul.f32 %v613, %v631
      %v636 = vmul.f32 %v615, %v632
      %v637 = vmul.f32 %v617, %v633
      %v638 = vpack.c.bf16 %v634, %v634
      %v639 = vpack.c.bf16 %v635, %v635
      %v640 = vpack.c.bf16 %v636, %v636
      %v641 = vpack.c.bf16 %v637, %v637
      %v643 = vsel %vm218, %v638, 0
      %v646 = vsel %vm457, %v196, 0
      %648 = vmatprep.subr.bf16.mxu0 0
      %649 = vmatpush1.bf16.msra.mxu0 0
      %650 = vmatprep.subr.bf16.mxu0 0
      %651 = vmatpush1.bf16.msra.mxu0 0
      %652 = vmatprep.subr.bf16.mxu0 0
      %653 = vmatpush1.bf16.msra.mxu0 0
      %654 = vmatprep.subr.bf16.mxu0 0
      %655 = vmatpush1.bf16.msra.mxu0 0
      %656 = vmatprep.subr.bf16.mxu0 0
      %657 = vmatpush1.bf16.msra.mxu0 0
      %658 = vmatprep.subr.bf16.mxu0 0
      %659 = vmatpush1.bf16.msra.mxu0 0
      %660 = vmatprep.subr.bf16.mxu0 0
      %661 = vmatpush1.bf16.msra.mxu0 0
      %662 = vmatprep.subr.bf16.mxu0 0
      %663 = vmatpush1.bf16.msra.mxu0 %v646
      %664 = vmatprep.subr.bf16.mxu0 0
      %665 = vmatpush2.bf16.msra.mxu0 0
      %666 = vmatprep.subr.bf16.mxu0 0
      %667 = vmatpush2.bf16.msra.mxu0 0
      %668 = vmatprep.subr.bf16.mxu0 0
      %669 = vmatpush2.bf16.msra.mxu0 0
      %670 = vmatprep.subr.bf16.mxu0 0
      %671 = vmatpush2.bf16.msra.mxu0 0
      %672 = vmatprep.subr.bf16.mxu0 0
      %673 = vmatpush2.bf16.msra.mxu0 0
      %674 = vmatprep.subr.bf16.mxu0 0
      %675 = vmatpush2.bf16.msra.mxu0 0
      %676 = vmatprep.subr.bf16.mxu0 0
      %677 = vmatpush2.bf16.msra.mxu0 0
      %678 = vmatprep.subr.bf16.mxu0 0
      %679 = vmatpush2.bf16.msra.mxu0 0
      %680 = vmatprep.mubr.bf16.mxu0 0
      %681 = vmatmul.mubr.bf16.gmra.mxu0 %v643
      %v682 = vpop.f32.mrf.mxu0
      %v683 = vadd.f32 0.0, %v682
      %v684 = vpop.f32.mrf.mxu0
      %v685 = vpop.f32.mrf.mxu0
      %v686 = vpop.f32.mrf.mxu0
      %687 = vdwg.mxu0
      %v689 = vsel %vm218, %v639, 0
      %v692 = vsel %vm457, %v197, 0
      %694 = vmatprep.subr.bf16.mxu0 0
      %695 = vmatpush1.bf16.msra.mxu0 0
      %696 = vmatprep.subr.bf16.mxu0 0
      %697 = vmatpush1.bf16.msra.mxu0 0
      %698 = vmatprep.subr.bf16.mxu0 0
      %699 = vmatpush1.bf16.msra.mxu0 0
      %700 = vmatprep.subr.bf16.mxu0 0
      %701 = vmatpush1.bf16.msra.mxu0 0
      %702 = vmatprep.subr.bf16.mxu0 0
      %703 = vmatpush1.bf16.msra.mxu0 0
      %704 = vmatprep.subr.bf16.mxu0 0
      %705 = vmatpush1.bf16.msra.mxu0 0
      %706 = vmatprep.subr.bf16.mxu0 0
      %707 = vmatpush1.bf16.msra.mxu0 0
      %708 = vmatprep.subr.bf16.mxu0 0
      %709 = vmatpush1.bf16.msra.mxu0 %v692
      %710 = vmatprep.subr.bf16.mxu0 0
      %711 = vmatpush2.bf16.msra.mxu0 0
      %712 = vmatprep.subr.bf16.mxu0 0
      %713 = vmatpush2.bf16.msra.mxu0 0
      %714 = vmatprep.subr.bf16.mxu0 0
      %715 = vmatpush2.bf16.msra.mxu0 0
      %716 = vmatprep.subr.bf16.mxu0 0
      %717 = vmatpush2.bf16.msra.mxu0 0
      %718 = vmatprep.subr.bf16.mxu0 0
      %719 = vmatpush2.bf16.msra.mxu0 0
      %720 = vmatprep.subr.bf16.mxu0 0
      %721 = vmatpush2.bf16.msra.mxu0 0
      %722 = vmatprep.subr.bf16.mxu0 0
      %723 = vmatpush2.bf16.msra.mxu0 0
      %724 = vmatprep.subr.bf16.mxu0 0
      %725 = vmatpush2.bf16.msra.mxu0 0
      %726 = vmatprep.mubr.bf16.mxu0 0
      %727 = vmatmul.mubr.bf16.gmra.mxu0 %v689
      %v728 = vpop.f32.mrf.mxu0
      %v729 = vadd.f32 0.0, %v728
      %v730 = vpop.f32.mrf.mxu0
      %v731 = vpop.f32.mrf.mxu0
      %v732 = vpop.f32.mrf.mxu0
      %733 = vdwg.mxu0
      %v735 = vsel %vm218, %v640, 0
      %v738 = vsel %vm457, %v198, 0
      %740 = vmatprep.subr.bf16.mxu0 0
      %741 = vmatpush1.bf16.msra.mxu0 0
      %742 = vmatprep.subr.bf16.mxu0 0
      %743 = vmatpush1.bf16.msra.mxu0 0
      %744 = vmatprep.subr.bf16.mxu0 0
      %745 = vmatpush1.bf16.msra.mxu0 0
      %746 = vmatprep.subr.bf16.mxu0 0
      %747 = vmatpush1.bf16.msra.mxu0 0
      %748 = vmatprep.subr.bf16.mxu0 0
      %749 = vmatpush1.bf16.msra.mxu0 0
      %750 = vmatprep.subr.bf16.mxu0 0
      %751 = vmatpush1.bf16.msra.mxu0 0
      %752 = vmatprep.subr.bf16.mxu0 0
      %753 = vmatpush1.bf16.msra.mxu0 0
      %754 = vmatprep.subr.bf16.mxu0 0
      %755 = vmatpush1.bf16.msra.mxu0 %v738
      %756 = vmatprep.subr.bf16.mxu0 0
      %757 = vmatpush2.bf16.msra.mxu0 0
      %758 = vmatprep.subr.bf16.mxu0 0
      %759 = vmatpush2.bf16.msra.mxu0 0
      %760 = vmatprep.subr.bf16.mxu0 0
      %761 = vmatpush2.bf16.msra.mxu0 0
      %762 = vmatprep.subr.bf16.mxu0 0
      %763 = vmatpush2.bf16.msra.mxu0 0
      %764 = vmatprep.subr.bf16.mxu0 0
      %765 = vmatpush2.bf16.msra.mxu0 0
      %766 = vmatprep.subr.bf16.mxu0 0
      %767 = vmatpush2.bf16.msra.mxu0 0
      %768 = vmatprep.subr.bf16.mxu0 0
      %769 = vmatpush2.bf16.msra.mxu0 0
      %770 = vmatprep.subr.bf16.mxu0 0
      %771 = vmatpush2.bf16.msra.mxu0 0
      %772 = vmatprep.mubr.bf16.mxu0 0
      %773 = vmatmul.mubr.bf16.gmra.mxu0 %v735
      %v774 = vpop.f32.mrf.mxu0
      %v775 = vadd.f32 0.0, %v774
      %v776 = vpop.f32.mrf.mxu0
      %v777 = vpop.f32.mrf.mxu0
      %v778 = vpop.f32.mrf.mxu0
      %779 = vdwg.mxu0
      %v781 = vsel %vm218, %v641, 0
      %v784 = vsel %vm457, %v199, 0
      %786 = vmatprep.subr.bf16.mxu0 0
      %787 = vmatpush1.bf16.msra.mxu0 0
      %788 = vmatprep.subr.bf16.mxu0 0
      %789 = vmatpush1.bf16.msra.mxu0 0
      %790 = vmatprep.subr.bf16.mxu0 0
      %791 = vmatpush1.bf16.msra.mxu0 0
      %792 = vmatprep.subr.bf16.mxu0 0
      %793 = vmatpush1.bf16.msra.mxu0 0
      %794 = vmatprep.subr.bf16.mxu0 0
      %795 = vmatpush1.bf16.msra.mxu0 0
      %796 = vmatprep.subr.bf16.mxu0 0
      %797 = vmatpush1.bf16.msra.mxu0 0
      %798 = vmatprep.subr.bf16.mxu0 0
      %799 = vmatpush1.bf16.msra.mxu0 0
      %800 = vmatprep.subr.bf16.mxu0 0
      %801 = vmatpush1.bf16.msra.mxu0 %v784
      %802 = vmatprep.subr.bf16.mxu0 0
      %803 = vmatpush2.bf16.msra.mxu0 0
      %804 = vmatprep.subr.bf16.mxu0 0
      %805 = vmatpush2.bf16.msra.mxu0 0
      %806 = vmatprep.subr.bf16.mxu0 0
      %807 = vmatpush2.bf16.msra.mxu0 0
      %808 = vmatprep.subr.bf16.mxu0 0
      %809 = vmatpush2.bf16.msra.mxu0 0
      %810 = vmatprep.subr.bf16.mxu0 0
      %811 = vmatpush2.bf16.msra.mxu0 0
      %812 = vmatprep.subr.bf16.mxu0 0
      %813 = vmatpush2.bf16.msra.mxu0 0
      %814 = vmatprep.subr.bf16.mxu0 0
      %815 = vmatpush2.bf16.msra.mxu0 0
      %816 = vmatprep.subr.bf16.mxu0 0
      %817 = vmatpush2.bf16.msra.mxu0 0
      %818 = vmatprep.mubr.bf16.mxu0 0
      %819 = vmatmul.mubr.bf16.gmra.mxu0 %v781
      %v820 = vpop.f32.mrf.mxu0
      %v821 = vadd.f32 0.0, %v820
      %v822 = vpop.f32.mrf.mxu0
      %v823 = vpop.f32.mrf.mxu0
      %v824 = vpop.f32.mrf.mxu0
      %825 = vdwg.mxu0
      %v826 = vpack.c.bf16 %v683, %v683
      %v827 = vpack.c.bf16 %v729, %v729
      %v828 = vpack.c.bf16 %v775, %v775
      %v829 = vpack.c.bf16 %v821, %v821
      %vm830 = vcmask 60416
      %831 = vst.msk [vmem:[%s190] sm:$0xf] %vm830, %v826
      %832 = vst.msk [vmem:[%s190 + $0x4] sm:$0xf] %vm830, %v827
      %833 = vst.msk [vmem:[%s190 + $0x8] sm:$0xf] %vm830, %v828
      %834 = vst.msk [vmem:[%s190 + $0xc] sm:$0xf] %vm830, %v829
      %p835 = scmp.lt.s32.totalorder %s14, 1
      %s836 = scalar_select %p835, %s14, 1
      %s837 = smul.addr %s836, 4
      %s838 = smul.addr %s837, 4
      %s839 = scalar_lea.vmem %s3, %s838
      // Predicated region
      $region33: #{architecture_forward.13} parent=31 // pred_check
        %p840 = pneg %p105
      $region34: #{architecture_forward.13} parent=31 // pred_check_branch
        %842 = sbr.rel (%p840) target = $region36
      $region35: #{architecture_forward.13} parent=31 // pred_region
        _
      $region36: #{architecture_forward.13} parent=31 // pred_fallthru
        _
    $region32: #{architecture_forward.13} parent=5 // pred_fallthru
      _
    %p843 = scmp.le.s32.totalorder 2, %s9
    // Predicated region
    $region37: #{architecture_forward.13} parent=5 // pred_check
      %p844 = pneg %p843
    $region38: #{architecture_forward.13} parent=5 // pred_check_branch
      %846 = sbr.rel (%p844) target = $region40
    $region39: #{architecture_forward.13} parent=5 // pred_region
      %s847 = ssub.s32 %s9, 2
      // Predicated region
      $region41: #{architecture_forward.13} parent=39 // pred_check
        %p848 = pneg %p111
      $region42: #{architecture_forward.13} parent=39 // pred_check_branch
        %850 = sbr.rel (%p848) target = $region44
      $region43: #{architecture_forward.13} parent=39 // pred_region
        %p851 = scmp.lt.s32.totalorder %s15, 1
        %s852 = scalar_select %p851, %s15, 1
        %s853 = smul.addr %s852, 4
        %s854 = smul.addr %s853, 4
        %s855 = scalar_lea.vmem %s3, %s854
      $region44: #{architecture_forward.13} parent=39 // pred_fallthru
        _
    $region40: #{architecture_forward.13} parent=5 // pred_fallthru
      _
  $region6: #{architecture_forward.13} parent=0 // loop_footer
    %s13 = sadd.s32 1, %s9
  $region7: #{architecture_forward.13} parent=0 // loop_footer_branch
    %8 = sbr.rel target = $region3
  $region8: #{architecture_forward.13} parent=0 // loop_exit
    _

// kernel: architecture_forward.23
$region0: #{architecture_forward.23}
  #allocation0 [shape = 'u32[]', space=smem, size = 0x4, offset = 0x4, fixed_abs, tag = 'smem constant byte address 0x4 - core index']
  #allocation1 [shape = 'u32[144,128]{1,0:T(1,128)}', space=vmem, size = 0x12000, scoped, tag = 'internal scratch']
  %s0 = inlined_call_operand.vmem [shape: f32[16,32], index: 0, kind: input, shape index: {}]
  %s1 = inlined_call_operand.vmem [shape: bf16[32,64], index: 1, kind: input, shape index: {}]
  %s2 = inlined_call_operand.vmem [shape: f32[1,64], index: 2, kind: input, shape index: {}]
  %s3 = inlined_call_operand.vmem [shape: bf16[64,32], index: 3, kind: input, shape index: {}]
  %s4 = inlined_call_operand.vmem [shape: f32[1,32], index: 4, kind: input, shape index: {}]
  %s5 = inlined_call_operand.vmem [shape: f32[1,32], index: 5, kind: input, shape index: {}]
  %s6 = inlined_call_operand.vmem [shape: f32[1,32], index: 6, kind: input, shape index: {}]
  %s7 = inlined_call_operand.hbm [shape: f32[16,32], index: 7, kind: output, shape index: {}]
  %s8 = sld [smem:[#allocation0]]
  $region38: #{architecture_forward.23} parent=0
    _
  %s10 = ssub.s32 1, %s8
  %s11 = scalar_select 0, %s10, %s8
  $region1: #{architecture_forward.23} parent=0
    #allocation2 [shape = 'u8[8192]{0}', space=vmem, size = 0x2000, scoped, tag = 'output window, operand 0, single buffered']
    #allocation3 [shape = 's32[1]{0}', space=sflag, size = 0x4, scoped, tag = 'scoped memory for architecture_forward.23']
    %12 = vsyncpa [#allocation3], 0
    // Predicated region
    $region2: #{architecture_forward.23} parent=1 // pred_check
      _
    $region3: #{architecture_forward.23} parent=1 // pred_check_branch
      %14 = sbr.rel (0) target = $region5
    $region4: #{architecture_forward.23} parent=1 // pred_region
      _
    $region5: #{architecture_forward.23} parent=1 // pred_fallthru
      _
    // Predicated region
    $region6: #{architecture_forward.23} parent=1 // pred_check
      _
    $region7: #{architecture_forward.23} parent=1 // pred_check_branch
      %16 = sbr.rel (0) target = $region9
    $region8: #{architecture_forward.23} parent=1 // pred_region
      _
    $region9: #{architecture_forward.23} parent=1 // pred_fallthru
      _
    // Predicated region
    $region10: #{architecture_forward.23} parent=1 // pred_check
      _
    $region11: #{architecture_forward.23} parent=1 // pred_check_branch
      %18 = sbr.rel (0) target = $region13
    $region12: #{architecture_forward.23} parent=1 // pred_region
      _
    $region13: #{architecture_forward.23} parent=1 // pred_fallthru
      _
    // Predicated region
    $region14: #{architecture_forward.23} parent=1 // pred_check
      _
    $region15: #{architecture_forward.23} parent=1 // pred_check_branch
      %20 = sbr.rel (0) target = $region17
    $region16: #{architecture_forward.23} parent=1 // pred_region
      _
    $region17: #{architecture_forward.23} parent=1 // pred_fallthru
      _
    // Predicated region
    $region18: #{architecture_forward.23} parent=1 // pred_check
      _
    $region19: #{architecture_forward.23} parent=1 // pred_check_branch
      %22 = sbr.rel (0) target = $region21
    $region20: #{architecture_forward.23} parent=1 // pred_region
      _
    $region21: #{architecture_forward.23} parent=1 // pred_fallthru
      _
    // Predicated region
    $region22: #{architecture_forward.23} parent=1 // pred_check
      _
    $region23: #{architecture_forward.23} parent=1 // pred_check_branch
      %24 = sbr.rel (0) target = $region25
    $region24: #{architecture_forward.23} parent=1 // pred_region
      _
    $region25: #{architecture_forward.23} parent=1 // pred_fallthru
      _
    // Predicated region
    $region26: #{architecture_forward.23} parent=1 // pred_check
      _
    $region27: #{architecture_forward.23} parent=1 // pred_check_branch
      %26 = sbr.rel (0) target = $region29
    $region28: #{architecture_forward.23} parent=1 // pred_region
      _
    $region29: #{architecture_forward.23} parent=1 // pred_fallthru
      _
    %v28 = vld [vmem:[%s0] sm:$0xff]
    %v29 = vld [vmem:[%s0 + $0x8] sm:$0xff]
    %v30 = vpack.c.bf16 %v29, %v28
    %v31 = vld [vmem:[%s1] sm:$0xf]
    %v32 = vld [vmem:[%s1 + $0x4] sm:$0xf]
    %v33 = vld [vmem:[%s1 + $0x8] sm:$0xf]
    %v34 = vld [vmem:[%s1 + $0xc] sm:$0xf]
    %v35 = vld [vmem:[%s2] sm:$0x1]
    %v37 = vlaneseq
    %v38 = vshrl.u32 %v37, 7
    %v39 = vsub.s32 0, %v38
    %v40 = vrot.slane %v35, %v39
    %v46 = vunpack.c.l.b16 %v31
    %v47 = vunpack.c.l.b16 %v32
    %v48 = vunpack.c.l.b16 %v33
    %v49 = vunpack.c.l.b16 %v34
    %v50 = vpack.c.b16 %v47, %v46
    %v51 = vpack.c.b16 %v49, %v48
    %vm54 = vcmask 261120
    %v56 = vsel %vm54, %v30, 0
    %58 = vmatprep.subr.bf16.mxu0 0
    %59 = vmatpush1.bf16.msra.mxu0 0
    %60 = vmatprep.subr.bf16.mxu0 0
    %61 = vmatpush1.bf16.msra.mxu0 0
    %62 = vmatprep.subr.bf16.mxu0 0
    %63 = vmatpush1.bf16.msra.mxu0 0
    %64 = vmatprep.subr.bf16.mxu0 0
    %65 = vmatpush1.bf16.msra.mxu0 0
    %66 = vmatprep.subr.bf16.mxu0 0
    %67 = vmatpush1.bf16.msra.mxu0 0
    %68 = vmatprep.subr.bf16.mxu0 0
    %69 = vmatpush1.bf16.msra.mxu0 0
    %70 = vmatprep.subr.bf16.mxu0 0
    %71 = vmatpush1.bf16.msra.mxu0 %v51
    %72 = vmatprep.subr.bf16.mxu0 0
    %73 = vmatpush1.bf16.msra.mxu0 %v50
    %74 = vmatprep.subr.bf16.mxu0 0
    %75 = vmatpush2.bf16.msra.mxu0 0
    %76 = vmatprep.subr.bf16.mxu0 0
    %77 = vmatpush2.bf16.msra.mxu0 0
    %78 = vmatprep.subr.bf16.mxu0 0
    %79 = vmatpush2.bf16.msra.mxu0 0
    %80 = vmatprep.subr.bf16.mxu0 0
    %81 = vmatpush2.bf16.msra.mxu0 0
    %82 = vmatprep.subr.bf16.mxu0 0
    %83 = vmatpush2.bf16.msra.mxu0 0
    %84 = vmatprep.subr.bf16.mxu0 0
    %85 = vmatpush2.bf16.msra.mxu0 0
    %86 = vmatprep.subr.bf16.mxu0 0
    %87 = vmatpush2.bf16.msra.mxu0 0
    %88 = vmatprep.subr.bf16.mxu0 0
    %89 = vmatpush2.bf16.msra.mxu0 0
    %90 = vmatprep.mubr.bf16.mxu0 0
    %91 = vmatmul.mubr.bf16.gmra.mxu0 %v56
    %v92 = vpop.f32.mrf.mxu0
    %v93 = vadd.f32 %v40, %v92
    %v94 = vpop.f32.mrf.mxu0
    %v95 = vpop.f32.mrf.mxu0
    %v96 = vadd.f32 %v40, %v95
    %v97 = vpop.f32.mrf.mxu0
    %98 = vdwg.mxu0
    %v99 = vmax.f32 %v93, 0.0
    %v100 = vmax.f32 %v96, 0.0
    %v101 = vpack.c.bf16 %v100, %v99
    %v102 = vld [vmem:[%s3] sm:$0xf]
    %v103 = vld [vmem:[%s3 + $0x4] sm:$0xf]
    %v104 = vld [vmem:[%s3 + $0x8] sm:$0xf]
    %v105 = vld [vmem:[%s3 + $0xc] sm:$0xf]
    %v106 = vld [vmem:[%s3 + $0x10] sm:$0xf]
    %v107 = vld [vmem:[%s3 + $0x14] sm:$0xf]
    %v108 = vld [vmem:[%s3 + $0x18] sm:$0xf]
    %v109 = vld [vmem:[%s3 + $0x1c] sm:$0xf]
    %v110 = vld [vmem:[%s4] sm:$0x1]
    %v112 = vlaneseq
    %v113 = vshrl.u32 %v112, 7
    %v114 = vsub.s32 0, %v113
    %v115 = vrot.slane %v110, %v114
    %v125 = vunpack.c.l.b16 %v102
    %v126 = vunpack.c.l.b16 %v103
    %v127 = vunpack.c.l.b16 %v104
    %v128 = vunpack.c.l.b16 %v105
    %v129 = vunpack.c.l.b16 %v106
    %v130 = vunpack.c.l.b16 %v107
    %v131 = vunpack.c.l.b16 %v108
    %v132 = vunpack.c.l.b16 %v109
    %v133 = vpack.c.b16 %v126, %v125
    %v134 = vpack.c.b16 %v128, %v127
    %v135 = vpack.c.b16 %v130, %v129
    %v136 = vpack.c.b16 %v132, %v131
    %vm141 = vcmask 523264
    %v143 = vsel %vm141, %v101, 0
    %145 = vmatprep.subr.bf16.mxu0 0
    %146 = vmatpush1.bf16.msra.mxu0 0
    %147 = vmatprep.subr.bf16.mxu0 0
    %148 = vmatpush1.bf16.msra.mxu0 0
    %149 = vmatprep.subr.bf16.mxu0 0
    %150 = vmatpush1.bf16.msra.mxu0 0
    %151 = vmatprep.subr.bf16.mxu0 0
    %152 = vmatpush1.bf16.msra.mxu0 0
    %153 = vmatprep.subr.bf16.mxu0 0
    %154 = vmatpush1.bf16.msra.mxu0 %v136
    %155 = vmatprep.subr.bf16.mxu0 0
    %156 = vmatpush1.bf16.msra.mxu0 %v135
    %157 = vmatprep.subr.bf16.mxu0 0
    %158 = vmatpush1.bf16.msra.mxu0 %v134
    %159 = vmatprep.subr.bf16.mxu0 0
    %160 = vmatpush1.bf16.msra.mxu0 %v133
    %161 = vmatprep.subr.bf16.mxu0 0
    %162 = vmatpush2.bf16.msra.mxu0 0
    %163 = vmatprep.subr.bf16.mxu0 0
    %164 = vmatpush2.bf16.msra.mxu0 0
    %165 = vmatprep.subr.bf16.mxu0 0
    %166 = vmatpush2.bf16.msra.mxu0 0
    %167 = vmatprep.subr.bf16.mxu0 0
    %168 = vmatpush2.bf16.msra.mxu0 0
    %169 = vmatprep.subr.bf16.mxu0 0
    %170 = vmatpush2.bf16.msra.mxu0 0
    %171 = vmatprep.subr.bf16.mxu0 0
    %172 = vmatpush2.bf16.msra.mxu0 0
    %173 = vmatprep.subr.bf16.mxu0 0
    %174 = vmatpush2.bf16.msra.mxu0 0
    %175 = vmatprep.subr.bf16.mxu0 0
    %176 = vmatpush2.bf16.msra.mxu0 0
    %177 = vmatprep.mubr.bf16.mxu0 0
    %178 = vmatmul.mubr.bf16.gmra.mxu0 %v143
    %v179 = vpop.f32.mrf.mxu0
    %v180 = vadd.f32 %v115, %v179
    %v181 = vpop.f32.mrf.mxu0
    %v182 = vpop.f32.mrf.mxu0
    %v183 = vadd.f32 %v115, %v182
    %v184 = vpop.f32.mrf.mxu0
    %185 = vdwg.mxu0
    %v186 = vadd.f32 %v180, %v28
    %v187 = vadd.f32 %v183, %v29
    %v188 = vsel %vm54, %v186, 0.0
    %189 = vadd.xlane.f32.xlu0 %v188
    %v190 = vpop.xlane.xlu0 %189
    %v191 = vsel %vm54, %v187, 0.0
    %192 = vadd.xlane.f32.xlu0 %v191
    %v193 = vpop.xlane.xlu0 %192
    %v194 = vrcp.pop 32.0
    %v195 = vmul.f32 %v190, %v194
    %v196 = vmul.f32 %v193, %v194
    %v197 = vsub.f32 %v186, %v195
    %v198 = vsub.f32 %v187, %v196
    %v199 = vmul.f32 %v197, %v197
    %v200 = vmul.f32 %v198, %v198
    %v201 = vsel %vm54, %v199, 0.0
    %202 = vadd.xlane.f32.xlu0 %v201
    %v203 = vpop.xlane.xlu0 %202
    %v204 = vsel %vm54, %v200, 0.0
    %205 = vadd.xlane.f32.xlu0 %v204
    %v206 = vpop.xlane.xlu0 %205
    %v207 = vmul.f32 %v203, %v194
    %v208 = vmul.f32 %v206, %v194
    %v209 = vadd.f32 %v207, 1e-05
    %v210 = vadd.f32 %v208, 1e-05
    %v211 = vrsqrt.pop %v209
    %v212 = vrsqrt.pop %v210
    %v213 = vmul.f32 %v197, %v211
    %v214 = vmul.f32 %v198, %v212
    %v215 = vld [vmem:[%s5] sm:$0x1]
    %v217 = vlaneseq
    %v218 = vshrl.u32 %v217, 7
    %v219 = vsub.s32 0, %v218
    %v220 = vrot.slane %v215, %v219
    %v222 = vmul.f32 %v213, %v220
    %v223 = vmul.f32 %v214, %v220
    %v224 = vld [vmem:[%s6] sm:$0x1]
    %v226 = vlaneseq
    %v227 = vshrl.u32 %v226, 7
    %v228 = vsub.s32 0, %v227
    %v229 = vrot.slane %v224, %v228
    %v231 = vadd.f32 %v222, %v229
    %v232 = vadd.f32 %v223, %v229
    %233 = vst.msk [vmem:[#allocation2] sm:$0xff] %vm54, %v231
    %234 = vst.msk [vmem:[#allocation2 + $0x8] sm:$0xff] %vm54, %v232
    // Predicated region
    $region30: #{architecture_forward.23} parent=1 // pred_check
      _
    $region31: #{architecture_forward.23} parent=1 // pred_check_branch
      %236 = sbr.rel (0) target = $region33
    $region32: #{architecture_forward.23} parent=1 // pred_region
      %s238 = ssub.s32 256, 256
      %239 = vsyncadd [#allocation3], %s238
      %s240 = sshll.u32 [#allocation2], 4
      %s241 = int_to_ptr.vmem [resolvable:$true] %s240
      %246 = dma.vmem_to_hbm [thread:$0]  %s241, 256, %s7, [#allocation3], 128, 128, 8
    $region33: #{architecture_forward.23} parent=1 // pred_fallthru
      _
    // Predicated region
    $region34: #{architecture_forward.23} parent=1 // pred_check
      _
    $region35: #{architecture_forward.23} parent=1 // pred_check_branch
      %248 = sbr.rel (0) target = $region37
    $region36: #{architecture_forward.23} parent=1 // pred_region
      %249 = dma.done [#allocation3], 256
    $region37: #{architecture_forward.23} parent=1 // pred_fallthru
      _
    %250 = vsyncpa [#allocation3], 1

// kernel: architecture_forward.21
$region0: #{architecture_forward.21}
  #allocation0 [shape = 'u32[]', space=smem, size = 0x4, offset = 0x4, fixed_abs, tag = 'smem constant byte address 0x4 - core index']
  #allocation1 [shape = 'u32[144,128]{1,0:T(1,128)}', space=vmem, size = 0x12000, scoped, tag = 'internal scratch']
  %s0 = inlined_call_operand.vmem [shape: bf16[2,4,8,8], index: 0, kind: input, shape index: {}]
  %s1 = inlined_call_operand.vmem [shape: bf16[2,4,8,8], index: 1, kind: input, shape index: {}]
  %s2 = inlined_call_operand.vmem [shape: f32[4,8,1], index: 2, kind: input, shape index: {}]
  %s3 = inlined_call_operand.vmem [shape: bf16[2,4,8,8], index: 3, kind: output, shape index: {}]
  %s4 = sld [smem:[#allocation0]]
  $region45: #{architecture_forward.21} parent=0
    _
  %s6 = ssub.s32 1, %s4
  %s7 = scalar_select 0, %s6, %s4
  loop: start=0, step=1, limit=4
  $region2: #{architecture_forward.21} parent=0 // loop_pre_header
    _
  $region3: #{architecture_forward.21} parent=0 // loop_header
    %s9 = sphi 0, %s13
    %p10 = scmp.ge.s32.totalorder %s9, 4
    %s19 = sphi 0, %s21
    %s22 = sphi 0, %s19
    %s23 = sphi 0, %s22
    %s39 = sphi 0, %s23
    %s45 = sphi 0, %s47
    %s48 = sphi 0, %s45
    %s49 = sphi 0, %s48
    %s65 = sphi 0, %s49
    %s69 = sphi 0, %s69
    %s71 = sphi 0, %s69
    %s72 = sphi 0, %s71
    %s86 = sphi 0, %s72
    %s92 = sphi 0, %s94
    %s95 = sphi 0, %s92
    %s96 = sphi 0, %s95
    %s112 = sphi 0, %s96
  $region4: #{architecture_forward.21} parent=0 // loop_header_branch
    %12 = sbr.rel (%p10) target = $region8
  $region5: #{architecture_forward.21} parent=0 // loop_body
    %s14 = ssub.s32 %s9, 1
    %s15 = ssub.s32 %s9, 2
    %s16 = sadd.s32 %s9, 1
    %s17 = ssub.s32 %s9, %s16
    %p18 = scmp.eq.s32.totalorder %s17, 0
    %s20 = sadd.s32 %s19, 1
    %s21 = scalar_select %p18, %s19, %s20
    %p24 = pneg %p18
    %p25 = scmp.eq.s32.totalorder %s9, 1
    %p26 = por %p24, %p25
    %p27 = scmp.ne.s32.totalorder %s19, %s22
    %p28 = scmp.eq.s32.totalorder %s9, 0
    %p29 = por %p27, %p28
    %p30 = scmp.ne.s32.totalorder %s19, %s22
    %p31 = scmp.eq.s32.totalorder %s14, 1
    %p32 = por %p30, %p31
    %p33 = scmp.ne.s32.totalorder %s22, %s23
    %p34 = scmp.eq.s32.totalorder %s14, 0
    %p35 = por %p33, %p34
    %p36 = scmp.ne.s32.totalorder %s22, %s23
    %p37 = scmp.eq.s32.totalorder %s15, 1
    %p38 = por %p36, %p37
    %p40 = scmp.ne.s32.totalorder %s23, %s39
    %p41 = scmp.eq.s32.totalorder %s15, 0
    %p42 = por %p40, %p41
    %s43 = ssub.s32 %s9, %s16
    %p44 = scmp.eq.s32.totalorder %s43, 0
    %s46 = sadd.s32 %s45, 1
    %s47 = scalar_select %p44, %s45, %s46
    %p50 = pneg %p44
    %p51 = scmp.eq.s32.totalorder %s9, 1
    %p52 = por %p50, %p51
    %p53 = scmp.ne.s32.totalorder %s45, %s48
    %p54 = scmp.eq.s32.totalorder %s9, 0
    %p55 = por %p53, %p54
    %p56 = scmp.ne.s32.totalorder %s45, %s48
    %p57 = scmp.eq.s32.totalorder %s14, 1
    %p58 = por %p56, %p57
    %p59 = scmp.ne.s32.totalorder %s48, %s49
    %p60 = scmp.eq.s32.totalorder %s14, 0
    %p61 = por %p59, %p60
    %p62 = scmp.ne.s32.totalorder %s48, %s49
    %p63 = scmp.eq.s32.totalorder %s15, 1
    %p64 = por %p62, %p63
    %p66 = scmp.ne.s32.totalorder %s49, %s65
    %p67 = scmp.eq.s32.totalorder %s15, 0
    %p68 = por %p66, %p67
    %s70 = sadd.s32 %s69, 1
    %p73 = scmp.eq.s32.totalorder %s9, 1
    %p74 = scmp.ne.s32.totalorder %s69, %s71
    %p75 = scmp.eq.s32.totalorder %s9, 0
    %p76 = por %p74, %p75
    %p77 = scmp.ne.s32.totalorder %s69, %s71
    %p78 = scmp.eq.s32.totalorder %s14, 1
    %p79 = por %p77, %p78
    %p80 = scmp.ne.s32.totalorder %s71, %s72
    %p81 = scmp.eq.s32.totalorder %s14, 0
    %p82 = por %p80, %p81
    %p83 = scmp.ne.s32.totalorder %s71, %s72
    %p84 = scmp.eq.s32.totalorder %s15, 1
    %p85 = por %p83, %p84
    %p87 = scmp.ne.s32.totalorder %s72, %s86
    %p88 = scmp.eq.s32.totalorder %s15, 0
    %p89 = por %p87, %p88
    %s90 = ssub.s32 %s9, %s16
    %p91 = scmp.eq.s32.totalorder %s90, 0
    %s93 = sadd.s32 %s92, 1
    %s94 = scalar_select %p91, %s92, %s93
    %p97 = pneg %p91
    %p98 = scmp.eq.s32.totalorder %s9, 1
    %p99 = por %p97, %p98
    %p100 = scmp.ne.s32.totalorder %s92, %s95
    %p101 = scmp.eq.s32.totalorder %s9, 0
    %p102 = por %p100, %p101
    %p103 = scmp.ne.s32.totalorder %s92, %s95
    %p104 = scmp.eq.s32.totalorder %s14, 1
    %p105 = por %p103, %p104
    %p106 = scmp.ne.s32.totalorder %s95, %s96
    %p107 = scmp.eq.s32.totalorder %s14, 0
    %p108 = por %p106, %p107
    %p109 = scmp.ne.s32.totalorder %s95, %s96
    %p110 = scmp.eq.s32.totalorder %s15, 1
    %p111 = por %p109, %p110
    %p113 = scmp.ne.s32.totalorder %s96, %s112
    %p114 = scmp.eq.s32.totalorder %s15, 0
    %p115 = por %p113, %p114
    %p116 = scmp.le.s32.totalorder 1, %s9
    %p117 = scmp.lt.s32.totalorder %s9, 3
    %p118 = pnand %p116, %p117
    %p119 = pneg %p118
    // Predicated region
    $region9: #{architecture_forward.21} parent=5 // pred_check
      _
    $region10: #{architecture_forward.21} parent=5 // pred_check_branch
      %121 = sbr.rel (%p118) target = $region12
    $region11: #{architecture_forward.21} parent=5 // pred_region
      %s122 = ssub.s32 %s9, 1
      // Predicated region
      $region13: #{architecture_forward.21} parent=11 // pred_check
        %p123 = pneg %p82
      $region14: #{architecture_forward.21} parent=11 // pred_check_branch
        %125 = sbr.rel (%p123) target = $region16
      $region15: #{architecture_forward.21} parent=11 // pred_region
        _
      $region16: #{architecture_forward.21} parent=11 // pred_fallthru
        _
    $region12: #{architecture_forward.21} parent=5 // pred_fallthru
      _
    %p126 = scmp.lt.s32.totalorder %s9, 2
    // Predicated region
    $region17: #{architecture_forward.21} parent=5 // pred_check
      %p127 = pneg %p126
    $region18: #{architecture_forward.21} parent=5 // pred_check_branch
      %129 = sbr.rel (%p127) target = $region20
    $region19: #{architecture_forward.21} parent=5 // pred_region
      // Predicated region
      $region21: #{architecture_forward.21} parent=19 // pred_check
        %p130 = pneg %p29
      $region22: #{architecture_forward.21} parent=19 // pred_check_branch
        %132 = sbr.rel (%p130) target = $region24
      $region23: #{architecture_forward.21} parent=19 // pred_region
        %p133 = scmp.lt.s32.totalorder %s9, 1
        %s134 = scalar_select %p133, %s9, 1
        %s135 = smul.addr %s134, 4
        %s136 = smul.addr %s135, 4
        %s137 = scalar_lea.vmem %s0, %s136
      $region24: #{architecture_forward.21} parent=19 // pred_fallthru
        _
      // Predicated region
      $region25: #{architecture_forward.21} parent=19 // pred_check
        %p138 = pneg %p55
      $region26: #{architecture_forward.21} parent=19 // pred_check_branch
        %140 = sbr.rel (%p138) target = $region28
      $region27: #{architecture_forward.21} parent=19 // pred_region
        %p141 = scmp.lt.s32.totalorder %s9, 1
        %s142 = scalar_select %p141, %s9, 1
        %s143 = smul.addr %s142, 4
        %s144 = smul.addr %s143, 4
        %s145 = scalar_lea.vmem %s1, %s144
      $region28: #{architecture_forward.21} parent=19 // pred_fallthru
        _
    $region20: #{architecture_forward.21} parent=5 // pred_fallthru
      _
    %p146 = scmp.le.s32.totalorder 1, %s9
    %p147 = scmp.lt.s32.totalorder %s9, 3
    %p148 = pnand %p146, %p147
    %p149 = pneg %p148
    // Predicated region
    $region29: #{architecture_forward.21} parent=5 // pred_check
      _
    $region30: #{architecture_forward.21} parent=5 // pred_check_branch
      %151 = sbr.rel (%p148) target = $region32
    $region31: #{architecture_forward.21} parent=5 // pred_region
      %s152 = ssub.s32 %s9, 1
      %p153 = scmp.lt.s32.totalorder %s14, 1
      %s154 = scalar_select %p153, %s14, 1
      %s155 = smul.addr %s154, 4
      %s156 = smul.addr %s155, 4
      %s157 = scalar_lea.vmem %s0, %s156
      %p158 = pneg %p35
      %p159 = pneg %p32
      %p160 = scmp.lt.s32.totalorder %s14, 1
      %s161 = scalar_select %p160, %s14, 1
      %s162 = smul.addr %s161, 4
      %s163 = smul.addr %s162, 4
      %s164 = scalar_lea.vmem %s1, %s163
      %p165 = pneg %p61
      %p166 = pneg %p58
      %p167 = pneg %p82
      %p168 = pneg %p79
      %p169 = pneg %p108
      %p170 = pneg %p105
      %p171 = scmp.lt.s32.totalorder %s14, 1
      %s172 = scalar_select %p171, %s14, 1
      %s173 = smul.addr %s172, 4
      %s174 = smul.addr %s173, 4
      %s175 = scalar_lea.vmem %s3, %s174
      %p176 = scmp.lt.s32.totalorder %s14, 1
      %s177 = scalar_select %p176, %s14, 1
      %s178 = smul.addr %s177, 4
      %s179 = smul.addr %s178, 4
      %s180 = scalar_lea.vmem %s0, %s179
      %p181 = scmp.lt.s32.totalorder %s14, 1
      %s182 = scalar_select %p181, %s14, 1
      %s183 = smul.addr %s182, 4
      %s184 = smul.addr %s183, 4
      %s185 = scalar_lea.vmem %s1, %s184
      %p186 = scmp.lt.s32.totalorder %s14, 1
      %s187 = scalar_select %p186, %s14, 1
      %s188 = smul.addr %s187, 4
      %s189 = smul.addr %s188, 4
      %s190 = scalar_lea.vmem %s3, %s189
      %v192 = vld [vmem:[%s180] sm:$0xf]
      %v193 = vld [vmem:[%s180 + $0x4] sm:$0xf]
      %v194 = vld [vmem:[%s180 + $0x8] sm:$0xf]
      %v195 = vld [vmem:[%s180 + $0xc] sm:$0xf]
      %v196 = vld [vmem:[%s185] sm:$0xf]
      %v197 = vld [vmem:[%s185 + $0x4] sm:$0xf]
      %v198 = vld [vmem:[%s185 + $0x8] sm:$0xf]
      %v199 = vld [vmem:[%s185 + $0xc] sm:$0xf]
      %v200 = vld [vmem:[%s2] sm:$0xff]
      %v201 = vld [vmem:[%s2 + $0x8] sm:$0xff]
      %v202 = vld [vmem:[%s2 + $0x10] sm:$0xff]
      %v203 = vld [vmem:[%s2 + $0x18] sm:$0xff]
      %v204 = vlaneseq
      %v205 = vshrl.u32 %v204, 7
      %v206 = vlaneseq
      %v207 = vand.u32 %v206, 127
      %vm208 = vcmp.lt.s32.totalorder %v207, %v205
      %v209 = vsub.s32 %v207, %v205
      %vm210 = vcmp.lt.s32.totalorder %v209, 0
      %v211 = vsub.s32 0, %v209
      %v212 = vsel %vm210, %v211, %v209
      %v213 = vcvt.s32.f32 %v212
      %vm214 = vcmp.gt.s32.totalorder %v205, %v207
      %v215 = vsel %vm214, 1.0, 0.0
      %v216 = vpack.c.bf16 %v215, %v215
      %vm217 = vcmask 64512
      %v219 = vsel %vm217, %v192, 0
      %221 = vmatprep.subr.bf16.mxu0 0
      %222 = vmatpush1.bf16.xpose.msra.mxu0 0
      %223 = vmatprep.subr.bf16.mxu0 0
      %224 = vmatpush1.bf16.xpose.msra.mxu0 0
      %225 = vmatprep.subr.bf16.mxu0 0
      %226 = vmatpush1.bf16.xpose.msra.mxu0 0
      %227 = vmatprep.subr.bf16.mxu0 0
      %228 = vmatpush1.bf16.xpose.msra.mxu0 0
      %229 = vmatprep.subr.bf16.mxu0 0
      %230 = vmatpush1.bf16.xpose.msra.mxu0 0
      %231 = vmatprep.subr.bf16.mxu0 0
      %232 = vmatpush1.bf16.xpose.msra.mxu0 0
      %233 = vmatprep.subr.bf16.mxu0 0
      %234 = vmatpush1.bf16.xpose.msra.mxu0 0
      %235 = vmatprep.subr.bf16.mxu0 0
      %236 = vmatpush1.bf16.xpose.msra.mxu0 %v219
      %237 = vmatprep.subr.bf16.mxu0 0
      %238 = vmatpush2.bf16.xpose.msra.mxu0 0
      %239 = vmatprep.subr.bf16.mxu0 0
      %240 = vmatpush2.bf16.xpose.msra.mxu0 0
      %241 = vmatprep.subr.bf16.mxu0 0
      %242 = vmatpush2.bf16.xpose.msra.mxu0 0
      %243 = vmatprep.subr.bf16.mxu0 0
      %244 = vmatpush2.bf16.xpose.msra.mxu0 0
      %245 = vmatprep.subr.bf16.mxu0 0
      %246 = vmatpush2.bf16.xpose.msra.mxu0 0
      %247 = vmatprep.subr.bf16.mxu0 0
      %248 = vmatpush2.bf16.xpose.msra.mxu0 0
      %249 = vmatprep.subr.bf16.mxu0 0
      %250 = vmatpush2.bf16.xpose.msra.mxu0 0
      %251 = vmatprep.subr.bf16.mxu0 0
      %252 = vmatpush2.bf16.xpose.msra.mxu0 0
      %253 = vmatprep.mubr.bf16.mxu0 0
      %254 = vmatmul.mubr.bf16.gmra.mxu0 %v219
      %v255 = vpop.f32.mrf.mxu0
      %v256 = vadd.f32 0.0, %v255
      %v257 = vpop.f32.mrf.mxu0
      %v258 = vpop.f32.mrf.mxu0
      %v259 = vpop.f32.mrf.mxu0
      %260 = vdwg.mxu0
      %v262 = vsel %vm217, %v193, 0
      %264 = vmatprep.subr.bf16.mxu0 0
      %265 = vmatpush1.bf16.xpose.msra.mxu0 0
      %266 = vmatprep.subr.bf16.mxu0 0
      %267 = vmatpush1.bf16.xpose.msra.mxu0 0
      %268 = vmatprep.subr.bf16.mxu0 0
      %269 = vmatpush1.bf16.xpose.msra.mxu0 0
      %270 = vmatprep.subr.bf16.mxu0 0
      %271 = vmatpush1.bf16.xpose.msra.mxu0 0
      %272 = vmatprep.subr.bf16.mxu0 0
      %273 = vmatpush1.bf16.xpose.msra.mxu0 0
      %274 = vmatprep.subr.bf16.mxu0 0
      %275 = vmatpush1.bf16.xpose.msra.mxu0 0
      %276 = vmatprep.subr.bf16.mxu0 0
      %277 = vmatpush1.bf16.xpose.msra.mxu0 0
      %278 = vmatprep.subr.bf16.mxu0 0
      %279 = vmatpush1.bf16.xpose.msra.mxu0 %v262
      %280 = vmatprep.subr.bf16.mxu0 0
      %281 = vmatpush2.bf16.xpose.msra.mxu0 0
      %282 = vmatprep.subr.bf16.mxu0 0
      %283 = vmatpush2.bf16.xpose.msra.mxu0 0
      %284 = vmatprep.subr.bf16.mxu0 0
      %285 = vmatpush2.bf16.xpose.msra.mxu0 0
      %286 = vmatprep.subr.bf16.mxu0 0
      %287 = vmatpush2.bf16.xpose.msra.mxu0 0
      %288 = vmatprep.subr.bf16.mxu0 0
      %289 = vmatpush2.bf16.xpose.msra.mxu0 0
      %290 = vmatprep.subr.bf16.mxu0 0
      %291 = vmatpush2.bf16.xpose.msra.mxu0 0
      %292 = vmatprep.subr.bf16.mxu0 0
      %293 = vmatpush2.bf16.xpose.msra.mxu0 0
      %294 = vmatprep.subr.bf16.mxu0 0
      %295 = vmatpush2.bf16.xpose.msra.mxu0 0
      %296 = vmatprep.mubr.bf16.mxu0 0
      %297 = vmatmul.mubr.bf16.gmra.mxu0 %v262
      %v298 = vpop.f32.mrf.mxu0
      %v299 = vadd.f32 0.0, %v298
      %v300 = vpop.f32.mrf.mxu0
      %v301 = vpop.f32.mrf.mxu0
      %v302 = vpop.f32.mrf.mxu0
      %303 = vdwg.mxu0
      %v305 = vsel %vm217, %v194, 0
      %307 = vmatprep.subr.bf16.mxu0 0
      %308 = vmatpush1.bf16.xpose.msra.mxu0 0
      %309 = vmatprep.subr.bf16.mxu0 0
      %310 = vmatpush1.bf16.xpose.msra.mxu0 0
      %311 = vmatprep.subr.bf16.mxu0 0
      %312 = vmatpush1.bf16.xpose.msra.mxu0 0
      %313 = vmatprep.subr.bf16.mxu0 0
      %314 = vmatpush1.bf16.xpose.msra.mxu0 0
      %315 = vmatprep.subr.bf16.mxu0 0
      %316 = vmatpush1.bf16.xpose.msra.mxu0 0
      %317 = vmatprep.subr.bf16.mxu0 0
      %318 = vmatpush1.bf16.xpose.msra.mxu0 0
      %319 = vmatprep.subr.bf16.mxu0 0
      %320 = vmatpush1.bf16.xpose.msra.mxu0 0
      %321 = vmatprep.subr.bf16.mxu0 0
      %322 = vmatpush1.bf16.xpose.msra.mxu0 %v305
      %323 = vmatprep.subr.bf16.mxu0 0
      %324 = vmatpush2.bf16.xpose.msra.mxu0 0
      %325 = vmatprep.subr.bf16.mxu0 0
      %326 = vmatpush2.bf16.xpose.msra.mxu0 0
      %327 = vmatprep.subr.bf16.mxu0 0
      %328 = vmatpush2.bf16.xpose.msra.mxu0 0
      %329 = vmatprep.subr.bf16.mxu0 0
      %330 = vmatpush2.bf16.xpose.msra.mxu0 0
      %331 = vmatprep.subr.bf16.mxu0 0
      %332 = vmatpush2.bf16.xpose.msra.mxu0 0
      %333 = vmatprep.subr.bf16.mxu0 0
      %334 = vmatpush2.bf16.xpose.msra.mxu0 0
      %335 = vmatprep.subr.bf16.mxu0 0
      %336 = vmatpush2.bf16.xpose.msra.mxu0 0
      %337 = vmatprep.subr.bf16.mxu0 0
      %338 = vmatpush2.bf16.xpose.msra.mxu0 0
      %339 = vmatprep.mubr.bf16.mxu0 0
      %340 = vmatmul.mubr.bf16.gmra.mxu0 %v305
      %v341 = vpop.f32.mrf.mxu0
      %v342 = vadd.f32 0.0, %v341
      %v343 = vpop.f32.mrf.mxu0
      %v344 = vpop.f32.mrf.mxu0
      %v345 = vpop.f32.mrf.mxu0
      %346 = vdwg.mxu0
      %v348 = vsel %vm217, %v195, 0
      %350 = vmatprep.subr.bf16.mxu0 0
      %351 = vmatpush1.bf16.xpose.msra.mxu0 0
      %352 = vmatprep.subr.bf16.mxu0 0
      %353 = vmatpush1.bf16.xpose.msra.mxu0 0
      %354 = vmatprep.subr.bf16.mxu0 0
      %355 = vmatpush1.bf16.xpose.msra.mxu0 0
      %356 = vmatprep.subr.bf16.mxu0 0
      %357 = vmatpush1.bf16.xpose.msra.mxu0 0
      %358 = vmatprep.subr.bf16.mxu0 0
      %359 = vmatpush1.bf16.xpose.msra.mxu0 0
      %360 = vmatprep.subr.bf16.mxu0 0
      %361 = vmatpush1.bf16.xpose.msra.mxu0 0
      %362 = vmatprep.subr.bf16.mxu0 0
      %363 = vmatpush1.bf16.xpose.msra.mxu0 0
      %364 = vmatprep.subr.bf16.mxu0 0
      %365 = vmatpush1.bf16.xpose.msra.mxu0 %v348
      %366 = vmatprep.subr.bf16.mxu0 0
      %367 = vmatpush2.bf16.xpose.msra.mxu0 0
      %368 = vmatprep.subr.bf16.mxu0 0
      %369 = vmatpush2.bf16.xpose.msra.mxu0 0
      %370 = vmatprep.subr.bf16.mxu0 0
      %371 = vmatpush2.bf16.xpose.msra.mxu0 0
      %372 = vmatprep.subr.bf16.mxu0 0
      %373 = vmatpush2.bf16.xpose.msra.mxu0 0
      %374 = vmatprep.subr.bf16.mxu0 0
      %375 = vmatpush2.bf16.xpose.msra.mxu0 0
      %376 = vmatprep.subr.bf16.mxu0 0
      %377 = vmatpush2.bf16.xpose.msra.mxu0 0
      %378 = vmatprep.subr.bf16.mxu0 0
      %379 = vmatpush2.bf16.xpose.msra.mxu0 0
      %380 = vmatprep.subr.bf16.mxu0 0
      %381 = vmatpush2.bf16.xpose.msra.mxu0 0
      %382 = vmatprep.mubr.bf16.mxu0 0
      %383 = vmatmul.mubr.bf16.gmra.mxu0 %v348
      %v384 = vpop.f32.mrf.mxu0
      %v385 = vadd.f32 0.0, %v384
      %v386 = vpop.f32.mrf.mxu0
      %v387 = vpop.f32.mrf.mxu0
      %v388 = vpop.f32.mrf.mxu0
      %389 = vdwg.mxu0
      %v390 = vmul.f32 %v256, 0.35355338
      %v391 = vmul.f32 %v299, 0.35355338
      %v392 = vmul.f32 %v342, 0.35355338
      %v393 = vmul.f32 %v385, 0.35355338
      %v394 = vsel %vm208, 1, 0
      %vm395 = vcmp.eq.s32.totalorder %v394, 1
      %v396 = vsel %vm395, %v390, -1e+32
      %v397 = vsel %vm395, %v391, -1e+32
      %v398 = vsel %vm395, %v392, -1e+32
      %v399 = vsel %vm395, %v393, -1e+32
      %v400 = vsel %vm217, %v396, -inf
      %401 = vmax.xlane.f32.xlu0 %v400
      %v402 = vpop.xlane.xlu0 %401
      %v403 = vsel %vm217, %v397, -inf
      %404 = vmax.xlane.f32.xlu0 %v403
      %v405 = vpop.xlane.xlu0 %404
      %v406 = vsel %vm217, %v398, -inf
      %407 = vmax.xlane.f32.xlu0 %v406
      %v408 = vpop.xlane.xlu0 %407
      %v409 = vsel %vm217, %v399, -inf
      %410 = vmax.xlane.f32.xlu0 %v409
      %v411 = vpop.xlane.xlu0 %410
      %v412 = vsub.f32 %v396, %v402
      %v413 = vsub.f32 %v397, %v405
      %v414 = vsub.f32 %v398, %v408
      %v415 = vsub.f32 %v399, %v411
      %v416 = vmul.f32 %v412, 1.442695
      %v417 = vpow.pop %v416
      %v418 = vmul.f32 %v413, 1.442695
      %v419 = vpow.pop %v418
      %v420 = vmul.f32 %v414, 1.442695
      %v421 = vpow.pop %v420
      %v422 = vmul.f32 %v415, 1.442695
      %v423 = vpow.pop %v422
      %v424 = vsel %vm217, %v417, 0.0
      %425 = vadd.xlane.f32.xlu0 %v424
      %v426 = vpop.xlane.xlu0 %425
      %v427 = vsel %vm217, %v419, 0.0
      %428 = vadd.xlane.f32.xlu0 %v427
      %v429 = vpop.xlane.xlu0 %428
      %v430 = vsel %vm217, %v421, 0.0
      %431 = vadd.xlane.f32.xlu0 %v430
      %v432 = vpop.xlane.xlu0 %431
      %v433 = vsel %vm217, %v423, 0.0
      %434 = vadd.xlane.f32.xlu0 %v433
      %v435 = vpop.xlane.xlu0 %434
      %v436 = vrcp.pop %v426
      %v437 = vrcp.pop %v429
      %v438 = vrcp.pop %v432
      %v439 = vrcp.pop %v435
      %v440 = vmul.f32 %v417, %v436
      %v441 = vmul.f32 %v419, %v437
      %v442 = vmul.f32 %v421, %v438
      %v443 = vmul.f32 %v423, %v439
      %v444 = vsel %vm395, %v440, 0.0
      %v445 = vsel %vm395, %v441, 0.0
      %v446 = vsel %vm395, %v442, 0.0
      %v447 = vsel %vm395, %v443, 0.0
      %v448 = vpack.c.bf16 %v445, %v444
      %v449 = vpack.c.bf16 %v447, %v446
      %v451 = vsel %vm217, %v448, 0
      %v454 = vsel %vm217, %v449, 0
      %vm456 = vcmask 1043456
      %v458 = vsel %vm456, %v216, 0
      %460 = vmatprep.subr.bf16.mxu0 0
      %461 = vmatpush1.bf16.msra.mxu0 0
      %462 = vmatprep.subr.bf16.mxu0 0
      %463 = vmatpush1.bf16.msra.mxu0 0
      %464 = vmatprep.subr.bf16.mxu0 0
      %465 = vmatpush1.bf16.msra.mxu0 0
      %466 = vmatprep.subr.bf16.mxu0 0
      %467 = vmatpush1.bf16.msra.mxu0 0
      %468 = vmatprep.subr.bf16.mxu0 0
      %469 = vmatpush1.bf16.msra.mxu0 0
      %470 = vmatprep.subr.bf16.mxu0 0
      %471 = vmatpush1.bf16.msra.mxu0 0
      %472 = vmatprep.subr.bf16.mxu0 0
      %473 = vmatpush1.bf16.msra.mxu0 0
      %474 = vmatprep.subr.bf16.mxu0 0
      %475 = vmatpush1.bf16.msra.mxu0 %v458
      %476 = vmatprep.subr.bf16.mxu0 0
      %477 = vmatpush2.bf16.msra.mxu0 0
      %478 = vmatprep.subr.bf16.mxu0 0
      %479 = vmatpush2.bf16.msra.mxu0 0
      %480 = vmatprep.subr.bf16.mxu0 0
      %481 = vmatpush2.bf16.msra.mxu0 0
      %482 = vmatprep.subr.bf16.mxu0 0
      %483 = vmatpush2.bf16.msra.mxu0 0
      %484 = vmatprep.subr.bf16.mxu0 0
      %485 = vmatpush2.bf16.msra.mxu0 0
      %486 = vmatprep.subr.bf16.mxu0 0
      %487 = vmatpush2.bf16.msra.mxu0 0
      %488 = vmatprep.subr.bf16.mxu0 0
      %489 = vmatpush2.bf16.msra.mxu0 0
      %490 = vmatprep.subr.bf16.mxu0 0
      %491 = vmatpush2.bf16.msra.mxu0 0
      %492 = vmatprep.mubr.bf16.mxu0 0
      %493 = vmatmul.mubr.bf16.gmra.mxu0 %v451
      %v494 = vpop.f32.mrf.mxu0
      %v495 = vadd.f32 0.0, %v494
      %v496 = vpop.f32.mrf.mxu0
      %v497 = vpop.f32.mrf.mxu0
      %v498 = vadd.f32 0.0, %v497
      %v499 = vpop.f32.mrf.mxu0
      %500 = vmatprep.mubr.bf16.mxu0 0
      %501 = vmatmul.mubr.bf16.gmra.mxu0 %v454
      %v502 = vpop.f32.mrf.mxu0
      %v503 = vadd.f32 0.0, %v502
      %v504 = vpop.f32.mrf.mxu0
      %v505 = vpop.f32.mrf.mxu0
      %v506 = vadd.f32 0.0, %v505
      %v507 = vpop.f32.mrf.mxu0
      %508 = vdwg.mxu0
      %v509 = vmul.f32 %v495, %v213
      %v510 = vmul.f32 %v498, %v213
      %v511 = vmul.f32 %v503, %v213
      %v512 = vmul.f32 %v506, %v213
      %v513 = vmax.f32 %v509, 0.0
      %v514 = vmax.f32 %v510, 0.0
      %v515 = vmax.f32 %v511, 0.0
      %v516 = vmax.f32 %v512, 0.0
      %v517 = vrsqrt.pop %v513
      %v518 = vmul.f32 %v513, %v517
      %vm519 = vcmp.eq.f32.partialorder %v513, inf
      %v520 = vsel %vm519, %v513, %v518
      %vm521 = vcmp.eq.f32.partialorder %v513, 0.0
      %v522 = vand.u32 %v513, 2147483648
      %v523 = vsel %vm521, %v522, %v520
      %v524 = vrsqrt.pop %v514
      %v525 = vmul.f32 %v514, %v524
      %vm526 = vcmp.eq.f32.partialorder %v514, inf
      %v527 = vsel %vm526, %v514, %v525
      %vm528 = vcmp.eq.f32.partialorder %v514, 0.0
      %v529 = vand.u32 %v514, 2147483648
      %v530 = vsel %vm528, %v529, %v527
      %v531 = vrsqrt.pop %v515
      %v532 = vmul.f32 %v515, %v531
      %vm533 = vcmp.eq.f32.partialorder %v515, inf
      %v534 = vsel %vm533, %v515, %v532
      %vm535 = vcmp.eq.f32.partialorder %v515, 0.0
      %v536 = vand.u32 %v515, 2147483648
      %v537 = vsel %vm535, %v536, %v534
      %v538 = vrsqrt.pop %v516
      %v539 = vmul.f32 %v516, %v538
      %vm540 = vcmp.eq.f32.partialorder %v516, inf
      %v541 = vsel %vm540, %v516, %v539
      %vm542 = vcmp.eq.f32.partialorder %v516, 0.0
      %v543 = vand.u32 %v516, 2147483648
      %v544 = vsel %vm542, %v543, %v541
      %546 = vset.pattern.permute.xlu0 0
      %547 = vperm.xlu0 %546, %v200
      %v548 = vpop.permute.xlu0 %547
      %551 = vset.pattern.permute.xlu0 0
      %552 = vperm.xlu0 %551, %v201
      %v553 = vpop.permute.xlu0 %552
      %556 = vset.pattern.permute.xlu0 0
      %557 = vperm.xlu0 %556, %v202
      %v558 = vpop.permute.xlu0 %557
      %561 = vset.pattern.permute.xlu0 0
      %562 = vperm.xlu0 %561, %v203
      %v563 = vpop.permute.xlu0 %562
      %v565 = vmul.f32 %v523, %v548
      %v566 = vmul.f32 %v530, %v553
      %v567 = vmul.f32 %v537, %v558
      %v568 = vmul.f32 %v544, %v563
      %v569 = vmul.f32 %v565, 1.442695
      %v570 = vpow.pop %v569
      %v571 = vmul.f32 %v566, 1.442695
      %v572 = vpow.pop %v571
      %v573 = vmul.f32 %v567, 1.442695
      %v574 = vpow.pop %v573
      %v575 = vmul.f32 %v568, 1.442695
      %v576 = vpow.pop %v575
      %v577 = vmax.f32 %v570, 1e-05
      %v578 = vmax.f32 %v572, 1e-05
      %v579 = vmax.f32 %v574, 1e-05
      %v580 = vmax.f32 %v576, 1e-05
      %v581 = vmin.f32 %v577, 100000.0
      %v582 = vmin.f32 %v578, 100000.0
      %v583 = vmin.f32 %v579, 100000.0
      %v584 = vmin.f32 %v580, 100000.0
      %v585 = vmul.f32 %v390, %v581
      %v586 = vmul.f32 %v391, %v582
      %v587 = vmul.f32 %v392, %v583
      %v588 = vmul.f32 %v393, %v584
      %v589 = vsel %vm395, %v585, -1e+32
      %v590 = vsel %vm395, %v586, -1e+32
      %v591 = vsel %vm395, %v587, -1e+32
      %v592 = vsel %vm395, %v588, -1e+32
      %v593 = vsel %vm217, %v589, -inf
      %594 = vmax.xlane.f32.xlu0 %v593
      %v595 = vpop.xlane.xlu0 %594
      %v596 = vsel %vm217, %v590, -inf
      %597 = vmax.xlane.f32.xlu0 %v596
      %v598 = vpop.xlane.xlu0 %597
      %v599 = vsel %vm217, %v591, -inf
      %600 = vmax.xlane.f32.xlu0 %v599
      %v601 = vpop.xlane.xlu0 %600
      %v602 = vsel %vm217, %v592, -inf
      %603 = vmax.xlane.f32.xlu0 %v602
      %v604 = vpop.xlane.xlu0 %603
      %v605 = vsub.f32 %v589, %v595
      %v606 = vsub.f32 %v590, %v598
      %v607 = vsub.f32 %v591, %v601
      %v608 = vsub.f32 %v592, %v604
      %v609 = vmul.f32 %v605, 1.442695
      %v610 = vpow.pop %v609
      %v611 = vmul.f32 %v606, 1.442695
      %v612 = vpow.pop %v611
      %v613 = vmul.f32 %v607, 1.442695
      %v614 = vpow.pop %v613
      %v615 = vmul.f32 %v608, 1.442695
      %v616 = vpow.pop %v615
      %v617 = vsel %vm217, %v610, 0.0
      %618 = vadd.xlane.f32.xlu0 %v617
      %v619 = vpop.xlane.xlu0 %618
      %v620 = vsel %vm217, %v612, 0.0
      %621 = vadd.xlane.f32.xlu0 %v620
      %v622 = vpop.xlane.xlu0 %621
      %v623 = vsel %vm217, %v614, 0.0
      %624 = vadd.xlane.f32.xlu0 %v623
      %v625 = vpop.xlane.xlu0 %624
      %v626 = vsel %vm217, %v616, 0.0
      %627 = vadd.xlane.f32.xlu0 %v626
      %v628 = vpop.xlane.xlu0 %627
      %v629 = vrcp.pop %v619
      %v630 = vrcp.pop %v622
      %v631 = vrcp.pop %v625
      %v632 = vrcp.pop %v628
      %v633 = vmul.f32 %v610, %v629
      %v634 = vmul.f32 %v612, %v630
      %v635 = vmul.f32 %v614, %v631
      %v636 = vmul.f32 %v616, %v632
      %v637 = vpack.c.bf16 %v633, %v633
      %v638 = vpack.c.bf16 %v634, %v634
      %v639 = vpack.c.bf16 %v635, %v635
      %v640 = vpack.c.bf16 %v636, %v636
      %v642 = vsel %vm217, %v637, 0
      %v645 = vsel %vm456, %v196, 0
      %647 = vmatprep.subr.bf16.mxu0 0
      %648 = vmatpush1.bf16.msra.mxu0 0
      %649 = vmatprep.subr.bf16.mxu0 0
      %650 = vmatpush1.bf16.msra.mxu0 0
      %651 = vmatprep.subr.bf16.mxu0 0
      %652 = vmatpush1.bf16.msra.mxu0 0
      %653 = vmatprep.subr.bf16.mxu0 0
      %654 = vmatpush1.bf16.msra.mxu0 0
      %655 = vmatprep.subr.bf16.mxu0 0
      %656 = vmatpush1.bf16.msra.mxu0 0
      %657 = vmatprep.subr.bf16.mxu0 0
      %658 = vmatpush1.bf16.msra.mxu0 0
      %659 = vmatprep.subr.bf16.mxu0 0
      %660 = vmatpush1.bf16.msra.mxu0 0
      %661 = vmatprep.subr.bf16.mxu0 0
      %662 = vmatpush1.bf16.msra.mxu0 %v645
      %663 = vmatprep.subr.bf16.mxu0 0
      %664 = vmatpush2.bf16.msra.mxu0 0
      %665 = vmatprep.subr.bf16.mxu0 0
      %666 = vmatpush2.bf16.msra.mxu0 0
      %667 = vmatprep.subr.bf16.mxu0 0
      %668 = vmatpush2.bf16.msra.mxu0 0
      %669 = vmatprep.subr.bf16.mxu0 0
      %670 = vmatpush2.bf16.msra.mxu0 0
      %671 = vmatprep.subr.bf16.mxu0 0
      %672 = vmatpush2.bf16.msra.mxu0 0
      %673 = vmatprep.subr.bf16.mxu0 0
      %674 = vmatpush2.bf16.msra.mxu0 0
      %675 = vmatprep.subr.bf16.mxu0 0
      %676 = vmatpush2.bf16.msra.mxu0 0
      %677 = vmatprep.subr.bf16.mxu0 0
      %678 = vmatpush2.bf16.msra.mxu0 0
      %679 = vmatprep.mubr.bf16.mxu0 0
      %680 = vmatmul.mubr.bf16.gmra.mxu0 %v642
      %v681 = vpop.f32.mrf.mxu0
      %v682 = vadd.f32 0.0, %v681
      %v683 = vpop.f32.mrf.mxu0
      %v684 = vpop.f32.mrf.mxu0
      %v685 = vpop.f32.mrf.mxu0
      %686 = vdwg.mxu0
      %v688 = vsel %vm217, %v638, 0
      %v691 = vsel %vm456, %v197, 0
      %693 = vmatprep.subr.bf16.mxu0 0
      %694 = vmatpush1.bf16.msra.mxu0 0
      %695 = vmatprep.subr.bf16.mxu0 0
      %696 = vmatpush1.bf16.msra.mxu0 0
      %697 = vmatprep.subr.bf16.mxu0 0
      %698 = vmatpush1.bf16.msra.mxu0 0
      %699 = vmatprep.subr.bf16.mxu0 0
      %700 = vmatpush1.bf16.msra.mxu0 0
      %701 = vmatprep.subr.bf16.mxu0 0
      %702 = vmatpush1.bf16.msra.mxu0 0
      %703 = vmatprep.subr.bf16.mxu0 0
      %704 = vmatpush1.bf16.msra.mxu0 0
      %705 = vmatprep.subr.bf16.mxu0 0
      %706 = vmatpush1.bf16.msra.mxu0 0
      %707 = vmatprep.subr.bf16.mxu0 0
      %708 = vmatpush1.bf16.msra.mxu0 %v691
      %709 = vmatprep.subr.bf16.mxu0 0
      %710 = vmatpush2.bf16.msra.mxu0 0
      %711 = vmatprep.subr.bf16.mxu0 0
      %712 = vmatpush2.bf16.msra.mxu0 0
      %713 = vmatprep.subr.bf16.mxu0 0
      %714 = vmatpush2.bf16.msra.mxu0 0
      %715 = vmatprep.subr.bf16.mxu0 0
      %716 = vmatpush2.bf16.msra.mxu0 0
      %717 = vmatprep.subr.bf16.mxu0 0
      %718 = vmatpush2.bf16.msra.mxu0 0
      %719 = vmatprep.subr.bf16.mxu0 0
      %720 = vmatpush2.bf16.msra.mxu0 0
      %721 = vmatprep.subr.bf16.mxu0 0
      %722 = vmatpush2.bf16.msra.mxu0 0
      %723 = vmatprep.subr.bf16.mxu0 0
      %724 = vmatpush2.bf16.msra.mxu0 0
      %725 = vmatprep.mubr.bf16.mxu0 0
      %726 = vmatmul.mubr.bf16.gmra.mxu0 %v688
      %v727 = vpop.f32.mrf.mxu0
      %v728 = vadd.f32 0.0, %v727
      %v729 = vpop.f32.mrf.mxu0
      %v730 = vpop.f32.mrf.mxu0
      %v731 = vpop.f32.mrf.mxu0
      %732 = vdwg.mxu0
      %v734 = vsel %vm217, %v639, 0
      %v737 = vsel %vm456, %v198, 0
      %739 = vmatprep.subr.bf16.mxu0 0
      %740 = vmatpush1.bf16.msra.mxu0 0
      %741 = vmatprep.subr.bf16.mxu0 0
      %742 = vmatpush1.bf16.msra.mxu0 0
      %743 = vmatprep.subr.bf16.mxu0 0
      %744 = vmatpush1.bf16.msra.mxu0 0
      %745 = vmatprep.subr.bf16.mxu0 0
      %746 = vmatpush1.bf16.msra.mxu0 0
      %747 = vmatprep.subr.bf16.mxu0 0
      %748 = vmatpush1.bf16.msra.mxu0 0
      %749 = vmatprep.subr.bf16.mxu0 0
      %750 = vmatpush1.bf16.msra.mxu0 0
      %751 = vmatprep.subr.bf16.mxu0 0
      %752 = vmatpush1.bf16.msra.mxu0 0
      %753 = vmatprep.subr.bf16.mxu0 0
      %754 = vmatpush1.bf16.msra.mxu0 %v737
      %755 = vmatprep.subr.bf16.mxu0 0
      %756 = vmatpush2.bf16.msra.mxu0 0
      %757 = vmatprep.subr.bf16.mxu0 0
      %758 = vmatpush2.bf16.msra.mxu0 0
      %759 = vmatprep.subr.bf16.mxu0 0
      %760 = vmatpush2.bf16.msra.mxu0 0
      %761 = vmatprep.subr.bf16.mxu0 0
      %762 = vmatpush2.bf16.msra.mxu0 0
      %763 = vmatprep.subr.bf16.mxu0 0
      %764 = vmatpush2.bf16.msra.mxu0 0
      %765 = vmatprep.subr.bf16.mxu0 0
      %766 = vmatpush2.bf16.msra.mxu0 0
      %767 = vmatprep.subr.bf16.mxu0 0
      %768 = vmatpush2.bf16.msra.mxu0 0
      %769 = vmatprep.subr.bf16.mxu0 0
      %770 = vmatpush2.bf16.msra.mxu0 0
      %771 = vmatprep.mubr.bf16.mxu0 0
      %772 = vmatmul.mubr.bf16.gmra.mxu0 %v734
      %v773 = vpop.f32.mrf.mxu0
      %v774 = vadd.f32 0.0, %v773
      %v775 = vpop.f32.mrf.mxu0
      %v776 = vpop.f32.mrf.mxu0
      %v777 = vpop.f32.mrf.mxu0
      %778 = vdwg.mxu0
      %v780 = vsel %vm217, %v640, 0
      %v783 = vsel %vm456, %v199, 0
      %785 = vmatprep.subr.bf16.mxu0 0
      %786 = vmatpush1.bf16.msra.mxu0 0
      %787 = vmatprep.subr.bf16.mxu0 0
      %788 = vmatpush1.bf16.msra.mxu0 0
      %789 = vmatprep.subr.bf16.mxu0 0
      %790 = vmatpush1.bf16.msra.mxu0 0
      %791 = vmatprep.subr.bf16.mxu0 0
      %792 = vmatpush1.bf16.msra.mxu0 0
      %793 = vmatprep.subr.bf16.mxu0 0
      %794 = vmatpush1.bf16.msra.mxu0 0
      %795 = vmatprep.subr.bf16.mxu0 0
      %796 = vmatpush1.bf16.msra.mxu0 0
      %797 = vmatprep.subr.bf16.mxu0 0
      %798 = vmatpush1.bf16.msra.mxu0 0
      %799 = vmatprep.subr.bf16.mxu0 0
      %800 = vmatpush1.bf16.msra.mxu0 %v783
      %801 = vmatprep.subr.bf16.mxu0 0
      %802 = vmatpush2.bf16.msra.mxu0 0
      %803 = vmatprep.subr.bf16.mxu0 0
      %804 = vmatpush2.bf16.msra.mxu0 0
      %805 = vmatprep.subr.bf16.mxu0 0
      %806 = vmatpush2.bf16.msra.mxu0 0
      %807 = vmatprep.subr.bf16.mxu0 0
      %808 = vmatpush2.bf16.msra.mxu0 0
      %809 = vmatprep.subr.bf16.mxu0 0
      %810 = vmatpush2.bf16.msra.mxu0 0
      %811 = vmatprep.subr.bf16.mxu0 0
      %812 = vmatpush2.bf16.msra.mxu0 0
      %813 = vmatprep.subr.bf16.mxu0 0
      %814 = vmatpush2.bf16.msra.mxu0 0
      %815 = vmatprep.subr.bf16.mxu0 0
      %816 = vmatpush2.bf16.msra.mxu0 0
      %817 = vmatprep.mubr.bf16.mxu0 0
      %818 = vmatmul.mubr.bf16.gmra.mxu0 %v780
      %v819 = vpop.f32.mrf.mxu0
      %v820 = vadd.f32 0.0, %v819
      %v821 = vpop.f32.mrf.mxu0
      %v822 = vpop.f32.mrf.mxu0
      %v823 = vpop.f32.mrf.mxu0
      %824 = vdwg.mxu0
      %vm825 = vcmp.eq.s32.totalorder %v205, 0
      %v826 = vsel %vm825, 1, 0
      %vm827 = vcmp.eq.s32.totalorder %v826, 1
      %v828 = vsel %vm827, 0.0, %v682
      %v829 = vsel %vm827, 0.0, %v728
      %v830 = vsel %vm827, 0.0, %v774
      %v831 = vsel %vm827, 0.0, %v820
      %v832 = vpack.c.bf16 %v828, %v828
      %v833 = vpack.c.bf16 %v829, %v829
      %v834 = vpack.c.bf16 %v830, %v830
      %v835 = vpack.c.bf16 %v831, %v831
      %vm836 = vcmask 60416
      %837 = vst.msk [vmem:[%s190] sm:$0xf] %vm836, %v832
      %838 = vst.msk [vmem:[%s190 + $0x4] sm:$0xf] %vm836, %v833
      %839 = vst.msk [vmem:[%s190 + $0x8] sm:$0xf] %vm836, %v834
      %840 = vst.msk [vmem:[%s190 + $0xc] sm:$0xf] %vm836, %v835
      %p841 = scmp.lt.s32.totalorder %s14, 1
      %s842 = scalar_select %p841, %s14, 1
      %s843 = smul.addr %s842, 4
      %s844 = smul.addr %s843, 4
      %s845 = scalar_lea.vmem %s3, %s844
      // Predicated region
      $region33: #{architecture_forward.21} parent=31 // pred_check
        %p846 = pneg %p105
      $region34: #{architecture_forward.21} parent=31 // pred_check_branch
        %848 = sbr.rel (%p846) target = $region36
      $region35: #{architecture_forward.21} parent=31 // pred_region
        _
      $region36: #{architecture_forward.21} parent=31 // pred_fallthru
        _
    $region32: #{architecture_forward.21} parent=5 // pred_fallthru
      _
    %p849 = scmp.le.s32.totalorder 2, %s9
    // Predicated region
    $region37: #{architecture_forward.21} parent=5 // pred_check
      %p850 = pneg %p849
    $region38: #{architecture_forward.21} parent=5 // pred_check_branch
      %852 = sbr.rel (%p850) target = $region40
    $region39: #{architecture_forward.21} parent=5 // pred_region
      %s853 = ssub.s32 %s9, 2
      // Predicated region
      $region41: #{architecture_forward.21} parent=39 // pred_check
        %p854 = pneg %p111
      $region42: #{architecture_forward.21} parent=39 // pred_check_branch
        %856 = sbr.rel (%p854) target = $region44
      $region43: #{architecture_forward.21} parent=39 // pred_region
        %p857 = scmp.lt.s32.totalorder %s15, 1
        %s858 = scalar_select %p857, %s15, 1
        %s859 = smul.addr %s858, 4
        %s860 = smul.addr %s859, 4
        %s861 = scalar_lea.vmem %s3, %s860
      $region44: #{architecture_forward.21} parent=39 // pred_fallthru
        _
    $region40: #{architecture_forward.21} parent=5 // pred_fallthru
      _
  $region6: #{architecture_forward.21} parent=0 // loop_footer
    %s13 = sadd.s32 1, %s9
  $region7: #{architecture_forward.21} parent=0 // loop_footer_branch
    %8 = sbr.rel target = $region3
  $region8: #{architecture_forward.21} parent=0 // loop_exit
    _

</llo_original>
